<compile_context>
chip_gen: v7x
topology: tpu7x:2x2x1
jax: 0.10.0
libtpu: 0.0.40
codegen_flags: <defaults>
</compile_context>

<pallas_src>
import functools

import jax
import jax.numpy as jnp
from jax import lax
from jax.experimental import pallas as pl
from jax.experimental.pallas import tpu as pltpu


def _gru_cell_kernel(xd_ref, hd_ref, w1_ref, w2_ref, t_ref, bsa_ref, aw_ref,
                     bt_ref, o_ref, cpad_s, sapad_s, *, ksize, H, W, Ci, Ch, NB):
    """One block of NB batch images per grid step.  All activations lane-dense.

       xd_ref : (NB, H, W*Ci)   x,       lane index = w*Ci + ci
       hd_ref : (NB, H, W*Ch)   h
       o_ref  : (NB, H, W*Ch)   h_next
       w1_ref : (Cr, C2)        ca1.fc1 weight
       w2_ref : (Cr, Ch)        ca1.fc2 weight (transposed)
       t_ref  : (Ch, W*Ch)      kron(1_W, I_Ch): tiles r over pixels via MXU
       bsa_ref: (7, W*Ch, W*Ch) banded 7x7 SA operator (bf16)
       aw_ref : (K, W*C2, W*Ch) banded 3x3 out_conv operator (bf16)
       bt_ref : (1, W*Ch)       out_conv bias, tiled over w
       cpad_s : (NB, H+2p, W*C2) H-zero-padded cat(x, h*r) scratch
       sapad_s: (NB, H+6,  W*Ch) H-zero-padded channel-max scratch
    """
    f32 = jnp.float32
    bf16 = jnp.bfloat16
    pad = ksize // 2
    C2 = Ci + Ch
    SK = bsa_ref.shape[0]          # 7
    SP = SK // 2                   # 3
    Cr = w1_ref.shape[0]
    WCi, WCh, WC2 = W * Ci, W * Ch, W * C2
    NBH = NB * H

    x3 = xd_ref[...]               # (NB, H, W*Ci) f32
    h3 = hd_ref[...]               # (NB, H, W*Ch) f32

    # ---------------- ChannelAttention(cat(x, h)) -> r : (NB, Ch) -----------
    def spatial_channel_max(v3, c):
        v = jnp.max(v3, axis=1)                     # (NB, W*c)  sublane reduce
        s = c
        while s < W * c:                            # lane-stride log2 max tree
            v = jnp.maximum(v, pltpu.roll(v, s, axis=1))
            s *= 2
        return v[:, (W - 1) * c:]                   # (NB, c)

    maxc = jnp.concatenate([spatial_channel_max(x3, Ci),
                            spatial_channel_max(h3, Ch)], axis=1)     # (NB, C2)
    racc = jnp.zeros((NB, Ch), f32)
    for cr in range(Cr):                            # Cr = C2 // 16 (tiny)
        hid = jnp.maximum(
            jnp.sum(maxc * w1_ref[cr:cr + 1, :], axis=1, keepdims=True), 0.0)
        racc = racc + hid * w2_ref[cr:cr + 1, :]
    r = jax.nn.sigmoid(racc)                        # (NB, Ch) f32

    # ---------------- SpatialAttention(cat(x, h)) -> z (dense) --------------
    # Per-pixel max over all 2*Ch channels: elementwise max(x, h) (requires
    # Ci == Ch so the dense layouts align), then a log2 roll/max tree over the
    # Ch lanes of each pixel group.
    m2 = jnp.maximum(x3, h3).reshape(NBH, WCh)
    gmax = m2
    s = 1
    while s < Ch:                                   # shifts 1, 2, 4, ...
        gmax = jnp.maximum(gmax, pltpu.roll(gmax, s, axis=1))
        s *= 2
    # NOTE: the rolls wrap circularly; only lane w*Ch + (Ch-1) carries the
    # true per-pixel group max.  The SA operator reads exactly that lane
    # (selector row Ch-1 in _banded_sa_operator), so the wrap is harmless.

    # Border rows are re-zeroed every step (a handful of stores): scratch is
    # per-core under dimension_semantics=("parallel",), so a program_id()==0
    # first-visit guard would be wrong on v7x megacore.
    sapad_s[:, 0:SP, :] = jnp.zeros((NB, SP, WCh), f32)
    sapad_s[:, SP + H:SP + H + SP, :] = jnp.zeros((NB, SP, WCh), f32)
    sapad_s[:, SP:SP + H, :] = gmax.reshape(NB, H, WCh)

    zacc = jnp.zeros((NBH, WCh), f32)
    for kh in range(SK):
        blk = sapad_s[:, kh:kh + H, :].reshape(NBH, WCh).astype(bf16)
        zacc = zacc + jnp.dot(blk, bsa_ref[kh], preferred_element_type=f32)
    z = jax.nn.sigmoid(zacc)                        # (NB*H, W*Ch) f32

    # ---------------- out_conv(cat(x, h*r)) -> tanh -> h_bar ----------------
    # Tile r over the W pixel groups with one tiny MXU dot (replaces a W-way
    # lane concatenate on the critical path).
    rt = jnp.dot(r, t_ref[...], preferred_element_type=f32)    # (NB, W*Ch)
    hr = h3 * rt[:, None, :]                                    # (NB, H, W*Ch)

    cpad_s[:, 0:pad, :] = jnp.zeros((NB, pad, WC2), f32)
    cpad_s[:, pad + H:pad + H + pad, :] = jnp.zeros((NB, pad, WC2), f32)
    cpad_s[:, pad:pad + H, 0:WCi] = x3
    cpad_s[:, pad:pad + H, WCi:WC2] = hr

    cc = jnp.broadcast_to(bt_ref[...], (NBH, WCh))              # f32 accumulator
    for kh in range(ksize):
        blk = cpad_s[:, kh:kh + H, :].reshape(NBH, WC2).astype(bf16)
        cc = cc + jnp.dot(blk, aw_ref[kh], preferred_element_type=f32)
    h_bar = jnp.tanh(cc)                                        # (NB*H, W*Ch)

    # ---------------- h_next = z*h + (1-z)*h_bar  (single dense store) ------
    h2 = h3.reshape(NBH, WCh)
    o_ref[...] = (h_bar + z * (h2 - h_bar)).reshape(NB, H, WCh).astype(o_ref.dtype)


def _banded_conv_operator(w_oihw, W, pad, dtype=jnp.float32):
    """(Cout, Cin, K, K) conv weight -> K banded matmul operators.

    Returns A of shape (K, W*Cin, W*Cout) so that, for an H-only zero-padded
    dense slab inp[h, w*Cin + ci],
        out[h, w*Cout + co] = sum_kh (inp[h + kh, :] @ A[kh])[w*Cout + co]
    equals nn.Conv2d's same-padded cross-correlation output.
    """
    _, _, K, _ = w_oihw.shape
    mats = []
    for kh in range(K):
        A = None
        for kw in range(K):
            E = jnp.eye(W, k=pad - kw, dtype=dtype)
            term = jnp.kron(E, jnp.transpose(w_oihw[:, :, kh, kw]).astype(dtype))
            A = term if A is None else A + term
        mats.append(A)
    return jnp.stack(mats)


def _banded_sa_operator(w_sa_2d, W, Ch, dtype=jnp.float32):
    """7x7 single-channel conv as banded operators on the dense max map.

    Only lane w*Ch + (Ch-1) of the input slab carries the per-pixel channel
    max; the operator reads that lane only (selector row Ch-1) and replicates
    the conv result to all Ch output lanes of the pixel.
    """
    SK = w_sa_2d.shape[0]
    SP = SK // 2
    sel = jnp.zeros((Ch, Ch), dtype).at[Ch - 1, :].set(1.0)
    mats = []
    for kh in range(SK):
        A = jnp.zeros((W, W), dtype)
        for kw in range(SK):
            A = A + jnp.eye(W, k=SP - kw, dtype=dtype) * w_sa_2d[kh, kw]
        mats.append(jnp.kron(A, sel))
    return jnp.stack(mats)                              # (SK, W*Ch, W*Ch)


def _build_gru_constants(params, W, Ci, Ch, ksize):
    """Kernel-constant operands from PyTorch-layout parameters.

    For recurrent (scan) use, call this ONCE per sequence and reuse the result
    at every time step -- rebuilding the banded operators per step would cost
    more than the ~7 MFLOP kernel itself.
    """
    w_fc1, w_fc2, w_sa, w_oc, b_oc = params
    f32, bf16 = jnp.float32, jnp.bfloat16
    pad = ksize // 2
    w1 = w_fc1[:, :, 0, 0].astype(f32)                             # (Cr, C2)
    w2t = jnp.transpose(w_fc2[:, :, 0, 0]).astype(f32)             # (Cr, Ch)
    t_mat = jnp.kron(jnp.ones((1, W), f32), jnp.eye(Ch, dtype=f32))  # (Ch, W*Ch)
    bsa = _banded_sa_operator(w_sa[0, 0].astype(f32), W, Ch).astype(bf16)
    aw = jnp.concatenate(
        [_banded_conv_operator(w_oc[:, :Ci], W, pad),              # x block
         _banded_conv_operator(w_oc[:, Ci:], W, pad)],             # h block
        axis=1).astype(bf16)                                       # (K, W*C2, W*Ch)
    bt = jnp.tile(b_oc.reshape(1, Ch).astype(f32), (1, W))         # (1, W*Ch)
    return w1, w2t, t_mat, bsa, aw, bt


def _pick_batch_block(N, H, target_rows=256):
    """Pick NB (images stacked per grid step) so the matmul M dim (NB*H rows)
    approaches the MXU height while keeping >= 2 grid steps whenever N >= 2
    (so both v7x TensorCores get work under the 'parallel' batch axis)."""
    best = 1
    for nb in range(1, N + 1):
        if N % nb:
            continue
        if nb * H > target_rows:
            continue
        if N >= 2 and N // nb < 2:
            continue
        best = nb
    return best


def conv2d_gru_cell(x_nchw, h_nchw, params, ksize=3, batch_block=None,
                    single_buffer_weights=True):
    """Forward pass of Conv2dGRUCell.  Inputs/outputs are NCHW like PyTorch.

    params (PyTorch layouts):
      w_fc1 : (Cr, 2*Ci, 1, 1)   ca1.fc1.weight
      w_fc2 : (Ch,  Cr, 1, 1)    ca1.fc2.weight
      w_sa  : (1, 1, 7, 7)       sa1.conv1.weight
      w_oc  : (Ch, Ci+Ch, K, K)  out_conv.weight
      b_oc  : (Ch,)              out_conv.bias
    """
    w_fc1, w_fc2, w_sa, w_oc, b_oc = params
    N, Ci, H, W = x_nchw.shape
    Ch = h_nchw.shape[1]
    C2 = Ci + Ch
    K = ksize
    pad = K // 2
    SK = w_sa.shape[-1]
    Cr = w_fc1.shape[0]
    f32 = jnp.float32

    if Ci != Ch:
        # ca1 emits (Ci+Ch)//2 channels which must broadcast over h.
        raise ValueError("Conv2dGRUCell requires input_channels == hidden_channels")
    assert w_fc2.shape[0] == Ch and w_oc.shape == (Ch, C2, K, K)
    assert Cr >= 1, "ChannelAttention needs in_planes >= 16"
    # Explicit lane-dense design assumptions (per review).
    assert (W * Ci) % 128 == 0 and (W * Ch) % 128 == 0, \
        "dense layout assumes W*C is a multiple of 128 lanes"
    assert H % 8 == 0, "H must be a multiple of 8 (sublane-aligned reshapes)"

    NB = batch_block if batch_block is not None else _pick_batch_block(N, H)
    assert N % NB == 0, "batch_block must divide N"
    Nblk = N // NB

    # Lane-dense activations: lane index = w*C + c; NB images per grid block.
    # (For recurrent use keep h in this dense layout across steps instead of
    #  converting NCHW <-> dense every step.)
    xd = jnp.transpose(x_nchw, (0, 2, 3, 1)).reshape(Nblk, NB, H, W * Ci).astype(f32)
    hd = jnp.transpose(h_nchw, (0, 2, 3, 1)).reshape(Nblk, NB, H, W * Ch).astype(f32)

    w1, w2t, t_mat, bsa, aw, bt = _build_gru_constants(params, W, Ci, Ch, K)

    kernel = functools.partial(_gru_cell_kernel, ksize=K, H=H, W=W,
                               Ci=Ci, Ch=Ch, NB=NB)

    def wspec(shape):
        # Constant-index weight inputs: single-buffer them so the banded
        # operators are not pointlessly double-buffered (v7x: 64 MiB VMEM).
        nd = len(shape)
        if single_buffer_weights:
            return pl.BlockSpec(shape, lambda *_: (0,) * nd,
                                pipeline_mode=pl.Buffered(1))
        return pl.BlockSpec(shape, lambda *_: (0,) * nd)

    out = pl.pallas_call(
        kernel,
        out_shape=jax.ShapeDtypeStruct((Nblk, NB, H, W * Ch), f32),
        grid_spec=pltpu.PrefetchScalarGridSpec(
            num_scalar_prefetch=0,
            grid=(Nblk,),
            in_specs=[
                pl.BlockSpec((None, NB, H, W * Ci), lambda b: (b, 0, 0, 0)),  # x
                pl.BlockSpec((None, NB, H, W * Ch), lambda b: (b, 0, 0, 0)),  # h
                wspec((Cr, C2)),                  # ca fc1
                wspec((Cr, Ch)),                  # ca fc2 (transposed)
                wspec((Ch, W * Ch)),              # r-tiling operator
                wspec((SK, W * Ch, W * Ch)),      # SA banded operator (bf16)
                wspec((K, W * C2, W * Ch)),       # out_conv banded operator (bf16)
                wspec((1, W * Ch)),               # bias (tiled)
            ],
            out_specs=pl.BlockSpec((None, NB, H, W * Ch), lambda b: (b, 0, 0, 0)),
            scratch_shapes=[
                pltpu.VMEM((NB, H + 2 * pad, W * C2), f32),   # padded cat(x, h*r)
                pltpu.VMEM((NB, H + SK - 1, W * Ch), f32),    # padded channel-max map
            ],
        ),
        compiler_params=pltpu.CompilerParams(
            dimension_semantics=("parallel",),     # shard batch blocks across TCs
            vmem_limit_bytes=32 * 1024 * 1024,     # explicit (v7x scoped default)
        ),
    )(xd, hd, w1, w2t, t_mat, bsa, aw, bt)

    return jnp.transpose(out.reshape(N, H, W, Ch), (0, 3, 1, 2))   # back to NCHW


def reference(x, h, params, ksize=3):
    """Pure-JAX reference matching the PyTorch forward (NCHW, torch layouts)."""
    w_fc1, w_fc2, w_sa, w_oc, b_oc = params
    N, Ci, H, W = x.shape
    Ch = h.shape[1]
    p = ksize // 2
    sp = w_sa.shape[-1] // 2

    comb = jnp.concatenate([x, h], axis=1)
    # ChannelAttention
    mp = jnp.max(comb, axis=(2, 3))                                       # (N, C2)
    mid = jax.nn.relu(jnp.dot(mp, w_fc1[:, :, 0, 0].T, precision="highest"))
    r = jax.nn.sigmoid(jnp.dot(mid, w_fc2[:, :, 0, 0].T, precision="highest"))
    # SpatialAttention
    mc = jnp.max(comb, axis=1, keepdims=True)                             # (N,1,H,W)
    z = jax.nn.sigmoid(lax.conv_general_dilated(
        mc, w_sa, (1, 1), ((sp, sp), (sp, sp)),
        dimension_numbers=("NCHW", "OIHW", "NCHW"),
        precision=lax.Precision.HIGHEST))
    # out_conv on cat(x, h * r)
    comb2 = jnp.concatenate([x, h * r[:, :, None, None]], axis=1)
    cc = lax.conv_general_dilated(
        comb2, w_oc, (1, 1), ((p, p), (p, p)),
        dimension_numbers=("NCHW", "OIHW", "NCHW"),
        precision=lax.Precision.HIGHEST) + b_oc.reshape(1, Ch, 1, 1)
    h_bar = jnp.tanh(cc)
    return z * h + (1.0 - z) * h_bar


if __name__ == "__main__":
    # input_channels == hidden_channels is required by the original module
    # (ca1 emits input_channels*2//2 planes that multiply h), and
    # input_channels*2 >= 16 so in_planes // 16 >= 1.  N=4 exercises batch
    # blocking (NB=2 -> 2 grid steps, M = 32 matmul rows per step).
    N, Ci, Ch, H, W, K = 4, 8, 8, 16, 16, 3
    C2 = Ci + Ch            # 16  (ca1 in_planes)
    Cr = C2 // 16           # 1
    Cca = C2 // 2           # 8 == Ch (required)
    assert Cca == Ch

    key = jax.random.PRNGKey(0)
    ks = jax.random.split(key, 7)
    x = jax.random.normal(ks[0], (N, Ci, H, W), jnp.float32)
    h = jax.random.normal(ks[1], (N, Ch, H, W), jnp.float32)

    # Deterministic synthetic parameters in PyTorch layouts.
    w_fc1 = jax.random.normal(ks[2], (Cr, C2, 1, 1), jnp.float32) * 0.2
    w_fc2 = jax.random.normal(ks[3], (Cca, Cr, 1, 1), jnp.float32) * 0.2
    w_sa = jax.random.normal(ks[4], (1, 1, 7, 7), jnp.float32) * 0.1
    w_oc = jax.random.normal(ks[5], (Ch, C2, K, K), jnp.float32) * 0.1
    b_oc = jax.random.normal(ks[6], (Ch,), jnp.float32) * 0.1
    params = (w_fc1, w_fc2, w_sa, w_oc, b_oc)

    def run(single_buffer):
        fn = jax.jit(functools.partial(conv2d_gru_cell, ksize=K,
                                       single_buffer_weights=single_buffer))
        return jax.block_until_ready(fn(x, h, params))

    try:
        out = run(True)
    except Exception:
        # Fallback if this Pallas build rejects Buffered(1) single-buffering of
        # the constant weight inputs; semantics are identical either way.
        out = run(False)

    ref = reference(x, h, params, ksize=K)
    err = float(jnp.max(jnp.abs(out - ref)))
    assert out.shape == (N, Ch, H, W), out.shape
    assert err < 5e-2, f"max abs err {err}"
    print("KERNEL_OK")
</pallas_src>

<mosaic_0001>
module attributes {stable_mosaic.version = 11 : i64} {
  func.func @_gru_cell_kernel(%arg0: i32, %arg1: memref<1x2x16x128xf32, #tpu.memory_space<vmem>>, %arg2: memref<1x2x16x128xf32, #tpu.memory_space<vmem>>, %arg3: memref<1x16xf32, #tpu.memory_space<vmem>>, %arg4: memref<1x8xf32, #tpu.memory_space<vmem>>, %arg5: memref<8x128xf32, #tpu.memory_space<vmem>>, %arg6: memref<7x128x128xbf16, #tpu.memory_space<vmem>>, %arg7: memref<3x256x128xbf16, #tpu.memory_space<vmem>>, %arg8: memref<1x128xf32, #tpu.memory_space<vmem>>, %arg9: memref<1x2x16x128xf32, #tpu.memory_space<vmem>>, %arg10: memref<2x18x256xf32, #tpu.memory_space<vmem>>, %arg11: memref<2x22x128xf32, #tpu.memory_space<vmem>>) attributes {dimension_semantics = [#tpu.dimension_semantics<parallel>], iteration_bounds = array<i64: 2>, scalar_prefetch = 0 : i64, scratch_operands = 2 : i64, tpu.core_type = #tpu.core_type<tc>, window_params = [{transform_indices = @transform_0, window_bounds = array<i64: 1, 2, 16, 128>}, {transform_indices = @transform_1, window_bounds = array<i64: 1, 2, 16, 128>}, {pipeline_mode = #tpu.pipeline_mode<synchronous>, transform_indices = @transform_2, window_bounds = array<i64: 1, 16>}, {pipeline_mode = #tpu.pipeline_mode<synchronous>, transform_indices = @transform_3, window_bounds = array<i64: 1, 8>}, {pipeline_mode = #tpu.pipeline_mode<synchronous>, transform_indices = @transform_4, window_bounds = array<i64: 8, 128>}, {pipeline_mode = #tpu.pipeline_mode<synchronous>, transform_indices = @transform_5, window_bounds = array<i64: 7, 128, 128>}, {pipeline_mode = #tpu.pipeline_mode<synchronous>, transform_indices = @transform_6, window_bounds = array<i64: 3, 256, 128>}, {pipeline_mode = #tpu.pipeline_mode<synchronous>, transform_indices = @transform_7, window_bounds = array<i64: 1, 128>}, {transform_indices = @transform_8, window_bounds = array<i64: 1, 2, 16, 128>}]} {
    %c0 = arith.constant 0 : index
    %c0_0 = arith.constant 0 : index
    %c0_1 = arith.constant 0 : index
    %c0_2 = arith.constant 0 : index
    %0 = vector.load %arg1[%c0, %c0_0, %c0_1, %c0_2] : memref<1x2x16x128xf32, #tpu.memory_space<vmem>>, vector<1x2x16x128xf32>
    %1 = vector.shape_cast %0 : vector<1x2x16x128xf32> to vector<2x16x128xf32>
    %c0_3 = arith.constant 0 : index
    %c0_4 = arith.constant 0 : index
    %c0_5 = arith.constant 0 : index
    %c0_6 = arith.constant 0 : index
    %2 = vector.load %arg2[%c0_3, %c0_4, %c0_5, %c0_6] : memref<1x2x16x128xf32, #tpu.memory_space<vmem>>, vector<1x2x16x128xf32>
    %3 = vector.shape_cast %2 : vector<1x2x16x128xf32> to vector<2x16x128xf32>
    %cst = arith.constant dense<0xFF800000> : vector<2x128xf32>
    %4 = vector.multi_reduction <maximumf>, %1, %cst [1] : vector<2x16x128xf32> to vector<2x128xf32>
    %c8_i32 = arith.constant 8 : i32
    %5 = tpu.dynamic_rotate %4 by %c8_i32 dim 1 : vector<2x128xf32>, i32 -> vector<2x128xf32>
    %6 = arith.maximumf %4, %5 : vector<2x128xf32>
    %c16_i32 = arith.constant 16 : i32
    %7 = tpu.dynamic_rotate %6 by %c16_i32 dim 1 : vector<2x128xf32>, i32 -> vector<2x128xf32>
    %8 = arith.maximumf %6, %7 : vector<2x128xf32>
    %c32_i32 = arith.constant 32 : i32
    %9 = tpu.dynamic_rotate %8 by %c32_i32 dim 1 : vector<2x128xf32>, i32 -> vector<2x128xf32>
    %10 = arith.maximumf %8, %9 : vector<2x128xf32>
    %c64_i32 = arith.constant 64 : i32
    %11 = tpu.dynamic_rotate %10 by %c64_i32 dim 1 : vector<2x128xf32>, i32 -> vector<2x128xf32>
    %12 = arith.maximumf %10, %11 : vector<2x128xf32>
    %13 = vector.extract_strided_slice %12 {offsets = [0, 120], sizes = [2, 8], strides = [1, 1]} : vector<2x128xf32> to vector<2x8xf32>
    %cst_7 = arith.constant dense<0xFF800000> : vector<2x128xf32>
    %14 = vector.multi_reduction <maximumf>, %3, %cst_7 [1] : vector<2x16x128xf32> to vector<2x128xf32>
    %c8_i32_8 = arith.constant 8 : i32
    %15 = tpu.dynamic_rotate %14 by %c8_i32_8 dim 1 : vector<2x128xf32>, i32 -> vector<2x128xf32>
    %16 = arith.maximumf %14, %15 : vector<2x128xf32>
    %c16_i32_9 = arith.constant 16 : i32
    %17 = tpu.dynamic_rotate %16 by %c16_i32_9 dim 1 : vector<2x128xf32>, i32 -> vector<2x128xf32>
    %18 = arith.maximumf %16, %17 : vector<2x128xf32>
    %c32_i32_10 = arith.constant 32 : i32
    %19 = tpu.dynamic_rotate %18 by %c32_i32_10 dim 1 : vector<2x128xf32>, i32 -> vector<2x128xf32>
    %20 = arith.maximumf %18, %19 : vector<2x128xf32>
    %c64_i32_11 = arith.constant 64 : i32
    %21 = tpu.dynamic_rotate %20 by %c64_i32_11 dim 1 : vector<2x128xf32>, i32 -> vector<2x128xf32>
    %22 = arith.maximumf %20, %21 : vector<2x128xf32>
    %23 = vector.extract_strided_slice %22 {offsets = [0, 120], sizes = [2, 8], strides = [1, 1]} : vector<2x128xf32> to vector<2x8xf32>
    %24 = tpu.concatenate %13, %23 in 1 : vector<2x8xf32>, vector<2x8xf32> -> vector<2x16xf32>
    %cst_12 = arith.constant 0.000000e+00 : f32
    %25 = vector.broadcast %cst_12 : f32 to vector<2x8xf32>
    %c0_13 = arith.constant 0 : index
    %c0_14 = arith.constant 0 : index
    %26 = vector.load %arg3[%c0_13, %c0_14] : memref<1x16xf32, #tpu.memory_space<vmem>>, vector<1x16xf32>
    %27 = vector.broadcast %26 : vector<1x16xf32> to vector<2x16xf32>
    %28 = arith.mulf %24, %27 : vector<2x16xf32>
    %cst_15 = arith.constant dense<0.000000e+00> : vector<2xf32>
    %29 = vector.multi_reduction <add>, %28, %cst_15 [1] : vector<2x16xf32> to vector<2xf32>
    %30 = vector.shape_cast %29 : vector<2xf32> to vector<2x1xf32>
    %cst_16 = arith.constant 0.000000e+00 : f32
    %31 = vector.broadcast %cst_16 : f32 to vector<2x1xf32>
    %32 = arith.maximumf %30, %31 : vector<2x1xf32>
    %c0_17 = arith.constant 0 : index
    %c0_18 = arith.constant 0 : index
    %33 = vector.load %arg4[%c0_17, %c0_18] : memref<1x8xf32, #tpu.memory_space<vmem>>, vector<1x8xf32>
    %34 = vector.broadcast %32 : vector<2x1xf32> to vector<2x8xf32>
    %35 = vector.broadcast %33 : vector<1x8xf32> to vector<2x8xf32>
    %36 = arith.mulf %34, %35 : vector<2x8xf32>
    %37 = arith.addf %25, %36 : vector<2x8xf32>
    %38 = arith.negf %37 : vector<2x8xf32>
    %39 = math.exp %38 : vector<2x8xf32>
    %cst_19 = arith.constant 1.000000e+00 : f32
    %40 = vector.broadcast %cst_19 : f32 to vector<2x8xf32>
    %41 = arith.addf %40, %39 : vector<2x8xf32>
    %42 = arith.divf %40, %41 : vector<2x8xf32>
    %43 = arith.maximumf %1, %3 : vector<2x16x128xf32>
    %44 = vector.shape_cast %43 : vector<2x16x128xf32> to vector<32x128xf32>
    %c1_i32 = arith.constant 1 : i32
    %45 = tpu.dynamic_rotate %44 by %c1_i32 dim 1 : vector<32x128xf32>, i32 -> vector<32x128xf32>
    %46 = arith.maximumf %44, %45 : vector<32x128xf32>
    %c2_i32 = arith.constant 2 : i32
    %47 = tpu.dynamic_rotate %46 by %c2_i32 dim 1 : vector<32x128xf32>, i32 -> vector<32x128xf32>
    %48 = arith.maximumf %46, %47 : vector<32x128xf32>
    %c4_i32 = arith.constant 4 : i32
    %49 = tpu.dynamic_rotate %48 by %c4_i32 dim 1 : vector<32x128xf32>, i32 -> vector<32x128xf32>
    %50 = arith.maximumf %48, %49 : vector<32x128xf32>
    %cst_20 = arith.constant 0.000000e+00 : f32
    %51 = vector.broadcast %cst_20 : f32 to vector<2x3x128xf32>
    %c0_21 = arith.constant 0 : index
    %c0_22 = arith.constant 0 : index
    %c0_23 = arith.constant 0 : index
    %52 = vector.load %arg11[%c0_21, %c0_22, %c0_23] : memref<2x22x128xf32, #tpu.memory_space<vmem>>, vector<2x3x128xf32>
    tpu.vector_store %arg11[%c0_21, %c0_22, %c0_23], %51 {strides = array<i32>} : memref<2x22x128xf32, #tpu.memory_space<vmem>>, vector<2x3x128xf32>,
    %cst_24 = arith.constant 0.000000e+00 : f32
    %53 = vector.broadcast %cst_24 : f32 to vector<2x3x128xf32>
    %c0_25 = arith.constant 0 : index
    %c19 = arith.constant 19 : index
    %c0_26 = arith.constant 0 : index
    %54 = vector.load %arg11[%c0_25, %c19, %c0_26] : memref<2x22x128xf32, #tpu.memory_space<vmem>>, vector<2x3x128xf32>
    tpu.vector_store %arg11[%c0_25, %c19, %c0_26], %53 {strides = array<i32>} : memref<2x22x128xf32, #tpu.memory_space<vmem>>, vector<2x3x128xf32>,
    %55 = vector.shape_cast %50 : vector<32x128xf32> to vector<2x16x128xf32>
    %c0_27 = arith.constant 0 : index
    %c3 = arith.constant 3 : index
    %c0_28 = arith.constant 0 : index
    %56 = vector.load %arg11[%c0_27, %c3, %c0_28] : memref<2x22x128xf32, #tpu.memory_space<vmem>>, vector<2x16x128xf32>
    tpu.vector_store %arg11[%c0_27, %c3, %c0_28], %55 {strides = array<i32>} : memref<2x22x128xf32, #tpu.memory_space<vmem>>, vector<2x16x128xf32>,
    %cst_29 = arith.constant 0.000000e+00 : f32
    %57 = vector.broadcast %cst_29 : f32 to vector<32x128xf32>
    %c0_30 = arith.constant 0 : index
    %c0_31 = arith.constant 0 : index
    %c0_32 = arith.constant 0 : index
    %58 = vector.load %arg11[%c0_30, %c0_31, %c0_32] : memref<2x22x128xf32, #tpu.memory_space<vmem>>, vector<2x16x128xf32>
    %59 = vector.shape_cast %58 : vector<2x16x128xf32> to vector<32x128xf32>
    %60 = arith.truncf %59 : vector<32x128xf32> to vector<32x128xbf16>
    %c0_33 = arith.constant 0 : index
    %c0_34 = arith.constant 0 : index
    %c0_35 = arith.constant 0 : index
    %61 = vector.load %arg6[%c0_33, %c0_34, %c0_35] : memref<7x128x128xbf16, #tpu.memory_space<vmem>>, vector<1x128x128xbf16>
    %62 = vector.shape_cast %61 : vector<1x128x128xbf16> to vector<128x128xbf16>
    %cst_36 = arith.constant dense<0.000000e+00> : vector<32x128xf32>
    %63 = tpu.matmul %60, %62, %cst_36 {dimension_numbers = #tpu.dot_dimension_numbers<[1], [0], [0], [1], [0, 0, 1, 1], [], []>} : vector<32x128xbf16>, vector<128x128xbf16>, vector<32x128xf32> -> vector<32x128xf32>
    %64 = arith.addf %57, %63 : vector<32x128xf32>
    %c0_37 = arith.constant 0 : index
    %c1 = arith.constant 1 : index
    %c0_38 = arith.constant 0 : index
    %65 = vector.load %arg11[%c0_37, %c1, %c0_38] : memref<2x22x128xf32, #tpu.memory_space<vmem>>, vector<2x16x128xf32>
    %66 = vector.shape_cast %65 : vector<2x16x128xf32> to vector<32x128xf32>
    %67 = arith.truncf %66 : vector<32x128xf32> to vector<32x128xbf16>
    %c1_39 = arith.constant 1 : index
    %c0_40 = arith.constant 0 : index
    %c0_41 = arith.constant 0 : index
    %68 = vector.load %arg6[%c1_39, %c0_40, %c0_41] : memref<7x128x128xbf16, #tpu.memory_space<vmem>>, vector<1x128x128xbf16>
    %69 = vector.shape_cast %68 : vector<1x128x128xbf16> to vector<128x128xbf16>
    %cst_42 = arith.constant dense<0.000000e+00> : vector<32x128xf32>
    %70 = tpu.matmul %67, %69, %cst_42 {dimension_numbers = #tpu.dot_dimension_numbers<[1], [0], [0], [1], [0, 0, 1, 1], [], []>} : vector<32x128xbf16>, vector<128x128xbf16>, vector<32x128xf32> -> vector<32x128xf32>
    %71 = arith.addf %64, %70 : vector<32x128xf32>
    %c0_43 = arith.constant 0 : index
    %c2 = arith.constant 2 : index
    %c0_44 = arith.constant 0 : index
    %72 = vector.load %arg11[%c0_43, %c2, %c0_44] : memref<2x22x128xf32, #tpu.memory_space<vmem>>, vector<2x16x128xf32>
    %73 = vector.shape_cast %72 : vector<2x16x128xf32> to vector<32x128xf32>
    %74 = arith.truncf %73 : vector<32x128xf32> to vector<32x128xbf16>
    %c2_45 = arith.constant 2 : index
    %c0_46 = arith.constant 0 : index
    %c0_47 = arith.constant 0 : index
    %75 = vector.load %arg6[%c2_45, %c0_46, %c0_47] : memref<7x128x128xbf16, #tpu.memory_space<vmem>>, vector<1x128x128xbf16>
    %76 = vector.shape_cast %75 : vector<1x128x128xbf16> to vector<128x128xbf16>
    %cst_48 = arith.constant dense<0.000000e+00> : vector<32x128xf32>
    %77 = tpu.matmul %74, %76, %cst_48 {dimension_numbers = #tpu.dot_dimension_numbers<[1], [0], [0], [1], [0, 0, 1, 1], [], []>} : vector<32x128xbf16>, vector<128x128xbf16>, vector<32x128xf32> -> vector<32x128xf32>
    %78 = arith.addf %71, %77 : vector<32x128xf32>
    %c0_49 = arith.constant 0 : index
    %c3_50 = arith.constant 3 : index
    %c0_51 = arith.constant 0 : index
    %79 = vector.load %arg11[%c0_49, %c3_50, %c0_51] : memref<2x22x128xf32, #tpu.memory_space<vmem>>, vector<2x16x128xf32>
    %80 = vector.shape_cast %79 : vector<2x16x128xf32> to vector<32x128xf32>
    %81 = arith.truncf %80 : vector<32x128xf32> to vector<32x128xbf16>
    %c3_52 = arith.constant 3 : index
    %c0_53 = arith.constant 0 : index
    %c0_54 = arith.constant 0 : index
    %82 = vector.load %arg6[%c3_52, %c0_53, %c0_54] : memref<7x128x128xbf16, #tpu.memory_space<vmem>>, vector<1x128x128xbf16>
    %83 = vector.shape_cast %82 : vector<1x128x128xbf16> to vector<128x128xbf16>
    %cst_55 = arith.constant dense<0.000000e+00> : vector<32x128xf32>
    %84 = tpu.matmul %81, %83, %cst_55 {dimension_numbers = #tpu.dot_dimension_numbers<[1], [0], [0], [1], [0, 0, 1, 1], [], []>} : vector<32x128xbf16>, vector<128x128xbf16>, vector<32x128xf32> -> vector<32x128xf32>
    %85 = arith.addf %78, %84 : vector<32x128xf32>
    %c0_56 = arith.constant 0 : index
    %c4 = arith.constant 4 : index
    %c0_57 = arith.constant 0 : index
    %86 = vector.load %arg11[%c0_56, %c4, %c0_57] : memref<2x22x128xf32, #tpu.memory_space<vmem>>, vector<2x16x128xf32>
    %87 = vector.shape_cast %86 : vector<2x16x128xf32> to vector<32x128xf32>
    %88 = arith.truncf %87 : vector<32x128xf32> to vector<32x128xbf16>
    %c4_58 = arith.constant 4 : index
    %c0_59 = arith.constant 0 : index
    %c0_60 = arith.constant 0 : index
    %89 = vector.load %arg6[%c4_58, %c0_59, %c0_60] : memref<7x128x128xbf16, #tpu.memory_space<vmem>>, vector<1x128x128xbf16>
    %90 = vector.shape_cast %89 : vector<1x128x128xbf16> to vector<128x128xbf16>
    %cst_61 = arith.constant dense<0.000000e+00> : vector<32x128xf32>
    %91 = tpu.matmul %88, %90, %cst_61 {dimension_numbers = #tpu.dot_dimension_numbers<[1], [0], [0], [1], [0, 0, 1, 1], [], []>} : vector<32x128xbf16>, vector<128x128xbf16>, vector<32x128xf32> -> vector<32x128xf32>
    %92 = arith.addf %85, %91 : vector<32x128xf32>
    %c0_62 = arith.constant 0 : index
    %c5 = arith.constant 5 : index
    %c0_63 = arith.constant 0 : index
    %93 = vector.load %arg11[%c0_62, %c5, %c0_63] : memref<2x22x128xf32, #tpu.memory_space<vmem>>, vector<2x16x128xf32>
    %94 = vector.shape_cast %93 : vector<2x16x128xf32> to vector<32x128xf32>
    %95 = arith.truncf %94 : vector<32x128xf32> to vector<32x128xbf16>
    %c5_64 = arith.constant 5 : index
    %c0_65 = arith.constant 0 : index
    %c0_66 = arith.constant 0 : index
    %96 = vector.load %arg6[%c5_64, %c0_65, %c0_66] : memref<7x128x128xbf16, #tpu.memory_space<vmem>>, vector<1x128x128xbf16>
    %97 = vector.shape_cast %96 : vector<1x128x128xbf16> to vector<128x128xbf16>
    %cst_67 = arith.constant dense<0.000000e+00> : vector<32x128xf32>
    %98 = tpu.matmul %95, %97, %cst_67 {dimension_numbers = #tpu.dot_dimension_numbers<[1], [0], [0], [1], [0, 0, 1, 1], [], []>} : vector<32x128xbf16>, vector<128x128xbf16>, vector<32x128xf32> -> vector<32x128xf32>
    %99 = arith.addf %92, %98 : vector<32x128xf32>
    %c0_68 = arith.constant 0 : index
    %c6 = arith.constant 6 : index
    %c0_69 = arith.constant 0 : index
    %100 = vector.load %arg11[%c0_68, %c6, %c0_69] : memref<2x22x128xf32, #tpu.memory_space<vmem>>, vector<2x16x128xf32>
    %101 = vector.shape_cast %100 : vector<2x16x128xf32> to vector<32x128xf32>
    %102 = arith.truncf %101 : vector<32x128xf32> to vector<32x128xbf16>
    %c6_70 = arith.constant 6 : index
    %c0_71 = arith.constant 0 : index
    %c0_72 = arith.constant 0 : index
    %103 = vector.load %arg6[%c6_70, %c0_71, %c0_72] : memref<7x128x128xbf16, #tpu.memory_space<vmem>>, vector<1x128x128xbf16>
    %104 = vector.shape_cast %103 : vector<1x128x128xbf16> to vector<128x128xbf16>
    %cst_73 = arith.constant dense<0.000000e+00> : vector<32x128xf32>
    %105 = tpu.matmul %102, %104, %cst_73 {dimension_numbers = #tpu.dot_dimension_numbers<[1], [0], [0], [1], [0, 0, 1, 1], [], []>} : vector<32x128xbf16>, vector<128x128xbf16>, vector<32x128xf32> -> vector<32x128xf32>
    %106 = arith.addf %99, %105 : vector<32x128xf32>
    %107 = arith.negf %106 : vector<32x128xf32>
    %108 = math.exp %107 : vector<32x128xf32>
    %cst_74 = arith.constant 1.000000e+00 : f32
    %109 = vector.broadcast %cst_74 : f32 to vector<32x128xf32>
    %110 = arith.addf %109, %108 : vector<32x128xf32>
    %111 = arith.divf %109, %110 : vector<32x128xf32>
    %c0_75 = arith.constant 0 : index
    %c0_76 = arith.constant 0 : index
    %112 = vector.load %arg5[%c0_75, %c0_76] : memref<8x128xf32, #tpu.memory_space<vmem>>, vector<8x128xf32>
    %cst_77 = arith.constant dense<0.000000e+00> : vector<2x128xf32>
    %113 = tpu.matmul %42, %112, %cst_77 {dimension_numbers = #tpu.dot_dimension_numbers<[1], [0], [0], [1], [0, 0, 1, 1], [], []>} : vector<2x8xf32>, vector<8x128xf32>, vector<2x128xf32> -> vector<2x128xf32>
    %114 = vector.shape_cast %113 : vector<2x128xf32> to vector<2x1x128xf32>
    %115 = vector.broadcast %114 : vector<2x1x128xf32> to vector<2x16x128xf32>
    %116 = arith.mulf %3, %115 : vector<2x16x128xf32>
    %cst_78 = arith.constant 0.000000e+00 : f32
    %117 = vector.broadcast %cst_78 : f32 to vector<2x1x256xf32>
    %c0_79 = arith.constant 0 : index
    %c0_80 = arith.constant 0 : index
    %c0_81 = arith.constant 0 : index
    %118 = vector.load %arg10[%c0_79, %c0_80, %c0_81] : memref<2x18x256xf32, #tpu.memory_space<vmem>>, vector<2x1x256xf32>
    tpu.vector_store %arg10[%c0_79, %c0_80, %c0_81], %117 {strides = array<i32>} : memref<2x18x256xf32, #tpu.memory_space<vmem>>, vector<2x1x256xf32>,
    %cst_82 = arith.constant 0.000000e+00 : f32
    %119 = vector.broadcast %cst_82 : f32 to vector<2x1x256xf32>
    %c0_83 = arith.constant 0 : index
    %c17 = arith.constant 17 : index
    %c0_84 = arith.constant 0 : index
    %120 = vector.load %arg10[%c0_83, %c17, %c0_84] : memref<2x18x256xf32, #tpu.memory_space<vmem>>, vector<2x1x256xf32>
    tpu.vector_store %arg10[%c0_83, %c17, %c0_84], %119 {strides = array<i32>} : memref<2x18x256xf32, #tpu.memory_space<vmem>>, vector<2x1x256xf32>,
    %c0_85 = arith.constant 0 : index
    %c1_86 = arith.constant 1 : index
    %c0_87 = arith.constant 0 : index
    %121 = vector.load %arg10[%c0_85, %c1_86, %c0_87] : memref<2x18x256xf32, #tpu.memory_space<vmem>>, vector<2x16x128xf32>
    tpu.vector_store %arg10[%c0_85, %c1_86, %c0_87], %1 {strides = array<i32>} : memref<2x18x256xf32, #tpu.memory_space<vmem>>, vector<2x16x128xf32>,
    %c0_88 = arith.constant 0 : index
    %c1_89 = arith.constant 1 : index
    %c128 = arith.constant 128 : index
    %122 = vector.load %arg10[%c0_88, %c1_89, %c128] : memref<2x18x256xf32, #tpu.memory_space<vmem>>, vector<2x16x128xf32>
    tpu.vector_store %arg10[%c0_88, %c1_89, %c128], %116 {strides = array<i32>} : memref<2x18x256xf32, #tpu.memory_space<vmem>>, vector<2x16x128xf32>,
    %c0_90 = arith.constant 0 : index
    %c0_91 = arith.constant 0 : index
    %123 = vector.load %arg8[%c0_90, %c0_91] : memref<1x128xf32, #tpu.memory_space<vmem>>, vector<1x128xf32>
    %124 = vector.shape_cast %123 : vector<1x128xf32> to vector<1x128xf32>
    %125 = vector.broadcast %124 : vector<1x128xf32> to vector<32x128xf32>
    %c0_92 = arith.constant 0 : index
    %c0_93 = arith.constant 0 : index
    %c0_94 = arith.constant 0 : index
    %126 = vector.load %arg10[%c0_92, %c0_93, %c0_94] : memref<2x18x256xf32, #tpu.memory_space<vmem>>, vector<2x16x256xf32>
    %127 = vector.shape_cast %126 : vector<2x16x256xf32> to vector<32x256xf32>
    %128 = arith.truncf %127 : vector<32x256xf32> to vector<32x256xbf16>
    %c0_95 = arith.constant 0 : index
    %c0_96 = arith.constant 0 : index
    %c0_97 = arith.constant 0 : index
    %129 = vector.load %arg7[%c0_95, %c0_96, %c0_97] : memref<3x256x128xbf16, #tpu.memory_space<vmem>>, vector<1x256x128xbf16>
    %130 = vector.shape_cast %129 : vector<1x256x128xbf16> to vector<256x128xbf16>
    %cst_98 = arith.constant dense<0.000000e+00> : vector<32x128xf32>
    %131 = tpu.matmul %128, %130, %cst_98 {dimension_numbers = #tpu.dot_dimension_numbers<[1], [0], [0], [1], [0, 0, 1, 1], [], []>} : vector<32x256xbf16>, vector<256x128xbf16>, vector<32x128xf32> -> vector<32x128xf32>
    %132 = arith.addf %125, %131 : vector<32x128xf32>
    %c0_99 = arith.constant 0 : index
    %c1_100 = arith.constant 1 : index
    %c0_101 = arith.constant 0 : index
    %133 = vector.load %arg10[%c0_99, %c1_100, %c0_101] : memref<2x18x256xf32, #tpu.memory_space<vmem>>, vector<2x16x256xf32>
    %134 = vector.shape_cast %133 : vector<2x16x256xf32> to vector<32x256xf32>
    %135 = arith.truncf %134 : vector<32x256xf32> to vector<32x256xbf16>
    %c1_102 = arith.constant 1 : index
    %c0_103 = arith.constant 0 : index
    %c0_104 = arith.constant 0 : index
    %136 = vector.load %arg7[%c1_102, %c0_103, %c0_104] : memref<3x256x128xbf16, #tpu.memory_space<vmem>>, vector<1x256x128xbf16>
    %137 = vector.shape_cast %136 : vector<1x256x128xbf16> to vector<256x128xbf16>
    %cst_105 = arith.constant dense<0.000000e+00> : vector<32x128xf32>
    %138 = tpu.matmul %135, %137, %cst_105 {dimension_numbers = #tpu.dot_dimension_numbers<[1], [0], [0], [1], [0, 0, 1, 1], [], []>} : vector<32x256xbf16>, vector<256x128xbf16>, vector<32x128xf32> -> vector<32x128xf32>
    %139 = arith.addf %132, %138 : vector<32x128xf32>
    %c0_106 = arith.constant 0 : index
    %c2_107 = arith.constant 2 : index
    %c0_108 = arith.constant 0 : index
    %140 = vector.load %arg10[%c0_106, %c2_107, %c0_108] : memref<2x18x256xf32, #tpu.memory_space<vmem>>, vector<2x16x256xf32>
    %141 = vector.shape_cast %140 : vector<2x16x256xf32> to vector<32x256xf32>
    %142 = arith.truncf %141 : vector<32x256xf32> to vector<32x256xbf16>
    %c2_109 = arith.constant 2 : index
    %c0_110 = arith.constant 0 : index
    %c0_111 = arith.constant 0 : index
    %143 = vector.load %arg7[%c2_109, %c0_110, %c0_111] : memref<3x256x128xbf16, #tpu.memory_space<vmem>>, vector<1x256x128xbf16>
    %144 = vector.shape_cast %143 : vector<1x256x128xbf16> to vector<256x128xbf16>
    %cst_112 = arith.constant dense<0.000000e+00> : vector<32x128xf32>
    %145 = tpu.matmul %142, %144, %cst_112 {dimension_numbers = #tpu.dot_dimension_numbers<[1], [0], [0], [1], [0, 0, 1, 1], [], []>} : vector<32x256xbf16>, vector<256x128xbf16>, vector<32x128xf32> -> vector<32x128xf32>
    %146 = arith.addf %139, %145 : vector<32x128xf32>
    %147 = math.tanh %146 : vector<32x128xf32>
    %148 = vector.shape_cast %3 : vector<2x16x128xf32> to vector<32x128xf32>
    %149 = arith.subf %148, %147 : vector<32x128xf32>
    %150 = arith.mulf %111, %149 : vector<32x128xf32>
    %151 = arith.addf %147, %150 : vector<32x128xf32>
    %152 = vector.shape_cast %151 : vector<32x128xf32> to vector<2x16x128xf32>
    %c0_113 = arith.constant 0 : index
    %c0_114 = arith.constant 0 : index
    %c0_115 = arith.constant 0 : index
    %c0_116 = arith.constant 0 : index
    %153 = vector.load %arg9[%c0_113, %c0_114, %c0_115, %c0_116] : memref<1x2x16x128xf32, #tpu.memory_space<vmem>>, vector<1x2x16x128xf32>
    %154 = vector.shape_cast %153 : vector<1x2x16x128xf32> to vector<2x16x128xf32>
    %155 = vector.shape_cast %152 : vector<2x16x128xf32> to vector<1x2x16x128xf32>
    tpu.vector_store %arg9[%c0_113, %c0_114, %c0_115, %c0_116], %155 {strides = array<i32>} : memref<1x2x16x128xf32, #tpu.memory_space<vmem>>, vector<1x2x16x128xf32>,
    return
  }
  func.func @transform_0(%arg0: i32) -> (i32, i32, i32, i32) {
    %c0_i32 = arith.constant 0 : i32
    %c0_i32_0 = arith.constant 0 : i32
    %c0_i32_1 = arith.constant 0 : i32
    %c0_i32_2 = arith.constant 0 : i32
    return %arg0, %c0_i32, %c0_i32_0, %c0_i32_1 : i32, i32, i32, i32
  }
  func.func @transform_1(%arg0: i32) -> (i32, i32, i32, i32) {
    %c0_i32 = arith.constant 0 : i32
    %c0_i32_0 = arith.constant 0 : i32
    %c0_i32_1 = arith.constant 0 : i32
    %c0_i32_2 = arith.constant 0 : i32
    return %arg0, %c0_i32, %c0_i32_0, %c0_i32_1 : i32, i32, i32, i32
  }
  func.func @transform_2(%arg0: i32) -> (i32, i32) {
    %c0_i32 = arith.constant 0 : i32
    %c0_i32_0 = arith.constant 0 : i32
    %c0_i32_1 = arith.constant 0 : i32
    return %c0_i32, %c0_i32_0 : i32, i32
  }
  func.func @transform_3(%arg0: i32) -> (i32, i32) {
    %c0_i32 = arith.constant 0 : i32
    %c0_i32_0 = arith.constant 0 : i32
    %c0_i32_1 = arith.constant 0 : i32
    return %c0_i32, %c0_i32_0 : i32, i32
  }
  func.func @transform_4(%arg0: i32) -> (i32, i32) {
    %c0_i32 = arith.constant 0 : i32
    %c0_i32_0 = arith.constant 0 : i32
    %c0_i32_1 = arith.constant 0 : i32
    return %c0_i32, %c0_i32_0 : i32, i32
  }
  func.func @transform_5(%arg0: i32) -> (i32, i32, i32) {
    %c0_i32 = arith.constant 0 : i32
    %c0_i32_0 = arith.constant 0 : i32
    %c0_i32_1 = arith.constant 0 : i32
    %c0_i32_2 = arith.constant 0 : i32
    return %c0_i32, %c0_i32_0, %c0_i32_1 : i32, i32, i32
  }
  func.func @transform_6(%arg0: i32) -> (i32, i32, i32) {
    %c0_i32 = arith.constant 0 : i32
    %c0_i32_0 = arith.constant 0 : i32
    %c0_i32_1 = arith.constant 0 : i32
    %c0_i32_2 = arith.constant 0 : i32
    return %c0_i32, %c0_i32_0, %c0_i32_1 : i32, i32, i32
  }
  func.func @transform_7(%arg0: i32) -> (i32, i32) {
    %c0_i32 = arith.constant 0 : i32
    %c0_i32_0 = arith.constant 0 : i32
    %c0_i32_1 = arith.constant 0 : i32
    return %c0_i32, %c0_i32_0 : i32, i32
  }
  func.func @transform_8(%arg0: i32) -> (i32, i32, i32, i32) {
    %c0_i32 = arith.constant 0 : i32
    %c0_i32_0 = arith.constant 0 : i32
    %c0_i32_1 = arith.constant 0 : i32
    %c0_i32_2 = arith.constant 0 : i32
    return %arg0, %c0_i32, %c0_i32_0, %c0_i32_1 : i32, i32, i32, i32
  }
}

module attributes {stable_mosaic.version = 11 : i64} {
  func.func @_gru_cell_kernel(%arg0: i32, %arg1: memref<1x2x16x128xf32, #tpu.memory_space<vmem>>, %arg2: memref<1x2x16x128xf32, #tpu.memory_space<vmem>>, %arg3: memref<1x16xf32, #tpu.memory_space<vmem>>, %arg4: memref<1x8xf32, #tpu.memory_space<vmem>>, %arg5: memref<8x128xf32, #tpu.memory_space<vmem>>, %arg6: memref<7x128x128xbf16, #tpu.memory_space<vmem>>, %arg7: memref<3x256x128xbf16, #tpu.memory_space<vmem>>, %arg8: memref<1x128xf32, #tpu.memory_space<vmem>>, %arg9: memref<1x2x16x128xf32, #tpu.memory_space<vmem>>, %arg10: memref<2x18x256xf32, #tpu.memory_space<vmem>>, %arg11: memref<2x22x128xf32, #tpu.memory_space<vmem>>) attributes {dimension_semantics = [#tpu.dimension_semantics<parallel>], iteration_bounds = array<i64: 2>, scalar_prefetch = 0 : i64, scratch_operands = 2 : i64, tpu.core_type = #tpu.core_type<tc>, window_params = [{transform_indices = @transform_0, window_bounds = array<i64: 1, 2, 16, 128>}, {transform_indices = @transform_1, window_bounds = array<i64: 1, 2, 16, 128>}, {pipeline_mode = #tpu.pipeline_mode<synchronous>, transform_indices = @transform_2, window_bounds = array<i64: 1, 16>}, {pipeline_mode = #tpu.pipeline_mode<synchronous>, transform_indices = @transform_3, window_bounds = array<i64: 1, 8>}, {pipeline_mode = #tpu.pipeline_mode<synchronous>, transform_indices = @transform_4, window_bounds = array<i64: 8, 128>}, {pipeline_mode = #tpu.pipeline_mode<synchronous>, transform_indices = @transform_5, window_bounds = array<i64: 7, 128, 128>}, {pipeline_mode = #tpu.pipeline_mode<synchronous>, transform_indices = @transform_6, window_bounds = array<i64: 3, 256, 128>}, {pipeline_mode = #tpu.pipeline_mode<synchronous>, transform_indices = @transform_7, window_bounds = array<i64: 1, 128>}, {transform_indices = @transform_8, window_bounds = array<i64: 1, 2, 16, 128>}]} {
    %c0 = arith.constant 0 : index
    %c0_0 = arith.constant 0 : index
    %c0_1 = arith.constant 0 : index
    %c0_2 = arith.constant 0 : index
    %0 = vector.load %arg1[%c0, %c0_0, %c0_1, %c0_2] : memref<1x2x16x128xf32, #tpu.memory_space<vmem>>, vector<1x2x16x128xf32>
    %1 = vector.shape_cast %0 : vector<1x2x16x128xf32> to vector<2x16x128xf32>
    %c0_3 = arith.constant 0 : index
    %c0_4 = arith.constant 0 : index
    %c0_5 = arith.constant 0 : index
    %c0_6 = arith.constant 0 : index
    %2 = vector.load %arg2[%c0_3, %c0_4, %c0_5, %c0_6] : memref<1x2x16x128xf32, #tpu.memory_space<vmem>>, vector<1x2x16x128xf32>
    %3 = vector.shape_cast %2 : vector<1x2x16x128xf32> to vector<2x16x128xf32>
    %cst = arith.constant dense<0xFF800000> : vector<2x128xf32>
    %4 = vector.multi_reduction <maximumf>, %1, %cst [1] : vector<2x16x128xf32> to vector<2x128xf32>
    %c8_i32 = arith.constant 8 : i32
    %5 = tpu.dynamic_rotate %4 by %c8_i32 dim 1 : vector<2x128xf32>, i32 -> vector<2x128xf32>
    %6 = arith.maximumf %4, %5 : vector<2x128xf32>
    %c16_i32 = arith.constant 16 : i32
    %7 = tpu.dynamic_rotate %6 by %c16_i32 dim 1 : vector<2x128xf32>, i32 -> vector<2x128xf32>
    %8 = arith.maximumf %6, %7 : vector<2x128xf32>
    %c32_i32 = arith.constant 32 : i32
    %9 = tpu.dynamic_rotate %8 by %c32_i32 dim 1 : vector<2x128xf32>, i32 -> vector<2x128xf32>
    %10 = arith.maximumf %8, %9 : vector<2x128xf32>
    %c64_i32 = arith.constant 64 : i32
    %11 = tpu.dynamic_rotate %10 by %c64_i32 dim 1 : vector<2x128xf32>, i32 -> vector<2x128xf32>
    %12 = arith.maximumf %10, %11 : vector<2x128xf32>
    %13 = vector.extract_strided_slice %12 {offsets = [0, 120], sizes = [2, 8], strides = [1, 1]} : vector<2x128xf32> to vector<2x8xf32>
    %cst_7 = arith.constant dense<0xFF800000> : vector<2x128xf32>
    %14 = vector.multi_reduction <maximumf>, %3, %cst_7 [1] : vector<2x16x128xf32> to vector<2x128xf32>
    %c8_i32_8 = arith.constant 8 : i32
    %15 = tpu.dynamic_rotate %14 by %c8_i32_8 dim 1 : vector<2x128xf32>, i32 -> vector<2x128xf32>
    %16 = arith.maximumf %14, %15 : vector<2x128xf32>
    %c16_i32_9 = arith.constant 16 : i32
    %17 = tpu.dynamic_rotate %16 by %c16_i32_9 dim 1 : vector<2x128xf32>, i32 -> vector<2x128xf32>
    %18 = arith.maximumf %16, %17 : vector<2x128xf32>
    %c32_i32_10 = arith.constant 32 : i32
    %19 = tpu.dynamic_rotate %18 by %c32_i32_10 dim 1 : vector<2x128xf32>, i32 -> vector<2x128xf32>
    %20 = arith.maximumf %18, %19 : vector<2x128xf32>
    %c64_i32_11 = arith.constant 64 : i32
    %21 = tpu.dynamic_rotate %20 by %c64_i32_11 dim 1 : vector<2x128xf32>, i32 -> vector<2x128xf32>
    %22 = arith.maximumf %20, %21 : vector<2x128xf32>
    %23 = vector.extract_strided_slice %22 {offsets = [0, 120], sizes = [2, 8], strides = [1, 1]} : vector<2x128xf32> to vector<2x8xf32>
    %24 = tpu.concatenate %13, %23 in 1 : vector<2x8xf32>, vector<2x8xf32> -> vector<2x16xf32>
    %cst_12 = arith.constant 0.000000e+00 : f32
    %25 = vector.broadcast %cst_12 : f32 to vector<2x8xf32>
    %c0_13 = arith.constant 0 : index
    %c0_14 = arith.constant 0 : index
    %26 = vector.load %arg3[%c0_13, %c0_14] : memref<1x16xf32, #tpu.memory_space<vmem>>, vector<1x16xf32>
    %27 = vector.broadcast %26 : vector<1x16xf32> to vector<2x16xf32>
    %28 = arith.mulf %24, %27 : vector<2x16xf32>
    %cst_15 = arith.constant dense<0.000000e+00> : vector<2xf32>
    %29 = vector.multi_reduction <add>, %28, %cst_15 [1] : vector<2x16xf32> to vector<2xf32>
    %30 = vector.shape_cast %29 : vector<2xf32> to vector<2x1xf32>
    %cst_16 = arith.constant 0.000000e+00 : f32
    %31 = vector.broadcast %cst_16 : f32 to vector<2x1xf32>
    %32 = arith.maximumf %30, %31 : vector<2x1xf32>
    %c0_17 = arith.constant 0 : index
    %c0_18 = arith.constant 0 : index
    %33 = vector.load %arg4[%c0_17, %c0_18] : memref<1x8xf32, #tpu.memory_space<vmem>>, vector<1x8xf32>
    %34 = vector.broadcast %32 : vector<2x1xf32> to vector<2x8xf32>
    %35 = vector.broadcast %33 : vector<1x8xf32> to vector<2x8xf32>
    %36 = arith.mulf %34, %35 : vector<2x8xf32>
    %37 = arith.addf %25, %36 : vector<2x8xf32>
    %38 = arith.negf %37 : vector<2x8xf32>
    %39 = math.exp %38 : vector<2x8xf32>
    %cst_19 = arith.constant 1.000000e+00 : f32
    %40 = vector.broadcast %cst_19 : f32 to vector<2x8xf32>
    %41 = arith.addf %40, %39 : vector<2x8xf32>
    %42 = arith.divf %40, %41 : vector<2x8xf32>
    %43 = arith.maximumf %1, %3 : vector<2x16x128xf32>
    %44 = vector.shape_cast %43 : vector<2x16x128xf32> to vector<32x128xf32>
    %c1_i32 = arith.constant 1 : i32
    %45 = tpu.dynamic_rotate %44 by %c1_i32 dim 1 : vector<32x128xf32>, i32 -> vector<32x128xf32>
    %46 = arith.maximumf %44, %45 : vector<32x128xf32>
    %c2_i32 = arith.constant 2 : i32
    %47 = tpu.dynamic_rotate %46 by %c2_i32 dim 1 : vector<32x128xf32>, i32 -> vector<32x128xf32>
    %48 = arith.maximumf %46, %47 : vector<32x128xf32>
    %c4_i32 = arith.constant 4 : i32
    %49 = tpu.dynamic_rotate %48 by %c4_i32 dim 1 : vector<32x128xf32>, i32 -> vector<32x128xf32>
    %50 = arith.maximumf %48, %49 : vector<32x128xf32>
    %cst_20 = arith.constant 0.000000e+00 : f32
    %51 = vector.broadcast %cst_20 : f32 to vector<2x3x128xf32>
    %c0_21 = arith.constant 0 : index
    %c0_22 = arith.constant 0 : index
    %c0_23 = arith.constant 0 : index
    %52 = vector.load %arg11[%c0_21, %c0_22, %c0_23] : memref<2x22x128xf32, #tpu.memory_space<vmem>>, vector<2x3x128xf32>
    tpu.vector_store %arg11[%c0_21, %c0_22, %c0_23], %51 {strides = array<i32>} : memref<2x22x128xf32, #tpu.memory_space<vmem>>, vector<2x3x128xf32>,
    %cst_24 = arith.constant 0.000000e+00 : f32
    %53 = vector.broadcast %cst_24 : f32 to vector<2x3x128xf32>
    %c0_25 = arith.constant 0 : index
    %c19 = arith.constant 19 : index
    %c0_26 = arith.constant 0 : index
    %54 = vector.load %arg11[%c0_25, %c19, %c0_26] : memref<2x22x128xf32, #tpu.memory_space<vmem>>, vector<2x3x128xf32>
    tpu.vector_store %arg11[%c0_25, %c19, %c0_26], %53 {strides = array<i32>} : memref<2x22x128xf32, #tpu.memory_space<vmem>>, vector<2x3x128xf32>,
    %55 = vector.shape_cast %50 : vector<32x128xf32> to vector<2x16x128xf32>
    %c0_27 = arith.constant 0 : index
    %c3 = arith.constant 3 : index
    %c0_28 = arith.constant 0 : index
    %56 = vector.load %arg11[%c0_27, %c3, %c0_28] : memref<2x22x128xf32, #tpu.memory_space<vmem>>, vector<2x16x128xf32>
    tpu.vector_store %arg11[%c0_27, %c3, %c0_28], %55 {strides = array<i32>} : memref<2x22x128xf32, #tpu.memory_space<vmem>>, vector<2x16x128xf32>,
    %cst_29 = arith.constant 0.000000e+00 : f32
    %57 = vector.broadcast %cst_29 : f32 to vector<32x128xf32>
    %c0_30 = arith.constant 0 : index
    %c0_31 = arith.constant 0 : index
    %c0_32 = arith.constant 0 : index
    %58 = vector.load %arg11[%c0_30, %c0_31, %c0_32] : memref<2x22x128xf32, #tpu.memory_space<vmem>>, vector<2x16x128xf32>
    %59 = vector.shape_cast %58 : vector<2x16x128xf32> to vector<32x128xf32>
    %60 = arith.truncf %59 : vector<32x128xf32> to vector<32x128xbf16>
    %c0_33 = arith.constant 0 : index
    %c0_34 = arith.constant 0 : index
    %c0_35 = arith.constant 0 : index
    %61 = vector.load %arg6[%c0_33, %c0_34, %c0_35] : memref<7x128x128xbf16, #tpu.memory_space<vmem>>, vector<1x128x128xbf16>
    %62 = vector.shape_cast %61 : vector<1x128x128xbf16> to vector<128x128xbf16>
    %cst_36 = arith.constant dense<0.000000e+00> : vector<32x128xf32>
    %63 = tpu.matmul %60, %62, %cst_36 {dimension_numbers = #tpu.dot_dimension_numbers<[1], [0], [0], [1], [0, 0, 1, 1], [], []>} : vector<32x128xbf16>, vector<128x128xbf16>, vector<32x128xf32> -> vector<32x128xf32>
    %64 = arith.addf %57, %63 : vector<32x128xf32>
    %c0_37 = arith.constant 0 : index
    %c1 = arith.constant 1 : index
    %c0_38 = arith.constant 0 : index
    %65 = vector.load %arg11[%c0_37, %c1, %c0_38] : memref<2x22x128xf32, #tpu.memory_space<vmem>>, vector<2x16x128xf32>
    %66 = vector.shape_cast %65 : vector<2x16x128xf32> to vector<32x128xf32>
    %67 = arith.truncf %66 : vector<32x128xf32> to vector<32x128xbf16>
    %c1_39 = arith.constant 1 : index
    %c0_40 = arith.constant 0 : index
    %c0_41 = arith.constant 0 : index
    %68 = vector.load %arg6[%c1_39, %c0_40, %c0_41] : memref<7x128x128xbf16, #tpu.memory_space<vmem>>, vector<1x128x128xbf16>
    %69 = vector.shape_cast %68 : vector<1x128x128xbf16> to vector<128x128xbf16>
    %cst_42 = arith.constant dense<0.000000e+00> : vector<32x128xf32>
    %70 = tpu.matmul %67, %69, %cst_42 {dimension_numbers = #tpu.dot_dimension_numbers<[1], [0], [0], [1], [0, 0, 1, 1], [], []>} : vector<32x128xbf16>, vector<128x128xbf16>, vector<32x128xf32> -> vector<32x128xf32>
    %71 = arith.addf %64, %70 : vector<32x128xf32>
    %c0_43 = arith.constant 0 : index
    %c2 = arith.constant 2 : index
    %c0_44 = arith.constant 0 : index
    %72 = vector.load %arg11[%c0_43, %c2, %c0_44] : memref<2x22x128xf32, #tpu.memory_space<vmem>>, vector<2x16x128xf32>
    %73 = vector.shape_cast %72 : vector<2x16x128xf32> to vector<32x128xf32>
    %74 = arith.truncf %73 : vector<32x128xf32> to vector<32x128xbf16>
    %c2_45 = arith.constant 2 : index
    %c0_46 = arith.constant 0 : index
    %c0_47 = arith.constant 0 : index
    %75 = vector.load %arg6[%c2_45, %c0_46, %c0_47] : memref<7x128x128xbf16, #tpu.memory_space<vmem>>, vector<1x128x128xbf16>
    %76 = vector.shape_cast %75 : vector<1x128x128xbf16> to vector<128x128xbf16>
    %cst_48 = arith.constant dense<0.000000e+00> : vector<32x128xf32>
    %77 = tpu.matmul %74, %76, %cst_48 {dimension_numbers = #tpu.dot_dimension_numbers<[1], [0], [0], [1], [0, 0, 1, 1], [], []>} : vector<32x128xbf16>, vector<128x128xbf16>, vector<32x128xf32> -> vector<32x128xf32>
    %78 = arith.addf %71, %77 : vector<32x128xf32>
    %c0_49 = arith.constant 0 : index
    %c3_50 = arith.constant 3 : index
    %c0_51 = arith.constant 0 : index
    %79 = vector.load %arg11[%c0_49, %c3_50, %c0_51] : memref<2x22x128xf32, #tpu.memory_space<vmem>>, vector<2x16x128xf32>
    %80 = vector.shape_cast %79 : vector<2x16x128xf32> to vector<32x128xf32>
    %81 = arith.truncf %80 : vector<32x128xf32> to vector<32x128xbf16>
    %c3_52 = arith.constant 3 : index
    %c0_53 = arith.constant 0 : index
    %c0_54 = arith.constant 0 : index
    %82 = vector.load %arg6[%c3_52, %c0_53, %c0_54] : memref<7x128x128xbf16, #tpu.memory_space<vmem>>, vector<1x128x128xbf16>
    %83 = vector.shape_cast %82 : vector<1x128x128xbf16> to vector<128x128xbf16>
    %cst_55 = arith.constant dense<0.000000e+00> : vector<32x128xf32>
    %84 = tpu.matmul %81, %83, %cst_55 {dimension_numbers = #tpu.dot_dimension_numbers<[1], [0], [0], [1], [0, 0, 1, 1], [], []>} : vector<32x128xbf16>, vector<128x128xbf16>, vector<32x128xf32> -> vector<32x128xf32>
    %85 = arith.addf %78, %84 : vector<32x128xf32>
    %c0_56 = arith.constant 0 : index
    %c4 = arith.constant 4 : index
    %c0_57 = arith.constant 0 : index
    %86 = vector.load %arg11[%c0_56, %c4, %c0_57] : memref<2x22x128xf32, #tpu.memory_space<vmem>>, vector<2x16x128xf32>
    %87 = vector.shape_cast %86 : vector<2x16x128xf32> to vector<32x128xf32>
    %88 = arith.truncf %87 : vector<32x128xf32> to vector<32x128xbf16>
    %c4_58 = arith.constant 4 : index
    %c0_59 = arith.constant 0 : index
    %c0_60 = arith.constant 0 : index
    %89 = vector.load %arg6[%c4_58, %c0_59, %c0_60] : memref<7x128x128xbf16, #tpu.memory_space<vmem>>, vector<1x128x128xbf16>
    %90 = vector.shape_cast %89 : vector<1x128x128xbf16> to vector<128x128xbf16>
    %cst_61 = arith.constant dense<0.000000e+00> : vector<32x128xf32>
    %91 = tpu.matmul %88, %90, %cst_61 {dimension_numbers = #tpu.dot_dimension_numbers<[1], [0], [0], [1], [0, 0, 1, 1], [], []>} : vector<32x128xbf16>, vector<128x128xbf16>, vector<32x128xf32> -> vector<32x128xf32>
    %92 = arith.addf %85, %91 : vector<32x128xf32>
    %c0_62 = arith.constant 0 : index
    %c5 = arith.constant 5 : index
    %c0_63 = arith.constant 0 : index
    %93 = vector.load %arg11[%c0_62, %c5, %c0_63] : memref<2x22x128xf32, #tpu.memory_space<vmem>>, vector<2x16x128xf32>
    %94 = vector.shape_cast %93 : vector<2x16x128xf32> to vector<32x128xf32>
    %95 = arith.truncf %94 : vector<32x128xf32> to vector<32x128xbf16>
    %c5_64 = arith.constant 5 : index
    %c0_65 = arith.constant 0 : index
    %c0_66 = arith.constant 0 : index
    %96 = vector.load %arg6[%c5_64, %c0_65, %c0_66] : memref<7x128x128xbf16, #tpu.memory_space<vmem>>, vector<1x128x128xbf16>
    %97 = vector.shape_cast %96 : vector<1x128x128xbf16> to vector<128x128xbf16>
    %cst_67 = arith.constant dense<0.000000e+00> : vector<32x128xf32>
    %98 = tpu.matmul %95, %97, %cst_67 {dimension_numbers = #tpu.dot_dimension_numbers<[1], [0], [0], [1], [0, 0, 1, 1], [], []>} : vector<32x128xbf16>, vector<128x128xbf16>, vector<32x128xf32> -> vector<32x128xf32>
    %99 = arith.addf %92, %98 : vector<32x128xf32>
    %c0_68 = arith.constant 0 : index
    %c6 = arith.constant 6 : index
    %c0_69 = arith.constant 0 : index
    %100 = vector.load %arg11[%c0_68, %c6, %c0_69] : memref<2x22x128xf32, #tpu.memory_space<vmem>>, vector<2x16x128xf32>
    %101 = vector.shape_cast %100 : vector<2x16x128xf32> to vector<32x128xf32>
    %102 = arith.truncf %101 : vector<32x128xf32> to vector<32x128xbf16>
    %c6_70 = arith.constant 6 : index
    %c0_71 = arith.constant 0 : index
    %c0_72 = arith.constant 0 : index
    %103 = vector.load %arg6[%c6_70, %c0_71, %c0_72] : memref<7x128x128xbf16, #tpu.memory_space<vmem>>, vector<1x128x128xbf16>
    %104 = vector.shape_cast %103 : vector<1x128x128xbf16> to vector<128x128xbf16>
    %cst_73 = arith.constant dense<0.000000e+00> : vector<32x128xf32>
    %105 = tpu.matmul %102, %104, %cst_73 {dimension_numbers = #tpu.dot_dimension_numbers<[1], [0], [0], [1], [0, 0, 1, 1], [], []>} : vector<32x128xbf16>, vector<128x128xbf16>, vector<32x128xf32> -> vector<32x128xf32>
    %106 = arith.addf %99, %105 : vector<32x128xf32>
    %107 = arith.negf %106 : vector<32x128xf32>
    %108 = math.exp %107 : vector<32x128xf32>
    %cst_74 = arith.constant 1.000000e+00 : f32
    %109 = vector.broadcast %cst_74 : f32 to vector<32x128xf32>
    %110 = arith.addf %109, %108 : vector<32x128xf32>
    %111 = arith.divf %109, %110 : vector<32x128xf32>
    %c0_75 = arith.constant 0 : index
    %c0_76 = arith.constant 0 : index
    %112 = vector.load %arg5[%c0_75, %c0_76] : memref<8x128xf32, #tpu.memory_space<vmem>>, vector<8x128xf32>
    %cst_77 = arith.constant dense<0.000000e+00> : vector<2x128xf32>
    %113 = tpu.matmul %42, %112, %cst_77 {dimension_numbers = #tpu.dot_dimension_numbers<[1], [0], [0], [1], [0, 0, 1, 1], [], []>} : vector<2x8xf32>, vector<8x128xf32>, vector<2x128xf32> -> vector<2x128xf32>
    %114 = vector.shape_cast %113 : vector<2x128xf32> to vector<2x1x128xf32>
    %115 = vector.broadcast %114 : vector<2x1x128xf32> to vector<2x16x128xf32>
    %116 = arith.mulf %3, %115 : vector<2x16x128xf32>
    %cst_78 = arith.constant 0.000000e+00 : f32
    %117 = vector.broadcast %cst_78 : f32 to vector<2x1x256xf32>
    %c0_79 = arith.constant 0 : index
    %c0_80 = arith.constant 0 : index
    %c0_81 = arith.constant 0 : index
    %118 = vector.load %arg10[%c0_79, %c0_80, %c0_81] : memref<2x18x256xf32, #tpu.memory_space<vmem>>, vector<2x1x256xf32>
    tpu.vector_store %arg10[%c0_79, %c0_80, %c0_81], %117 {strides = array<i32>} : memref<2x18x256xf32, #tpu.memory_space<vmem>>, vector<2x1x256xf32>,
    %cst_82 = arith.constant 0.000000e+00 : f32
    %119 = vector.broadcast %cst_82 : f32 to vector<2x1x256xf32>
    %c0_83 = arith.constant 0 : index
    %c17 = arith.constant 17 : index
    %c0_84 = arith.constant 0 : index
    %120 = vector.load %arg10[%c0_83, %c17, %c0_84] : memref<2x18x256xf32, #tpu.memory_space<vmem>>, vector<2x1x256xf32>
    tpu.vector_store %arg10[%c0_83, %c17, %c0_84], %119 {strides = array<i32>} : memref<2x18x256xf32, #tpu.memory_space<vmem>>, vector<2x1x256xf32>,
    %c0_85 = arith.constant 0 : index
    %c1_86 = arith.constant 1 : index
    %c0_87 = arith.constant 0 : index
    %121 = vector.load %arg10[%c0_85, %c1_86, %c0_87] : memref<2x18x256xf32, #tpu.memory_space<vmem>>, vector<2x16x128xf32>
    tpu.vector_store %arg10[%c0_85, %c1_86, %c0_87], %1 {strides = array<i32>} : memref<2x18x256xf32, #tpu.memory_space<vmem>>, vector<2x16x128xf32>,
    %c0_88 = arith.constant 0 : index
    %c1_89 = arith.constant 1 : index
    %c128 = arith.constant 128 : index
    %122 = vector.load %arg10[%c0_88, %c1_89, %c128] : memref<2x18x256xf32, #tpu.memory_space<vmem>>, vector<2x16x128xf32>
    tpu.vector_store %arg10[%c0_88, %c1_89, %c128], %116 {strides = array<i32>} : memref<2x18x256xf32, #tpu.memory_space<vmem>>, vector<2x16x128xf32>,
    %c0_90 = arith.constant 0 : index
    %c0_91 = arith.constant 0 : index
    %123 = vector.load %arg8[%c0_90, %c0_91] : memref<1x128xf32, #tpu.memory_space<vmem>>, vector<1x128xf32>
    %124 = vector.shape_cast %123 : vector<1x128xf32> to vector<1x128xf32>
    %125 = vector.broadcast %124 : vector<1x128xf32> to vector<32x128xf32>
    %c0_92 = arith.constant 0 : index
    %c0_93 = arith.constant 0 : index
    %c0_94 = arith.constant 0 : index
    %126 = vector.load %arg10[%c0_92, %c0_93, %c0_94] : memref<2x18x256xf32, #tpu.memory_space<vmem>>, vector<2x16x256xf32>
    %127 = vector.shape_cast %126 : vector<2x16x256xf32> to vector<32x256xf32>
    %128 = arith.truncf %127 : vector<32x256xf32> to vector<32x256xbf16>
    %c0_95 = arith.constant 0 : index
    %c0_96 = arith.constant 0 : index
    %c0_97 = arith.constant 0 : index
    %129 = vector.load %arg7[%c0_95, %c0_96, %c0_97] : memref<3x256x128xbf16, #tpu.memory_space<vmem>>, vector<1x256x128xbf16>
    %130 = vector.shape_cast %129 : vector<1x256x128xbf16> to vector<256x128xbf16>
    %cst_98 = arith.constant dense<0.000000e+00> : vector<32x128xf32>
    %131 = tpu.matmul %128, %130, %cst_98 {dimension_numbers = #tpu.dot_dimension_numbers<[1], [0], [0], [1], [0, 0, 1, 1], [], []>} : vector<32x256xbf16>, vector<256x128xbf16>, vector<32x128xf32> -> vector<32x128xf32>
    %132 = arith.addf %125, %131 : vector<32x128xf32>
    %c0_99 = arith.constant 0 : index
    %c1_100 = arith.constant 1 : index
    %c0_101 = arith.constant 0 : index
    %133 = vector.load %arg10[%c0_99, %c1_100, %c0_101] : memref<2x18x256xf32, #tpu.memory_space<vmem>>, vector<2x16x256xf32>
    %134 = vector.shape_cast %133 : vector<2x16x256xf32> to vector<32x256xf32>
    %135 = arith.truncf %134 : vector<32x256xf32> to vector<32x256xbf16>
    %c1_102 = arith.constant 1 : index
    %c0_103 = arith.constant 0 : index
    %c0_104 = arith.constant 0 : index
    %136 = vector.load %arg7[%c1_102, %c0_103, %c0_104] : memref<3x256x128xbf16, #tpu.memory_space<vmem>>, vector<1x256x128xbf16>
    %137 = vector.shape_cast %136 : vector<1x256x128xbf16> to vector<256x128xbf16>
    %cst_105 = arith.constant dense<0.000000e+00> : vector<32x128xf32>
    %138 = tpu.matmul %135, %137, %cst_105 {dimension_numbers = #tpu.dot_dimension_numbers<[1], [0], [0], [1], [0, 0, 1, 1], [], []>} : vector<32x256xbf16>, vector<256x128xbf16>, vector<32x128xf32> -> vector<32x128xf32>
    %139 = arith.addf %132, %138 : vector<32x128xf32>
    %c0_106 = arith.constant 0 : index
    %c2_107 = arith.constant 2 : index
    %c0_108 = arith.constant 0 : index
    %140 = vector.load %arg10[%c0_106, %c2_107, %c0_108] : memref<2x18x256xf32, #tpu.memory_space<vmem>>, vector<2x16x256xf32>
    %141 = vector.shape_cast %140 : vector<2x16x256xf32> to vector<32x256xf32>
    %142 = arith.truncf %141 : vector<32x256xf32> to vector<32x256xbf16>
    %c2_109 = arith.constant 2 : index
    %c0_110 = arith.constant 0 : index
    %c0_111 = arith.constant 0 : index
    %143 = vector.load %arg7[%c2_109, %c0_110, %c0_111] : memref<3x256x128xbf16, #tpu.memory_space<vmem>>, vector<1x256x128xbf16>
    %144 = vector.shape_cast %143 : vector<1x256x128xbf16> to vector<256x128xbf16>
    %cst_112 = arith.constant dense<0.000000e+00> : vector<32x128xf32>
    %145 = tpu.matmul %142, %144, %cst_112 {dimension_numbers = #tpu.dot_dimension_numbers<[1], [0], [0], [1], [0, 0, 1, 1], [], []>} : vector<32x256xbf16>, vector<256x128xbf16>, vector<32x128xf32> -> vector<32x128xf32>
    %146 = arith.addf %139, %145 : vector<32x128xf32>
    %147 = math.tanh %146 : vector<32x128xf32>
    %148 = vector.shape_cast %3 : vector<2x16x128xf32> to vector<32x128xf32>
    %149 = arith.subf %148, %147 : vector<32x128xf32>
    %150 = arith.mulf %111, %149 : vector<32x128xf32>
    %151 = arith.addf %147, %150 : vector<32x128xf32>
    %152 = vector.shape_cast %151 : vector<32x128xf32> to vector<2x16x128xf32>
    %c0_113 = arith.constant 0 : index
    %c0_114 = arith.constant 0 : index
    %c0_115 = arith.constant 0 : index
    %c0_116 = arith.constant 0 : index
    %153 = vector.load %arg9[%c0_113, %c0_114, %c0_115, %c0_116] : memref<1x2x16x128xf32, #tpu.memory_space<vmem>>, vector<1x2x16x128xf32>
    %154 = vector.shape_cast %153 : vector<1x2x16x128xf32> to vector<2x16x128xf32>
    %155 = vector.shape_cast %152 : vector<2x16x128xf32> to vector<1x2x16x128xf32>
    tpu.vector_store %arg9[%c0_113, %c0_114, %c0_115, %c0_116], %155 {strides = array<i32>} : memref<1x2x16x128xf32, #tpu.memory_space<vmem>>, vector<1x2x16x128xf32>,
    return
  }
  func.func @transform_0(%arg0: i32) -> (i32, i32, i32, i32) {
    %c0_i32 = arith.constant 0 : i32
    %c0_i32_0 = arith.constant 0 : i32
    %c0_i32_1 = arith.constant 0 : i32
    %c0_i32_2 = arith.constant 0 : i32
    return %arg0, %c0_i32, %c0_i32_0, %c0_i32_1 : i32, i32, i32, i32
  }
  func.func @transform_1(%arg0: i32) -> (i32, i32, i32, i32) {
    %c0_i32 = arith.constant 0 : i32
    %c0_i32_0 = arith.constant 0 : i32
    %c0_i32_1 = arith.constant 0 : i32
    %c0_i32_2 = arith.constant 0 : i32
    return %arg0, %c0_i32, %c0_i32_0, %c0_i32_1 : i32, i32, i32, i32
  }
  func.func @transform_2(%arg0: i32) -> (i32, i32) {
    %c0_i32 = arith.constant 0 : i32
    %c0_i32_0 = arith.constant 0 : i32
    %c0_i32_1 = arith.constant 0 : i32
    return %c0_i32, %c0_i32_0 : i32, i32
  }
  func.func @transform_3(%arg0: i32) -> (i32, i32) {
    %c0_i32 = arith.constant 0 : i32
    %c0_i32_0 = arith.constant 0 : i32
    %c0_i32_1 = arith.constant 0 : i32
    return %c0_i32, %c0_i32_0 : i32, i32
  }
  func.func @transform_4(%arg0: i32) -> (i32, i32) {
    %c0_i32 = arith.constant 0 : i32
    %c0_i32_0 = arith.constant 0 : i32
    %c0_i32_1 = arith.constant 0 : i32
    return %c0_i32, %c0_i32_0 : i32, i32
  }
  func.func @transform_5(%arg0: i32) -> (i32, i32, i32) {
    %c0_i32 = arith.constant 0 : i32
    %c0_i32_0 = arith.constant 0 : i32
    %c0_i32_1 = arith.constant 0 : i32
    %c0_i32_2 = arith.constant 0 : i32
    return %c0_i32, %c0_i32_0, %c0_i32_1 : i32, i32, i32
  }
  func.func @transform_6(%arg0: i32) -> (i32, i32, i32) {
    %c0_i32 = arith.constant 0 : i32
    %c0_i32_0 = arith.constant 0 : i32
    %c0_i32_1 = arith.constant 0 : i32
    %c0_i32_2 = arith.constant 0 : i32
    return %c0_i32, %c0_i32_0, %c0_i32_1 : i32, i32, i32
  }
  func.func @transform_7(%arg0: i32) -> (i32, i32) {
    %c0_i32 = arith.constant 0 : i32
    %c0_i32_0 = arith.constant 0 : i32
    %c0_i32_1 = arith.constant 0 : i32
    return %c0_i32, %c0_i32_0 : i32, i32
  }
  func.func @transform_8(%arg0: i32) -> (i32, i32, i32, i32) {
    %c0_i32 = arith.constant 0 : i32
    %c0_i32_0 = arith.constant 0 : i32
    %c0_i32_1 = arith.constant 0 : i32
    %c0_i32_2 = arith.constant 0 : i32
    return %arg0, %c0_i32, %c0_i32_0, %c0_i32_1 : i32, i32, i32, i32
  }
}

</mosaic_0001>

<llo_original>
// kernel: conv2d_gru_cell.1
$region0: #{conv2d_gru_cell.1}
  #allocation0 [shape = 'u32[]', space=smem, size = 0x4, offset = 0x4, fixed_abs, tag = 'smem constant byte address 0x4 - core index']
  #allocation1 [shape = 'u32[144,128]{1,0:T(1,128)}', space=vmem, size = 0x12000, scoped, tag = 'internal scratch']
  #allocation2 [shape = 'f32[2,18,256]{2,1,0:T(8,128)}', space=vmem, size = 0xc000, scoped, tag = 'scratch operand']
  #allocation3 [shape = 'f32[2,22,128]{2,1,0:T(8,128)}', space=vmem, size = 0x6000, scoped, tag = 'scratch operand']
  %s0 = inlined_call_operand.vmem [shape: f32[2,2,16,128], index: 0, kind: input, shape index: {}]
  %s1 = inlined_call_operand.vmem [shape: f32[2,2,16,128], index: 1, kind: input, shape index: {}]
  %s2 = inlined_call_operand.vmem [shape: f32[1,16], index: 2, kind: input, shape index: {}]
  %s3 = inlined_call_operand.vmem [shape: f32[1,8], index: 3, kind: input, shape index: {}]
  %s4 = inlined_call_operand.vmem [shape: f32[8,128], index: 4, kind: input, shape index: {}]
  %s5 = inlined_call_operand.vmem [shape: bf16[7,128,128], index: 5, kind: input, shape index: {}]
  %s6 = inlined_call_operand.vmem [shape: bf16[3,256,128], index: 6, kind: input, shape index: {}]
  %s7 = inlined_call_operand.vmem [shape: f32[1,128], index: 7, kind: input, shape index: {}]
  %s8 = inlined_call_operand.vmem [shape: f32[2,2,16,128], index: 8, kind: output, shape index: {}]
  %s9 = sld [smem:[#allocation0]]
  $region65: #{conv2d_gru_cell.1} parent=0
    _
  %s11 = ssub.s32 1, %s9
  %s12 = scalar_select 0, %s11, %s9
  loop: start=0, step=1, limit=4
  $region2: #{conv2d_gru_cell.1} parent=0 // loop_pre_header
    _
  $region3: #{conv2d_gru_cell.1} parent=0 // loop_header
    %s14 = sphi 0, %s18
    %p15 = scmp.ge.s32.totalorder %s14, 4
    %s24 = sphi 0, %s26
    %s27 = sphi 0, %s24
    %s28 = sphi 0, %s27
    %s44 = sphi 0, %s28
    %s50 = sphi 0, %s52
    %s53 = sphi 0, %s50
    %s54 = sphi 0, %s53
    %s70 = sphi 0, %s54
    %s74 = sphi 0, %s74
    %s76 = sphi 0, %s74
    %s77 = sphi 0, %s76
    %s91 = sphi 0, %s77
    %s95 = sphi 0, %s95
    %s97 = sphi 0, %s95
    %s98 = sphi 0, %s97
    %s112 = sphi 0, %s98
    %s116 = sphi 0, %s116
    %s118 = sphi 0, %s116
    %s119 = sphi 0, %s118
    %s133 = sphi 0, %s119
    %s137 = sphi 0, %s137
    %s139 = sphi 0, %s137
    %s140 = sphi 0, %s139
    %s154 = sphi 0, %s140
    %s158 = sphi 0, %s158
    %s160 = sphi 0, %s158
    %s161 = sphi 0, %s160
    %s175 = sphi 0, %s161
    %s179 = sphi 0, %s179
    %s181 = sphi 0, %s179
    %s182 = sphi 0, %s181
    %s196 = sphi 0, %s182
    %s202 = sphi 0, %s204
    %s205 = sphi 0, %s202
    %s206 = sphi 0, %s205
    %s222 = sphi 0, %s206
  $region4: #{conv2d_gru_cell.1} parent=0 // loop_header_branch
    %17 = sbr.rel (%p15) target = $region8
  $region5: #{conv2d_gru_cell.1} parent=0 // loop_body
    %s19 = ssub.s32 %s14, 1
    %s20 = ssub.s32 %s14, 2
    %s21 = sadd.s32 %s14, 1
    %s22 = ssub.s32 %s14, %s21
    %p23 = scmp.eq.s32.totalorder %s22, 0
    %s25 = sadd.s32 %s24, 1
    %s26 = scalar_select %p23, %s24, %s25
    %p29 = pneg %p23
    %p30 = scmp.eq.s32.totalorder %s14, 1
    %p31 = por %p29, %p30
    %p32 = scmp.ne.s32.totalorder %s24, %s27
    %p33 = scmp.eq.s32.totalorder %s14, 0
    %p34 = por %p32, %p33
    %p35 = scmp.ne.s32.totalorder %s24, %s27
    %p36 = scmp.eq.s32.totalorder %s19, 1
    %p37 = por %p35, %p36
    %p38 = scmp.ne.s32.totalorder %s27, %s28
    %p39 = scmp.eq.s32.totalorder %s19, 0
    %p40 = por %p38, %p39
    %p41 = scmp.ne.s32.totalorder %s27, %s28
    %p42 = scmp.eq.s32.totalorder %s20, 1
    %p43 = por %p41, %p42
    %p45 = scmp.ne.s32.totalorder %s28, %s44
    %p46 = scmp.eq.s32.totalorder %s20, 0
    %p47 = por %p45, %p46
    %s48 = ssub.s32 %s14, %s21
    %p49 = scmp.eq.s32.totalorder %s48, 0
    %s51 = sadd.s32 %s50, 1
    %s52 = scalar_select %p49, %s50, %s51
    %p55 = pneg %p49
    %p56 = scmp.eq.s32.totalorder %s14, 1
    %p57 = por %p55, %p56
    %p58 = scmp.ne.s32.totalorder %s50, %s53
    %p59 = scmp.eq.s32.totalorder %s14, 0
    %p60 = por %p58, %p59
    %p61 = scmp.ne.s32.totalorder %s50, %s53
    %p62 = scmp.eq.s32.totalorder %s19, 1
    %p63 = por %p61, %p62
    %p64 = scmp.ne.s32.totalorder %s53, %s54
    %p65 = scmp.eq.s32.totalorder %s19, 0
    %p66 = por %p64, %p65
    %p67 = scmp.ne.s32.totalorder %s53, %s54
    %p68 = scmp.eq.s32.totalorder %s20, 1
    %p69 = por %p67, %p68
    %p71 = scmp.ne.s32.totalorder %s54, %s70
    %p72 = scmp.eq.s32.totalorder %s20, 0
    %p73 = por %p71, %p72
    %s75 = sadd.s32 %s74, 1
    %p78 = scmp.eq.s32.totalorder %s14, 1
    %p79 = scmp.ne.s32.totalorder %s74, %s76
    %p80 = scmp.eq.s32.totalorder %s14, 0
    %p81 = por %p79, %p80
    %p82 = scmp.ne.s32.totalorder %s74, %s76
    %p83 = scmp.eq.s32.totalorder %s19, 1
    %p84 = por %p82, %p83
    %p85 = scmp.ne.s32.totalorder %s76, %s77
    %p86 = scmp.eq.s32.totalorder %s19, 0
    %p87 = por %p85, %p86
    %p88 = scmp.ne.s32.totalorder %s76, %s77
    %p89 = scmp.eq.s32.totalorder %s20, 1
    %p90 = por %p88, %p89
    %p92 = scmp.ne.s32.totalorder %s77, %s91
    %p93 = scmp.eq.s32.totalorder %s20, 0
    %p94 = por %p92, %p93
    %s96 = sadd.s32 %s95, 1
    %p99 = scmp.eq.s32.totalorder %s14, 1
    %p100 = scmp.ne.s32.totalorder %s95, %s97
    %p101 = scmp.eq.s32.totalorder %s14, 0
    %p102 = por %p100, %p101
    %p103 = scmp.ne.s32.totalorder %s95, %s97
    %p104 = scmp.eq.s32.totalorder %s19, 1
    %p105 = por %p103, %p104
    %p106 = scmp.ne.s32.totalorder %s97, %s98
    %p107 = scmp.eq.s32.totalorder %s19, 0
    %p108 = por %p106, %p107
    %p109 = scmp.ne.s32.totalorder %s97, %s98
    %p110 = scmp.eq.s32.totalorder %s20, 1
    %p111 = por %p109, %p110
    %p113 = scmp.ne.s32.totalorder %s98, %s112
    %p114 = scmp.eq.s32.totalorder %s20, 0
    %p115 = por %p113, %p114
    %s117 = sadd.s32 %s116, 1
    %p120 = scmp.eq.s32.totalorder %s14, 1
    %p121 = scmp.ne.s32.totalorder %s116, %s118
    %p122 = scmp.eq.s32.totalorder %s14, 0
    %p123 = por %p121, %p122
    %p124 = scmp.ne.s32.totalorder %s116, %s118
    %p125 = scmp.eq.s32.totalorder %s19, 1
    %p126 = por %p124, %p125
    %p127 = scmp.ne.s32.totalorder %s118, %s119
    %p128 = scmp.eq.s32.totalorder %s19, 0
    %p129 = por %p127, %p128
    %p130 = scmp.ne.s32.totalorder %s118, %s119
    %p131 = scmp.eq.s32.totalorder %s20, 1
    %p132 = por %p130, %p131
    %p134 = scmp.ne.s32.totalorder %s119, %s133
    %p135 = scmp.eq.s32.totalorder %s20, 0
    %p136 = por %p134, %p135
    %s138 = sadd.s32 %s137, 1
    %p141 = scmp.eq.s32.totalorder %s14, 1
    %p142 = scmp.ne.s32.totalorder %s137, %s139
    %p143 = scmp.eq.s32.totalorder %s14, 0
    %p144 = por %p142, %p143
    %p145 = scmp.ne.s32.totalorder %s137, %s139
    %p146 = scmp.eq.s32.totalorder %s19, 1
    %p147 = por %p145, %p146
    %p148 = scmp.ne.s32.totalorder %s139, %s140
    %p149 = scmp.eq.s32.totalorder %s19, 0
    %p150 = por %p148, %p149
    %p151 = scmp.ne.s32.totalorder %s139, %s140
    %p152 = scmp.eq.s32.totalorder %s20, 1
    %p153 = por %p151, %p152
    %p155 = scmp.ne.s32.totalorder %s140, %s154
    %p156 = scmp.eq.s32.totalorder %s20, 0
    %p157 = por %p155, %p156
    %s159 = sadd.s32 %s158, 1
    %p162 = scmp.eq.s32.totalorder %s14, 1
    %p163 = scmp.ne.s32.totalorder %s158, %s160
    %p164 = scmp.eq.s32.totalorder %s14, 0
    %p165 = por %p163, %p164
    %p166 = scmp.ne.s32.totalorder %s158, %s160
    %p167 = scmp.eq.s32.totalorder %s19, 1
    %p168 = por %p166, %p167
    %p169 = scmp.ne.s32.totalorder %s160, %s161
    %p170 = scmp.eq.s32.totalorder %s19, 0
    %p171 = por %p169, %p170
    %p172 = scmp.ne.s32.totalorder %s160, %s161
    %p173 = scmp.eq.s32.totalorder %s20, 1
    %p174 = por %p172, %p173
    %p176 = scmp.ne.s32.totalorder %s161, %s175
    %p177 = scmp.eq.s32.totalorder %s20, 0
    %p178 = por %p176, %p177
    %s180 = sadd.s32 %s179, 1
    %p183 = scmp.eq.s32.totalorder %s14, 1
    %p184 = scmp.ne.s32.totalorder %s179, %s181
    %p185 = scmp.eq.s32.totalorder %s14, 0
    %p186 = por %p184, %p185
    %p187 = scmp.ne.s32.totalorder %s179, %s181
    %p188 = scmp.eq.s32.totalorder %s19, 1
    %p189 = por %p187, %p188
    %p190 = scmp.ne.s32.totalorder %s181, %s182
    %p191 = scmp.eq.s32.totalorder %s19, 0
    %p192 = por %p190, %p191
    %p193 = scmp.ne.s32.totalorder %s181, %s182
    %p194 = scmp.eq.s32.totalorder %s20, 1
    %p195 = por %p193, %p194
    %p197 = scmp.ne.s32.totalorder %s182, %s196
    %p198 = scmp.eq.s32.totalorder %s20, 0
    %p199 = por %p197, %p198
    %s200 = ssub.s32 %s14, %s21
    %p201 = scmp.eq.s32.totalorder %s200, 0
    %s203 = sadd.s32 %s202, 1
    %s204 = scalar_select %p201, %s202, %s203
    %p207 = pneg %p201
    %p208 = scmp.eq.s32.totalorder %s14, 1
    %p209 = por %p207, %p208
    %p210 = scmp.ne.s32.totalorder %s202, %s205
    %p211 = scmp.eq.s32.totalorder %s14, 0
    %p212 = por %p210, %p211
    %p213 = scmp.ne.s32.totalorder %s202, %s205
    %p214 = scmp.eq.s32.totalorder %s19, 1
    %p215 = por %p213, %p214
    %p216 = scmp.ne.s32.totalorder %s205, %s206
    %p217 = scmp.eq.s32.totalorder %s19, 0
    %p218 = por %p216, %p217
    %p219 = scmp.ne.s32.totalorder %s205, %s206
    %p220 = scmp.eq.s32.totalorder %s20, 1
    %p221 = por %p219, %p220
    %p223 = scmp.ne.s32.totalorder %s206, %s222
    %p224 = scmp.eq.s32.totalorder %s20, 0
    %p225 = por %p223, %p224
    %p226 = scmp.le.s32.totalorder 1, %s14
    %p227 = scmp.lt.s32.totalorder %s14, 3
    %p228 = pnand %p226, %p227
    %p229 = pneg %p228
    // Predicated region
    $region9: #{conv2d_gru_cell.1} parent=5 // pred_check
      _
    $region10: #{conv2d_gru_cell.1} parent=5 // pred_check_branch
      %231 = sbr.rel (%p228) target = $region12
    $region11: #{conv2d_gru_cell.1} parent=5 // pred_region
      %s232 = ssub.s32 %s14, 1
      // Predicated region
      $region13: #{conv2d_gru_cell.1} parent=11 // pred_check
        %p233 = pneg %p87
      $region14: #{conv2d_gru_cell.1} parent=11 // pred_check_branch
        %235 = sbr.rel (%p233) target = $region16
      $region15: #{conv2d_gru_cell.1} parent=11 // pred_region
        _
      $region16: #{conv2d_gru_cell.1} parent=11 // pred_fallthru
        _
      // Predicated region
      $region17: #{conv2d_gru_cell.1} parent=11 // pred_check
        %p236 = pneg %p108
      $region18: #{conv2d_gru_cell.1} parent=11 // pred_check_branch
        %238 = sbr.rel (%p236) target = $region20
      $region19: #{conv2d_gru_cell.1} parent=11 // pred_region
        _
      $region20: #{conv2d_gru_cell.1} parent=11 // pred_fallthru
        _
      // Predicated region
      $region21: #{conv2d_gru_cell.1} parent=11 // pred_check
        %p239 = pneg %p129
      $region22: #{conv2d_gru_cell.1} parent=11 // pred_check_branch
        %241 = sbr.rel (%p239) target = $region24
      $region23: #{conv2d_gru_cell.1} parent=11 // pred_region
        _
      $region24: #{conv2d_gru_cell.1} parent=11 // pred_fallthru
        _
      // Predicated region
      $region25: #{conv2d_gru_cell.1} parent=11 // pred_check
        %p242 = pneg %p150
      $region26: #{conv2d_gru_cell.1} parent=11 // pred_check_branch
        %244 = sbr.rel (%p242) target = $region28
      $region27: #{conv2d_gru_cell.1} parent=11 // pred_region
        _
      $region28: #{conv2d_gru_cell.1} parent=11 // pred_fallthru
        _
      // Predicated region
      $region29: #{conv2d_gru_cell.1} parent=11 // pred_check
        %p245 = pneg %p171
      $region30: #{conv2d_gru_cell.1} parent=11 // pred_check_branch
        %247 = sbr.rel (%p245) target = $region32
      $region31: #{conv2d_gru_cell.1} parent=11 // pred_region
        _
      $region32: #{conv2d_gru_cell.1} parent=11 // pred_fallthru
        _
      // Predicated region
      $region33: #{conv2d_gru_cell.1} parent=11 // pred_check
        %p248 = pneg %p192
      $region34: #{conv2d_gru_cell.1} parent=11 // pred_check_branch
        %250 = sbr.rel (%p248) target = $region36
      $region35: #{conv2d_gru_cell.1} parent=11 // pred_region
        _
      $region36: #{conv2d_gru_cell.1} parent=11 // pred_fallthru
        _
    $region12: #{conv2d_gru_cell.1} parent=5 // pred_fallthru
      _
    %p251 = scmp.lt.s32.totalorder %s14, 2
    // Predicated region
    $region37: #{conv2d_gru_cell.1} parent=5 // pred_check
      %p252 = pneg %p251
    $region38: #{conv2d_gru_cell.1} parent=5 // pred_check_branch
      %254 = sbr.rel (%p252) target = $region40
    $region39: #{conv2d_gru_cell.1} parent=5 // pred_region
      // Predicated region
      $region41: #{conv2d_gru_cell.1} parent=39 // pred_check
        %p255 = pneg %p34
      $region42: #{conv2d_gru_cell.1} parent=39 // pred_check_branch
        %257 = sbr.rel (%p255) target = $region44
      $region43: #{conv2d_gru_cell.1} parent=39 // pred_region
        %p258 = scmp.lt.s32.totalorder %s14, 1
        %s259 = scalar_select %p258, %s14, 1
        %s260 = smul.addr %s259, 4
        %s261 = smul.addr %s260, 8
        %s262 = scalar_lea.vmem %s0, %s261
      $region44: #{conv2d_gru_cell.1} parent=39 // pred_fallthru
        _
      // Predicated region
      $region45: #{conv2d_gru_cell.1} parent=39 // pred_check
        %p263 = pneg %p60
      $region46: #{conv2d_gru_cell.1} parent=39 // pred_check_branch
        %265 = sbr.rel (%p263) target = $region48
      $region47: #{conv2d_gru_cell.1} parent=39 // pred_region
        %p266 = scmp.lt.s32.totalorder %s14, 1
        %s267 = scalar_select %p266, %s14, 1
        %s268 = smul.addr %s267, 4
        %s269 = smul.addr %s268, 8
        %s270 = scalar_lea.vmem %s1, %s269
      $region48: #{conv2d_gru_cell.1} parent=39 // pred_fallthru
        _
    $region40: #{conv2d_gru_cell.1} parent=5 // pred_fallthru
      _
    %p271 = scmp.le.s32.totalorder 1, %s14
    %p272 = scmp.lt.s32.totalorder %s14, 3
    %p273 = pnand %p271, %p272
    %p274 = pneg %p273
    // Predicated region
    $region49: #{conv2d_gru_cell.1} parent=5 // pred_check
      _
    $region50: #{conv2d_gru_cell.1} parent=5 // pred_check_branch
      %276 = sbr.rel (%p273) target = $region52
    $region51: #{conv2d_gru_cell.1} parent=5 // pred_region
      %s277 = ssub.s32 %s14, 1
      %p278 = scmp.lt.s32.totalorder %s19, 1
      %s279 = scalar_select %p278, %s19, 1
      %s280 = smul.addr %s279, 4
      %s281 = smul.addr %s280, 8
      %s282 = scalar_lea.vmem %s0, %s281
      %p283 = pneg %p40
      %p284 = pneg %p37
      %p285 = scmp.lt.s32.totalorder %s19, 1
      %s286 = scalar_select %p285, %s19, 1
      %s287 = smul.addr %s286, 4
      %s288 = smul.addr %s287, 8
      %s289 = scalar_lea.vmem %s1, %s288
      %p290 = pneg %p66
      %p291 = pneg %p63
      %p292 = pneg %p87
      %p293 = pneg %p84
      %p294 = pneg %p108
      %p295 = pneg %p105
      %p296 = pneg %p129
      %p297 = pneg %p126
      %p298 = pneg %p150
      %p299 = pneg %p147
      %p300 = pneg %p171
      %p301 = pneg %p168
      %p302 = pneg %p192
      %p303 = pneg %p189
      %p304 = pneg %p218
      %p305 = pneg %p215
      %p306 = scmp.lt.s32.totalorder %s19, 1
      %s307 = scalar_select %p306, %s19, 1
      %s308 = smul.addr %s307, 4
      %s309 = smul.addr %s308, 8
      %s310 = scalar_lea.vmem %s8, %s309
      %p311 = scmp.lt.s32.totalorder %s19, 1
      %s312 = scalar_select %p311, %s19, 1
      %s313 = smul.addr %s312, 4
      %s314 = smul.addr %s313, 8
      %s315 = scalar_lea.vmem %s0, %s314
      %p316 = scmp.lt.s32.totalorder %s19, 1
      %s317 = scalar_select %p316, %s19, 1
      %s318 = smul.addr %s317, 4
      %s319 = smul.addr %s318, 8
      %s320 = scalar_lea.vmem %s1, %s319
      %p321 = scmp.lt.s32.totalorder %s19, 1
      %s322 = scalar_select %p321, %s19, 1
      %s323 = smul.addr %s322, 4
      %s324 = smul.addr %s323, 8
      %s325 = scalar_lea.vmem %s8, %s324
      %v327 = vld [vmem:[%s315] sm:$0xff]
      %v328 = vld [vmem:[%s315 + $0x8] sm:$0xff]
      %v329 = vld [vmem:[%s315 + $0x10] sm:$0xff]
      %v330 = vld [vmem:[%s315 + $0x18] sm:$0xff]
      %v331 = vld [vmem:[%s320] sm:$0xff]
      %v332 = vld [vmem:[%s320 + $0x8] sm:$0xff]
      %v333 = vld [vmem:[%s320 + $0x10] sm:$0xff]
      %v334 = vld [vmem:[%s320 + $0x18] sm:$0xff]
      %v335 = vmax.f32 %v327, %v328
      %v336 = vrot.slane %v335, 4
      %v337 = vmax.f32 %v335, %v336
      %v338 = vrot.slane %v337, 2
      %v339 = vmax.f32 %v337, %v338
      %v340 = vrot.slane %v339, 1
      %v341 = vmax.f32 %v339, %v340
      %v342 = vmax.f32 %v329, %v330
      %v343 = vrot.slane %v342, 4
      %v344 = vmax.f32 %v342, %v343
      %v345 = vrot.slane %v344, 2
      %v346 = vmax.f32 %v344, %v345
      %v347 = vrot.slane %v346, 1
      %v348 = vmax.f32 %v346, %v347
      %vm351 = vcmask 1041409
      %v352 = vsel %vm351, %v348, %v341
      %354 = vrot.lane.b32.xlu0 %v352, 8
      %v355 = vpop.permute.xlu0 %354
      %v357 = vrot.slane %v355, 1
      %v360 = vmax.f32 %v341, %v355
      %v361 = vmax.f32 %v348, %v357
      %v364 = vrot.slane %v361, 7
      %v365 = vsel %vm351, %v364, %v360
      %367 = vrot.lane.b32.xlu0 %v365, 16
      %v368 = vpop.permute.xlu0 %367
      %v370 = vrot.slane %v368, 1
      %v373 = vmax.f32 %v360, %v368
      %v374 = vmax.f32 %v361, %v370
      %v377 = vrot.slane %v374, 7
      %v378 = vsel %vm351, %v377, %v373
      %380 = vrot.lane.b32.xlu0 %v378, 32
      %v381 = vpop.permute.xlu0 %380
      %v383 = vrot.slane %v381, 1
      %v386 = vmax.f32 %v373, %v381
      %v387 = vmax.f32 %v374, %v383
      %v390 = vrot.slane %v387, 7
      %v391 = vsel %vm351, %v390, %v386
      %393 = vrot.lane.b32.xlu0 %v391, 64
      %v394 = vpop.permute.xlu0 %393
      %v396 = vrot.slane %v394, 1
      %v399 = vmax.f32 %v386, %v394
      %v400 = vmax.f32 %v387, %v396
      %v401 = vmax.f32 %v331, %v332
      %v402 = vrot.slane %v401, 4
      %v403 = vmax.f32 %v401, %v402
      %v404 = vrot.slane %v403, 2
      %v405 = vmax.f32 %v403, %v404
      %v406 = vrot.slane %v405, 1
      %v407 = vmax.f32 %v405, %v406
      %v408 = vmax.f32 %v333, %v334
      %v409 = vrot.slane %v408, 4
      %v410 = vmax.f32 %v408, %v409
      %v411 = vrot.slane %v410, 2
      %v412 = vmax.f32 %v410, %v411
      %v413 = vrot.slane %v412, 1
      %v414 = vmax.f32 %v412, %v413
      %v417 = vsel %vm351, %v414, %v407
      %419 = vrot.lane.b32.xlu0 %v417, 8
      %v420 = vpop.permute.xlu0 %419
      %v422 = vrot.slane %v420, 1
      %v425 = vmax.f32 %v407, %v420
      %v426 = vmax.f32 %v414, %v422
      %v429 = vrot.slane %v426, 7
      %v430 = vsel %vm351, %v429, %v425
      %432 = vrot.lane.b32.xlu0 %v430, 16
      %v433 = vpop.permute.xlu0 %432
      %v435 = vrot.slane %v433, 1
      %v438 = vmax.f32 %v425, %v433
      %v439 = vmax.f32 %v426, %v435
      %v442 = vrot.slane %v439, 7
      %v443 = vsel %vm351, %v442, %v438
      %445 = vrot.lane.b32.xlu0 %v443, 32
      %v446 = vpop.permute.xlu0 %445
      %v448 = vrot.slane %v446, 1
      %v451 = vmax.f32 %v438, %v446
      %v452 = vmax.f32 %v439, %v448
      %v455 = vrot.slane %v452, 7
      %v456 = vsel %vm351, %v455, %v451
      %458 = vrot.lane.b32.xlu0 %v456, 64
      %v459 = vpop.permute.xlu0 %458
      %v461 = vrot.slane %v459, 1
      %v464 = vmax.f32 %v451, %v459
      %v465 = vmax.f32 %v452, %v461
      %v468 = vrot.slane %v400, 7
      %v469 = vsel %vm351, %v468, %v399
      %470 = vrot.lane.b32.xlu0 %v469, 8
      %v471 = vpop.permute.xlu0 %470
      %v475 = vrot.slane %v465, 7
      %v476 = vsel %vm351, %v475, %v464
      %477 = vrot.lane.b32.xlu0 %v476, 16
      %v478 = vpop.permute.xlu0 %477
      %vm480 = vcmask 64512
      %v481 = vsel %vm480, %v471, %v478
      %v482 = vld [vmem:[%s2] sm:$0x1]
      %v484 = vlaneseq
      %v485 = vshrl.u32 %v484, 7
      %v486 = vsub.s32 0, %v485
      %v487 = vrot.slane %v482, %v486
      %v489 = vmul.f32 %v481, %v487
      %vm490 = vcmask 123904
      %v491 = vsel %vm490, %v489, 0.0
      %492 = vadd.xlane.f32.xlu0 %v491
      %v493 = vpop.xlane.xlu0 %492
      %v494 = vmax.f32 %v493, 0.0
      %v495 = vld [vmem:[%s3] sm:$0x1]
      %v497 = vlaneseq
      %v498 = vshrl.u32 %v497, 7
      %v499 = vsub.s32 0, %v498
      %v500 = vrot.slane %v495, %v499
      %v502 = vmul.f32 %v494, %v500
      %v503 = vadd.f32 %v502, 0.0
      %v504 = vxor.u32 %v503, 2147483648
      %v505 = vmul.f32 %v504, 1.442695
      %v506 = vpow.pop %v505
      %v507 = vadd.f32 %v506, 1.0
      %v508 = vrcp.pop %v507
      %v509 = vmul.f32 1.0, %v508
      %v510 = vmax.f32 %v327, %v331
      %v511 = vmax.f32 %v328, %v332
      %v512 = vmax.f32 %v329, %v333
      %v513 = vmax.f32 %v330, %v334
      %514 = vrot.lane.b32.xlu0 %v510, 1
      %v515 = vpop.permute.xlu0 %514
      %516 = vrot.lane.b32.xlu0 %v511, 1
      %v517 = vpop.permute.xlu0 %516
      %518 = vrot.lane.b32.xlu0 %v512, 1
      %v519 = vpop.permute.xlu0 %518
      %520 = vrot.lane.b32.xlu0 %v513, 1
      %v521 = vpop.permute.xlu0 %520
      %v522 = vmax.f32 %v510, %v515
      %v523 = vmax.f32 %v511, %v517
      %v524 = vmax.f32 %v512, %v519
      %v525 = vmax.f32 %v513, %v521
      %526 = vrot.lane.b32.xlu0 %v522, 2
      %v527 = vpop.permute.xlu0 %526
      %528 = vrot.lane.b32.xlu0 %v523, 2
      %v529 = vpop.permute.xlu0 %528
      %530 = vrot.lane.b32.xlu0 %v524, 2
      %v531 = vpop.permute.xlu0 %530
      %532 = vrot.lane.b32.xlu0 %v525, 2
      %v533 = vpop.permute.xlu0 %532
      %v534 = vmax.f32 %v522, %v527
      %v535 = vmax.f32 %v523, %v529
      %v536 = vmax.f32 %v524, %v531
      %v537 = vmax.f32 %v525, %v533
      %538 = vrot.lane.b32.xlu0 %v534, 4
      %v539 = vpop.permute.xlu0 %538
      %540 = vrot.lane.b32.xlu0 %v535, 4
      %v541 = vpop.permute.xlu0 %540
      %542 = vrot.lane.b32.xlu0 %v536, 4
      %v543 = vpop.permute.xlu0 %542
      %544 = vrot.lane.b32.xlu0 %v537, 4
      %v545 = vpop.permute.xlu0 %544
      %v546 = vmax.f32 %v534, %v539
      %v547 = vmax.f32 %v535, %v541
      %v548 = vmax.f32 %v536, %v543
      %v549 = vmax.f32 %v537, %v545
      %550 = vst [vmem:[#allocation3] sm:$0x7] 0.0
      %551 = vst [vmem:[#allocation3 + $0x18] sm:$0x7] 0.0
      %552 = vst [vmem:[#allocation3 + $0x13] sm:$0x7] 0.0
      %553 = vst [vmem:[#allocation3 + $0x2b] sm:$0x7] 0.0
      %554 = vst [vmem:[#allocation3 + $0x3] sm:$0xff] %v546
      %555 = vst [vmem:[#allocation3 + $0xb] sm:$0xff] %v547
      %556 = vst [vmem:[#allocation3 + $0x1b] sm:$0xff] %v548
      %557 = vst [vmem:[#allocation3 + $0x23] sm:$0xff] %v549
      %v558 = vld [vmem:[#allocation3] sm:$0xff]
      %v559 = vld [vmem:[#allocation3 + $0x8] sm:$0xff]
      %v560 = vld [vmem:[#allocation3 + $0x18] sm:$0xff]
      %v561 = vld [vmem:[#allocation3 + $0x20] sm:$0xff]
      %v562 = vpack.c.bf16 %v559, %v558
      %v563 = vpack.c.bf16 %v561, %v560
      %v564 = vld [vmem:[%s5] sm:$0xf]
      %v565 = vld [vmem:[%s5 + $0x4] sm:$0xf]
      %v566 = vld [vmem:[%s5 + $0x8] sm:$0xf]
      %v567 = vld [vmem:[%s5 + $0xc] sm:$0xf]
      %v568 = vld [vmem:[%s5 + $0x10] sm:$0xf]
      %v569 = vld [vmem:[%s5 + $0x14] sm:$0xf]
      %v570 = vld [vmem:[%s5 + $0x18] sm:$0xf]
      %v571 = vld [vmem:[%s5 + $0x1c] sm:$0xf]
      %v572 = vld [vmem:[%s5 + $0x20] sm:$0xf]
      %v573 = vld [vmem:[%s5 + $0x24] sm:$0xf]
      %v574 = vld [vmem:[%s5 + $0x28] sm:$0xf]
      %v575 = vld [vmem:[%s5 + $0x2c] sm:$0xf]
      %v576 = vld [vmem:[%s5 + $0x30] sm:$0xf]
      %v577 = vld [vmem:[%s5 + $0x34] sm:$0xf]
      %v578 = vld [vmem:[%s5 + $0x38] sm:$0xf]
      %v579 = vld [vmem:[%s5 + $0x3c] sm:$0xf]
      %v580 = vld [vmem:[#allocation3 + $0x1] sm:$0xff]
      %v581 = vld [vmem:[#allocation3 + $0x9] sm:$0xff]
      %v582 = vld [vmem:[#allocation3 + $0x19] sm:$0xff]
      %v583 = vld [vmem:[#allocation3 + $0x21] sm:$0xff]
      %v584 = vpack.c.bf16 %v581, %v580
      %v585 = vpack.c.bf16 %v583, %v582
      %s586 = scalar_lea.vmem %s5, 64
      %v587 = vld [vmem:[%s586] sm:$0xf]
      %v588 = vld [vmem:[%s586 + $0x4] sm:$0xf]
      %v589 = vld [vmem:[%s586 + $0x8] sm:$0xf]
      %v590 = vld [vmem:[%s586 + $0xc] sm:$0xf]
      %v591 = vld [vmem:[%s586 + $0x10] sm:$0xf]
      %v592 = vld [vmem:[%s586 + $0x14] sm:$0xf]
      %v593 = vld [vmem:[%s586 + $0x18] sm:$0xf]
      %v594 = vld [vmem:[%s586 + $0x1c] sm:$0xf]
      %v595 = vld [vmem:[%s586 + $0x20] sm:$0xf]
      %v596 = vld [vmem:[%s586 + $0x24] sm:$0xf]
      %v597 = vld [vmem:[%s586 + $0x28] sm:$0xf]
      %v598 = vld [vmem:[%s586 + $0x2c] sm:$0xf]
      %v599 = vld [vmem:[%s586 + $0x30] sm:$0xf]
      %v600 = vld [vmem:[%s586 + $0x34] sm:$0xf]
      %v601 = vld [vmem:[%s586 + $0x38] sm:$0xf]
      %v602 = vld [vmem:[%s586 + $0x3c] sm:$0xf]
      %v619 = vunpack.c.l.b16 %v587
      %v620 = vunpack.c.l.b16 %v588
      %v621 = vunpack.c.l.b16 %v589
      %v622 = vunpack.c.l.b16 %v590
      %v623 = vunpack.c.l.b16 %v591
      %v624 = vunpack.c.l.b16 %v592
      %v625 = vunpack.c.l.b16 %v593
      %v626 = vunpack.c.l.b16 %v594
      %v627 = vunpack.c.l.b16 %v595
      %v628 = vunpack.c.l.b16 %v596
      %v629 = vunpack.c.l.b16 %v597
      %v630 = vunpack.c.l.b16 %v598
      %v631 = vunpack.c.l.b16 %v599
      %v632 = vunpack.c.l.b16 %v600
      %v633 = vunpack.c.l.b16 %v601
      %v634 = vunpack.c.l.b16 %v602
      %v635 = vpack.c.b16 %v620, %v619
      %v636 = vpack.c.b16 %v622, %v621
      %v637 = vpack.c.b16 %v624, %v623
      %v638 = vpack.c.b16 %v626, %v625
      %v639 = vpack.c.b16 %v628, %v627
      %v640 = vpack.c.b16 %v630, %v629
      %v641 = vpack.c.b16 %v632, %v631
      %v642 = vpack.c.b16 %v634, %v633
      %651 = vmatprep.subr.bf16.mxu0 0
      %652 = vmatpush1.bf16.msra.mxu0 %v635
      %653 = vmatprep.subr.bf16.mxu0 0
      %654 = vmatpush1.bf16.msra.mxu0 %v636
      %655 = vmatprep.subr.bf16.mxu0 0
      %656 = vmatpush1.bf16.msra.mxu0 %v637
      %657 = vmatprep.subr.bf16.mxu0 0
      %658 = vmatpush1.bf16.msra.mxu0 %v638
      %659 = vmatprep.subr.bf16.mxu0 0
      %660 = vmatpush1.bf16.msra.mxu0 %v639
      %661 = vmatprep.subr.bf16.mxu0 0
      %662 = vmatpush1.bf16.msra.mxu0 %v640
      %663 = vmatprep.subr.bf16.mxu0 0
      %664 = vmatpush1.bf16.msra.mxu0 %v641
      %665 = vmatprep.subr.bf16.mxu0 0
      %666 = vmatpush1.bf16.msra.mxu0 %v642
      %667 = vmatprep.subr.bf16.mxu0 0
      %668 = vmatpush1.bf16.msra.mxu0 0
      %669 = vmatprep.subr.bf16.mxu0 0
      %670 = vmatpush1.bf16.msra.mxu0 0
      %671 = vmatprep.subr.bf16.mxu0 0
      %672 = vmatpush1.bf16.msra.mxu0 0
      %673 = vmatprep.subr.bf16.mxu0 0
      %674 = vmatpush1.bf16.msra.mxu0 0
      %675 = vmatprep.subr.bf16.mxu0 0
      %676 = vmatpush1.bf16.msra.mxu0 0
      %677 = vmatprep.subr.bf16.mxu0 0
      %678 = vmatpush1.bf16.msra.mxu0 0
      %679 = vmatprep.subr.bf16.mxu0 0
      %680 = vmatpush1.bf16.msra.mxu0 0
      %681 = vmatprep.subr.bf16.mxu0 0
      %682 = vmatpush1.bf16.msra.mxu0 0
      %683 = vmatprep.mubr.bf16.mxu0 0
      %684 = vmatmul.mubr.bf16.gmra.mrb[0].mxu0 %v584
      %v685 = vpop.f32.mrb[0].mxu0
      %v686 = vadd.f32 0.0, %v685
      %v687 = vpop.f32.mrb[0].mxu0
      %v688 = vpop.f32.mrb[0].mxu0
      %v689 = vadd.f32 0.0, %v688
      %v690 = vpop.f32.mrb[0].mxu0
      %691 = vmatprep.mubr.bf16.mxu0 0
      %692 = vmatmul.mubr.bf16.gmra.mrb[0].mxu0 %v585
      %v693 = vpop.f32.mrb[0].mxu0
      %v694 = vadd.f32 0.0, %v693
      %v695 = vpop.f32.mrb[0].mxu0
      %v696 = vpop.f32.mrb[0].mxu0
      %v697 = vadd.f32 0.0, %v696
      %v698 = vpop.f32.mrb[0].mxu0
      %699 = vdwg.mxu0
      %v716 = vunpack.c.l.b16 %v564
      %v717 = vunpack.c.l.b16 %v565
      %v718 = vunpack.c.l.b16 %v566
      %v719 = vunpack.c.l.b16 %v567
      %v720 = vunpack.c.l.b16 %v568
      %v721 = vunpack.c.l.b16 %v569
      %v722 = vunpack.c.l.b16 %v570
      %v723 = vunpack.c.l.b16 %v571
      %v724 = vunpack.c.l.b16 %v572
      %v725 = vunpack.c.l.b16 %v573
      %v726 = vunpack.c.l.b16 %v574
      %v727 = vunpack.c.l.b16 %v575
      %v728 = vunpack.c.l.b16 %v576
      %v729 = vunpack.c.l.b16 %v577
      %v730 = vunpack.c.l.b16 %v578
      %v731 = vunpack.c.l.b16 %v579
      %v732 = vpack.c.b16 %v717, %v716
      %v733 = vpack.c.b16 %v719, %v718
      %v734 = vpack.c.b16 %v721, %v720
      %v735 = vpack.c.b16 %v723, %v722
      %v736 = vpack.c.b16 %v725, %v724
      %v737 = vpack.c.b16 %v727, %v726
      %v738 = vpack.c.b16 %v729, %v728
      %v739 = vpack.c.b16 %v731, %v730
      %748 = vmatprep.subr.bf16.mxu0 0
      %749 = vmatpush1.bf16.msra.mxu0 %v732
      %750 = vmatprep.subr.bf16.mxu0 0
      %751 = vmatpush1.bf16.msra.mxu0 %v733
      %752 = vmatprep.subr.bf16.mxu0 0
      %753 = vmatpush1.bf16.msra.mxu0 %v734
      %754 = vmatprep.subr.bf16.mxu0 0
      %755 = vmatpush1.bf16.msra.mxu0 %v735
      %756 = vmatprep.subr.bf16.mxu0 0
      %757 = vmatpush1.bf16.msra.mxu0 %v736
      %758 = vmatprep.subr.bf16.mxu0 0
      %759 = vmatpush1.bf16.msra.mxu0 %v737
      %760 = vmatprep.subr.bf16.mxu0 0
      %761 = vmatpush1.bf16.msra.mxu0 %v738
      %762 = vmatprep.subr.bf16.mxu0 0
      %763 = vmatpush1.bf16.msra.mxu0 %v739
      %764 = vmatprep.subr.bf16.mxu0 0
      %765 = vmatpush1.bf16.msra.mxu0 0
      %766 = vmatprep.subr.bf16.mxu0 0
      %767 = vmatpush1.bf16.msra.mxu0 0
      %768 = vmatprep.subr.bf16.mxu0 0
      %769 = vmatpush1.bf16.msra.mxu0 0
      %770 = vmatprep.subr.bf16.mxu0 0
      %771 = vmatpush1.bf16.msra.mxu0 0
      %772 = vmatprep.subr.bf16.mxu0 0
      %773 = vmatpush1.bf16.msra.mxu0 0
      %774 = vmatprep.subr.bf16.mxu0 0
      %775 = vmatpush1.bf16.msra.mxu0 0
      %776 = vmatprep.subr.bf16.mxu0 0
      %777 = vmatpush1.bf16.msra.mxu0 0
      %778 = vmatprep.subr.bf16.mxu0 0
      %779 = vmatpush1.bf16.msra.mxu0 0
      %780 = vmatprep.mubr.bf16.mxu0 0
      %781 = vmatmul.mubr.bf16.gmra.mrb[0].mxu0 %v562
      %v782 = vpop.f32.mrb[0].mxu0
      %v783 = vadd.f32 %v686, %v782
      %v784 = vpop.f32.mrb[0].mxu0
      %v785 = vpop.f32.mrb[0].mxu0
      %v786 = vadd.f32 %v689, %v785
      %v787 = vpop.f32.mrb[0].mxu0
      %788 = vmatprep.mubr.bf16.mxu0 0
      %789 = vmatmul.mubr.bf16.gmra.mrb[0].mxu0 %v563
      %v790 = vpop.f32.mrb[0].mxu0
      %v791 = vadd.f32 %v694, %v790
      %v792 = vpop.f32.mrb[0].mxu0
      %v793 = vpop.f32.mrb[0].mxu0
      %v794 = vadd.f32 %v697, %v793
      %v795 = vpop.f32.mrb[0].mxu0
      %796 = vdwg.mxu0
      %v797 = vld [vmem:[#allocation3 + $0x2] sm:$0xff]
      %v798 = vld [vmem:[#allocation3 + $0xa] sm:$0xff]
      %v799 = vld [vmem:[#allocation3 + $0x1a] sm:$0xff]
      %v800 = vld [vmem:[#allocation3 + $0x22] sm:$0xff]
      %v801 = vpack.c.bf16 %v798, %v797
      %v802 = vpack.c.bf16 %v800, %v799
      %s803 = scalar_lea.vmem %s5, 128
      %v804 = vld [vmem:[%s803] sm:$0xf]
      %v805 = vld [vmem:[%s803 + $0x4] sm:$0xf]
      %v806 = vld [vmem:[%s803 + $0x8] sm:$0xf]
      %v807 = vld [vmem:[%s803 + $0xc] sm:$0xf]
      %v808 = vld [vmem:[%s803 + $0x10] sm:$0xf]
      %v809 = vld [vmem:[%s803 + $0x14] sm:$0xf]
      %v810 = vld [vmem:[%s803 + $0x18] sm:$0xf]
      %v811 = vld [vmem:[%s803 + $0x1c] sm:$0xf]
      %v812 = vld [vmem:[%s803 + $0x20] sm:$0xf]
      %v813 = vld [vmem:[%s803 + $0x24] sm:$0xf]
      %v814 = vld [vmem:[%s803 + $0x28] sm:$0xf]
      %v815 = vld [vmem:[%s803 + $0x2c] sm:$0xf]
      %v816 = vld [vmem:[%s803 + $0x30] sm:$0xf]
      %v817 = vld [vmem:[%s803 + $0x34] sm:$0xf]
      %v818 = vld [vmem:[%s803 + $0x38] sm:$0xf]
      %v819 = vld [vmem:[%s803 + $0x3c] sm:$0xf]
      %v836 = vunpack.c.l.b16 %v804
      %v837 = vunpack.c.l.b16 %v805
      %v838 = vunpack.c.l.b16 %v806
      %v839 = vunpack.c.l.b16 %v807
      %v840 = vunpack.c.l.b16 %v808
      %v841 = vunpack.c.l.b16 %v809
      %v842 = vunpack.c.l.b16 %v810
      %v843 = vunpack.c.l.b16 %v811
      %v844 = vunpack.c.l.b16 %v812
      %v845 = vunpack.c.l.b16 %v813
      %v846 = vunpack.c.l.b16 %v814
      %v847 = vunpack.c.l.b16 %v815
      %v848 = vunpack.c.l.b16 %v816
      %v849 = vunpack.c.l.b16 %v817
      %v850 = vunpack.c.l.b16 %v818
      %v851 = vunpack.c.l.b16 %v819
      %v852 = vpack.c.b16 %v837, %v836
      %v853 = vpack.c.b16 %v839, %v838
      %v854 = vpack.c.b16 %v841, %v840
      %v855 = vpack.c.b16 %v843, %v842
      %v856 = vpack.c.b16 %v845, %v844
      %v857 = vpack.c.b16 %v847, %v846
      %v858 = vpack.c.b16 %v849, %v848
      %v859 = vpack.c.b16 %v851, %v850
      %868 = vmatprep.subr.bf16.mxu0 0
      %869 = vmatpush1.bf16.msra.mxu0 %v852
      %870 = vmatprep.subr.bf16.mxu0 0
      %871 = vmatpush1.bf16.msra.mxu0 %v853
      %872 = vmatprep.subr.bf16.mxu0 0
      %873 = vmatpush1.bf16.msra.mxu0 %v854
      %874 = vmatprep.subr.bf16.mxu0 0
      %875 = vmatpush1.bf16.msra.mxu0 %v855
      %876 = vmatprep.subr.bf16.mxu0 0
      %877 = vmatpush1.bf16.msra.mxu0 %v856
      %878 = vmatprep.subr.bf16.mxu0 0
      %879 = vmatpush1.bf16.msra.mxu0 %v857
      %880 = vmatprep.subr.bf16.mxu0 0
      %881 = vmatpush1.bf16.msra.mxu0 %v858
      %882 = vmatprep.subr.bf16.mxu0 0
      %883 = vmatpush1.bf16.msra.mxu0 %v859
      %884 = vmatprep.subr.bf16.mxu0 0
      %885 = vmatpush1.bf16.msra.mxu0 0
      %886 = vmatprep.subr.bf16.mxu0 0
      %887 = vmatpush1.bf16.msra.mxu0 0
      %888 = vmatprep.subr.bf16.mxu0 0
      %889 = vmatpush1.bf16.msra.mxu0 0
      %890 = vmatprep.subr.bf16.mxu0 0
      %891 = vmatpush1.bf16.msra.mxu0 0
      %892 = vmatprep.subr.bf16.mxu0 0
      %893 = vmatpush1.bf16.msra.mxu0 0
      %894 = vmatprep.subr.bf16.mxu0 0
      %895 = vmatpush1.bf16.msra.mxu0 0
      %896 = vmatprep.subr.bf16.mxu0 0
      %897 = vmatpush1.bf16.msra.mxu0 0
      %898 = vmatprep.subr.bf16.mxu0 0
      %899 = vmatpush1.bf16.msra.mxu0 0
      %900 = vmatprep.mubr.bf16.mxu0 0
      %901 = vmatmul.mubr.bf16.gmra.mrb[0].mxu0 %v801
      %v902 = vpop.f32.mrb[0].mxu0
      %v903 = vadd.f32 0.0, %v902
      %v904 = vpop.f32.mrb[0].mxu0
      %v905 = vpop.f32.mrb[0].mxu0
      %v906 = vadd.f32 0.0, %v905
      %v907 = vpop.f32.mrb[0].mxu0
      %908 = vmatprep.mubr.bf16.mxu0 0
      %909 = vmatmul.mubr.bf16.gmra.mrb[0].mxu0 %v802
      %v910 = vpop.f32.mrb[0].mxu0
      %v911 = vadd.f32 0.0, %v910
      %v912 = vpop.f32.mrb[0].mxu0
      %v913 = vpop.f32.mrb[0].mxu0
      %v914 = vadd.f32 0.0, %v913
      %v915 = vpop.f32.mrb[0].mxu0
      %916 = vdwg.mxu0
      %v917 = vadd.f32 %v783, %v903
      %v918 = vadd.f32 %v786, %v906
      %v919 = vadd.f32 %v791, %v911
      %v920 = vadd.f32 %v794, %v914
      %v921 = vld [vmem:[#allocation3 + $0x3] sm:$0xff]
      %v922 = vld [vmem:[#allocation3 + $0xb] sm:$0xff]
      %v923 = vld [vmem:[#allocation3 + $0x1b] sm:$0xff]
      %v924 = vld [vmem:[#allocation3 + $0x23] sm:$0xff]
      %v925 = vpack.c.bf16 %v922, %v921
      %v926 = vpack.c.bf16 %v924, %v923
      %s927 = scalar_lea.vmem %s5, 192
      %v928 = vld [vmem:[%s927] sm:$0xf]
      %v929 = vld [vmem:[%s927 + $0x4] sm:$0xf]
      %v930 = vld [vmem:[%s927 + $0x8] sm:$0xf]
      %v931 = vld [vmem:[%s927 + $0xc] sm:$0xf]
      %v932 = vld [vmem:[%s927 + $0x10] sm:$0xf]
      %v933 = vld [vmem:[%s927 + $0x14] sm:$0xf]
      %v934 = vld [vmem:[%s927 + $0x18] sm:$0xf]
      %v935 = vld [vmem:[%s927 + $0x1c] sm:$0xf]
      %v936 = vld [vmem:[%s927 + $0x20] sm:$0xf]
      %v937 = vld [vmem:[%s927 + $0x24] sm:$0xf]
      %v938 = vld [vmem:[%s927 + $0x28] sm:$0xf]
      %v939 = vld [vmem:[%s927 + $0x2c] sm:$0xf]
      %v940 = vld [vmem:[%s927 + $0x30] sm:$0xf]
      %v941 = vld [vmem:[%s927 + $0x34] sm:$0xf]
      %v942 = vld [vmem:[%s927 + $0x38] sm:$0xf]
      %v943 = vld [vmem:[%s927 + $0x3c] sm:$0xf]
      %v960 = vunpack.c.l.b16 %v928
      %v961 = vunpack.c.l.b16 %v929
      %v962 = vunpack.c.l.b16 %v930
      %v963 = vunpack.c.l.b16 %v931
      %v964 = vunpack.c.l.b16 %v932
      %v965 = vunpack.c.l.b16 %v933
      %v966 = vunpack.c.l.b16 %v934
      %v967 = vunpack.c.l.b16 %v935
      %v968 = vunpack.c.l.b16 %v936
      %v969 = vunpack.c.l.b16 %v937
      %v970 = vunpack.c.l.b16 %v938
      %v971 = vunpack.c.l.b16 %v939
      %v972 = vunpack.c.l.b16 %v940
      %v973 = vunpack.c.l.b16 %v941
      %v974 = vunpack.c.l.b16 %v942
      %v975 = vunpack.c.l.b16 %v943
      %v976 = vpack.c.b16 %v961, %v960
      %v977 = vpack.c.b16 %v963, %v962
      %v978 = vpack.c.b16 %v965, %v964
      %v979 = vpack.c.b16 %v967, %v966
      %v980 = vpack.c.b16 %v969, %v968
      %v981 = vpack.c.b16 %v971, %v970
      %v982 = vpack.c.b16 %v973, %v972
      %v983 = vpack.c.b16 %v975, %v974
      %992 = vmatprep.subr.bf16.mxu0 0
      %993 = vmatpush1.bf16.msra.mxu0 %v976
      %994 = vmatprep.subr.bf16.mxu0 0
      %995 = vmatpush1.bf16.msra.mxu0 %v977
      %996 = vmatprep.subr.bf16.mxu0 0
      %997 = vmatpush1.bf16.msra.mxu0 %v978
      %998 = vmatprep.subr.bf16.mxu0 0
      %999 = vmatpush1.bf16.msra.mxu0 %v979
      %1000 = vmatprep.subr.bf16.mxu0 0
      %1001 = vmatpush1.bf16.msra.mxu0 %v980
      %1002 = vmatprep.subr.bf16.mxu0 0
      %1003 = vmatpush1.bf16.msra.mxu0 %v981
      %1004 = vmatprep.subr.bf16.mxu0 0
      %1005 = vmatpush1.bf16.msra.mxu0 %v982
      %1006 = vmatprep.subr.bf16.mxu0 0
      %1007 = vmatpush1.bf16.msra.mxu0 %v983
      %1008 = vmatprep.subr.bf16.mxu0 0
      %1009 = vmatpush1.bf16.msra.mxu0 0
      %1010 = vmatprep.subr.bf16.mxu0 0
      %1011 = vmatpush1.bf16.msra.mxu0 0
      %1012 = vmatprep.subr.bf16.mxu0 0
      %1013 = vmatpush1.bf16.msra.mxu0 0
      %1014 = vmatprep.subr.bf16.mxu0 0
      %1015 = vmatpush1.bf16.msra.mxu0 0
      %1016 = vmatprep.subr.bf16.mxu0 0
      %1017 = vmatpush1.bf16.msra.mxu0 0
      %1018 = vmatprep.subr.bf16.mxu0 0
      %1019 = vmatpush1.bf16.msra.mxu0 0
      %1020 = vmatprep.subr.bf16.mxu0 0
      %1021 = vmatpush1.bf16.msra.mxu0 0
      %1022 = vmatprep.subr.bf16.mxu0 0
      %1023 = vmatpush1.bf16.msra.mxu0 0
      %1024 = vmatprep.mubr.bf16.mxu0 0
      %1025 = vmatmul.mubr.bf16.gmra.mrb[0].mxu0 %v925
      %v1026 = vpop.f32.mrb[0].mxu0
      %v1027 = vadd.f32 0.0, %v1026
      %v1028 = vpop.f32.mrb[0].mxu0
      %v1029 = vpop.f32.mrb[0].mxu0
      %v1030 = vadd.f32 0.0, %v1029
      %v1031 = vpop.f32.mrb[0].mxu0
      %1032 = vmatprep.mubr.bf16.mxu0 0
      %1033 = vmatmul.mubr.bf16.gmra.mrb[0].mxu0 %v926
      %v1034 = vpop.f32.mrb[0].mxu0
      %v1035 = vadd.f32 0.0, %v1034
      %v1036 = vpop.f32.mrb[0].mxu0
      %v1037 = vpop.f32.mrb[0].mxu0
      %v1038 = vadd.f32 0.0, %v1037
      %v1039 = vpop.f32.mrb[0].mxu0
      %1040 = vdwg.mxu0
      %v1041 = vadd.f32 %v917, %v1027
      %v1042 = vadd.f32 %v918, %v1030
      %v1043 = vadd.f32 %v919, %v1035
      %v1044 = vadd.f32 %v920, %v1038
      %v1045 = vld [vmem:[#allocation3 + $0x4] sm:$0xff]
      %v1046 = vld [vmem:[#allocation3 + $0xc] sm:$0xff]
      %v1047 = vld [vmem:[#allocation3 + $0x1c] sm:$0xff]
      %v1048 = vld [vmem:[#allocation3 + $0x24] sm:$0xff]
      %v1049 = vpack.c.bf16 %v1046, %v1045
      %v1050 = vpack.c.bf16 %v1048, %v1047
      %s1051 = scalar_lea.vmem %s5, 256
      %v1052 = vld [vmem:[%s1051] sm:$0xf]
      %v1053 = vld [vmem:[%s1051 + $0x4] sm:$0xf]
      %v1054 = vld [vmem:[%s1051 + $0x8] sm:$0xf]
      %v1055 = vld [vmem:[%s1051 + $0xc] sm:$0xf]
      %v1056 = vld [vmem:[%s1051 + $0x10] sm:$0xf]
      %v1057 = vld [vmem:[%s1051 + $0x14] sm:$0xf]
      %v1058 = vld [vmem:[%s1051 + $0x18] sm:$0xf]
      %v1059 = vld [vmem:[%s1051 + $0x1c] sm:$0xf]
      %v1060 = vld [vmem:[%s1051 + $0x20] sm:$0xf]
      %v1061 = vld [vmem:[%s1051 + $0x24] sm:$0xf]
      %v1062 = vld [vmem:[%s1051 + $0x28] sm:$0xf]
      %v1063 = vld [vmem:[%s1051 + $0x2c] sm:$0xf]
      %v1064 = vld [vmem:[%s1051 + $0x30] sm:$0xf]
      %v1065 = vld [vmem:[%s1051 + $0x34] sm:$0xf]
      %v1066 = vld [vmem:[%s1051 + $0x38] sm:$0xf]
      %v1067 = vld [vmem:[%s1051 + $0x3c] sm:$0xf]
      %v1084 = vunpack.c.l.b16 %v1052
      %v1085 = vunpack.c.l.b16 %v1053
      %v1086 = vunpack.c.l.b16 %v1054
      %v1087 = vunpack.c.l.b16 %v1055
      %v1088 = vunpack.c.l.b16 %v1056
      %v1089 = vunpack.c.l.b16 %v1057
      %v1090 = vunpack.c.l.b16 %v1058
      %v1091 = vunpack.c.l.b16 %v1059
      %v1092 = vunpack.c.l.b16 %v1060
      %v1093 = vunpack.c.l.b16 %v1061
      %v1094 = vunpack.c.l.b16 %v1062
      %v1095 = vunpack.c.l.b16 %v1063
      %v1096 = vunpack.c.l.b16 %v1064
      %v1097 = vunpack.c.l.b16 %v1065
      %v1098 = vunpack.c.l.b16 %v1066
      %v1099 = vunpack.c.l.b16 %v1067
      %v1100 = vpack.c.b16 %v1085, %v1084
      %v1101 = vpack.c.b16 %v1087, %v1086
      %v1102 = vpack.c.b16 %v1089, %v1088
      %v1103 = vpack.c.b16 %v1091, %v1090
      %v1104 = vpack.c.b16 %v1093, %v1092
      %v1105 = vpack.c.b16 %v1095, %v1094
      %v1106 = vpack.c.b16 %v1097, %v1096
      %v1107 = vpack.c.b16 %v1099, %v1098
      %1116 = vmatprep.subr.bf16.mxu0 0
      %1117 = vmatpush1.bf16.msra.mxu0 %v1100
      %1118 = vmatprep.subr.bf16.mxu0 0
      %1119 = vmatpush1.bf16.msra.mxu0 %v1101
      %1120 = vmatprep.subr.bf16.mxu0 0
      %1121 = vmatpush1.bf16.msra.mxu0 %v1102
      %1122 = vmatprep.subr.bf16.mxu0 0
      %1123 = vmatpush1.bf16.msra.mxu0 %v1103
      %1124 = vmatprep.subr.bf16.mxu0 0
      %1125 = vmatpush1.bf16.msra.mxu0 %v1104
      %1126 = vmatprep.subr.bf16.mxu0 0
      %1127 = vmatpush1.bf16.msra.mxu0 %v1105
      %1128 = vmatprep.subr.bf16.mxu0 0
      %1129 = vmatpush1.bf16.msra.mxu0 %v1106
      %1130 = vmatprep.subr.bf16.mxu0 0
      %1131 = vmatpush1.bf16.msra.mxu0 %v1107
      %1132 = vmatprep.subr.bf16.mxu0 0
      %1133 = vmatpush1.bf16.msra.mxu0 0
      %1134 = vmatprep.subr.bf16.mxu0 0
      %1135 = vmatpush1.bf16.msra.mxu0 0
      %1136 = vmatprep.subr.bf16.mxu0 0
      %1137 = vmatpush1.bf16.msra.mxu0 0
      %1138 = vmatprep.subr.bf16.mxu0 0
      %1139 = vmatpush1.bf16.msra.mxu0 0
      %1140 = vmatprep.subr.bf16.mxu0 0
      %1141 = vmatpush1.bf16.msra.mxu0 0
      %1142 = vmatprep.subr.bf16.mxu0 0
      %1143 = vmatpush1.bf16.msra.mxu0 0
      %1144 = vmatprep.subr.bf16.mxu0 0
      %1145 = vmatpush1.bf16.msra.mxu0 0
      %1146 = vmatprep.subr.bf16.mxu0 0
      %1147 = vmatpush1.bf16.msra.mxu0 0
      %1148 = vmatprep.mubr.bf16.mxu0 0
      %1149 = vmatmul.mubr.bf16.gmra.mrb[0].mxu0 %v1049
      %v1150 = vpop.f32.mrb[0].mxu0
      %v1151 = vadd.f32 0.0, %v1150
      %v1152 = vpop.f32.mrb[0].mxu0
      %v1153 = vpop.f32.mrb[0].mxu0
      %v1154 = vadd.f32 0.0, %v1153
      %v1155 = vpop.f32.mrb[0].mxu0
      %1156 = vmatprep.mubr.bf16.mxu0 0
      %1157 = vmatmul.mubr.bf16.gmra.mrb[0].mxu0 %v1050
      %v1158 = vpop.f32.mrb[0].mxu0
      %v1159 = vadd.f32 0.0, %v1158
      %v1160 = vpop.f32.mrb[0].mxu0
      %v1161 = vpop.f32.mrb[0].mxu0
      %v1162 = vadd.f32 0.0, %v1161
      %v1163 = vpop.f32.mrb[0].mxu0
      %1164 = vdwg.mxu0
      %v1165 = vadd.f32 %v1041, %v1151
      %v1166 = vadd.f32 %v1042, %v1154
      %v1167 = vadd.f32 %v1043, %v1159
      %v1168 = vadd.f32 %v1044, %v1162
      %v1169 = vld [vmem:[#allocation3 + $0x5] sm:$0xff]
      %v1170 = vld [vmem:[#allocation3 + $0xd] sm:$0xff]
      %v1171 = vld [vmem:[#allocation3 + $0x1d] sm:$0xff]
      %v1172 = vld [vmem:[#allocation3 + $0x25] sm:$0xff]
      %v1173 = vpack.c.bf16 %v1170, %v1169
      %v1174 = vpack.c.bf16 %v1172, %v1171
      %s1175 = scalar_lea.vmem %s5, 320
      %v1176 = vld [vmem:[%s1175] sm:$0xf]
      %v1177 = vld [vmem:[%s1175 + $0x4] sm:$0xf]
      %v1178 = vld [vmem:[%s1175 + $0x8] sm:$0xf]
      %v1179 = vld [vmem:[%s1175 + $0xc] sm:$0xf]
      %v1180 = vld [vmem:[%s1175 + $0x10] sm:$0xf]
      %v1181 = vld [vmem:[%s1175 + $0x14] sm:$0xf]
      %v1182 = vld [vmem:[%s1175 + $0x18] sm:$0xf]
      %v1183 = vld [vmem:[%s1175 + $0x1c] sm:$0xf]
      %v1184 = vld [vmem:[%s1175 + $0x20] sm:$0xf]
      %v1185 = vld [vmem:[%s1175 + $0x24] sm:$0xf]
      %v1186 = vld [vmem:[%s1175 + $0x28] sm:$0xf]
      %v1187 = vld [vmem:[%s1175 + $0x2c] sm:$0xf]
      %v1188 = vld [vmem:[%s1175 + $0x30] sm:$0xf]
      %v1189 = vld [vmem:[%s1175 + $0x34] sm:$0xf]
      %v1190 = vld [vmem:[%s1175 + $0x38] sm:$0xf]
      %v1191 = vld [vmem:[%s1175 + $0x3c] sm:$0xf]
      %v1208 = vunpack.c.l.b16 %v1176
      %v1209 = vunpack.c.l.b16 %v1177
      %v1210 = vunpack.c.l.b16 %v1178
      %v1211 = vunpack.c.l.b16 %v1179
      %v1212 = vunpack.c.l.b16 %v1180
      %v1213 = vunpack.c.l.b16 %v1181
      %v1214 = vunpack.c.l.b16 %v1182
      %v1215 = vunpack.c.l.b16 %v1183
      %v1216 = vunpack.c.l.b16 %v1184
      %v1217 = vunpack.c.l.b16 %v1185
      %v1218 = vunpack.c.l.b16 %v1186
      %v1219 = vunpack.c.l.b16 %v1187
      %v1220 = vunpack.c.l.b16 %v1188
      %v1221 = vunpack.c.l.b16 %v1189
      %v1222 = vunpack.c.l.b16 %v1190
      %v1223 = vunpack.c.l.b16 %v1191
      %v1224 = vpack.c.b16 %v1209, %v1208
      %v1225 = vpack.c.b16 %v1211, %v1210
      %v1226 = vpack.c.b16 %v1213, %v1212
      %v1227 = vpack.c.b16 %v1215, %v1214
      %v1228 = vpack.c.b16 %v1217, %v1216
      %v1229 = vpack.c.b16 %v1219, %v1218
      %v1230 = vpack.c.b16 %v1221, %v1220
      %v1231 = vpack.c.b16 %v1223, %v1222
      %1240 = vmatprep.subr.bf16.mxu0 0
      %1241 = vmatpush1.bf16.msra.mxu0 %v1224
      %1242 = vmatprep.subr.bf16.mxu0 0
      %1243 = vmatpush1.bf16.msra.mxu0 %v1225
      %1244 = vmatprep.subr.bf16.mxu0 0
      %1245 = vmatpush1.bf16.msra.mxu0 %v1226
      %1246 = vmatprep.subr.bf16.mxu0 0
      %1247 = vmatpush1.bf16.msra.mxu0 %v1227
      %1248 = vmatprep.subr.bf16.mxu0 0
      %1249 = vmatpush1.bf16.msra.mxu0 %v1228
      %1250 = vmatprep.subr.bf16.mxu0 0
      %1251 = vmatpush1.bf16.msra.mxu0 %v1229
      %1252 = vmatprep.subr.bf16.mxu0 0
      %1253 = vmatpush1.bf16.msra.mxu0 %v1230
      %1254 = vmatprep.subr.bf16.mxu0 0
      %1255 = vmatpush1.bf16.msra.mxu0 %v1231
      %1256 = vmatprep.subr.bf16.mxu0 0
      %1257 = vmatpush1.bf16.msra.mxu0 0
      %1258 = vmatprep.subr.bf16.mxu0 0
      %1259 = vmatpush1.bf16.msra.mxu0 0
      %1260 = vmatprep.subr.bf16.mxu0 0
      %1261 = vmatpush1.bf16.msra.mxu0 0
      %1262 = vmatprep.subr.bf16.mxu0 0
      %1263 = vmatpush1.bf16.msra.mxu0 0
      %1264 = vmatprep.subr.bf16.mxu0 0
      %1265 = vmatpush1.bf16.msra.mxu0 0
      %1266 = vmatprep.subr.bf16.mxu0 0
      %1267 = vmatpush1.bf16.msra.mxu0 0
      %1268 = vmatprep.subr.bf16.mxu0 0
      %1269 = vmatpush1.bf16.msra.mxu0 0
      %1270 = vmatprep.subr.bf16.mxu0 0
      %1271 = vmatpush1.bf16.msra.mxu0 0
      %1272 = vmatprep.mubr.bf16.mxu0 0
      %1273 = vmatmul.mubr.bf16.gmra.mrb[0].mxu0 %v1173
      %v1274 = vpop.f32.mrb[0].mxu0
      %v1275 = vadd.f32 0.0, %v1274
      %v1276 = vpop.f32.mrb[0].mxu0
      %v1277 = vpop.f32.mrb[0].mxu0
      %v1278 = vadd.f32 0.0, %v1277
      %v1279 = vpop.f32.mrb[0].mxu0
      %1280 = vmatprep.mubr.bf16.mxu0 0
      %1281 = vmatmul.mubr.bf16.gmra.mrb[0].mxu0 %v1174
      %v1282 = vpop.f32.mrb[0].mxu0
      %v1283 = vadd.f32 0.0, %v1282
      %v1284 = vpop.f32.mrb[0].mxu0
      %v1285 = vpop.f32.mrb[0].mxu0
      %v1286 = vadd.f32 0.0, %v1285
      %v1287 = vpop.f32.mrb[0].mxu0
      %1288 = vdwg.mxu0
      %v1289 = vadd.f32 %v1165, %v1275
      %v1290 = vadd.f32 %v1166, %v1278
      %v1291 = vadd.f32 %v1167, %v1283
      %v1292 = vadd.f32 %v1168, %v1286
      %v1293 = vld [vmem:[#allocation3 + $0x6] sm:$0xff]
      %v1294 = vld [vmem:[#allocation3 + $0xe] sm:$0xff]
      %v1295 = vld [vmem:[#allocation3 + $0x1e] sm:$0xff]
      %v1296 = vld [vmem:[#allocation3 + $0x26] sm:$0xff]
      %v1297 = vpack.c.bf16 %v1294, %v1293
      %v1298 = vpack.c.bf16 %v1296, %v1295
      %s1299 = scalar_lea.vmem %s5, 384
      %v1300 = vld [vmem:[%s1299] sm:$0xf]
      %v1301 = vld [vmem:[%s1299 + $0x4] sm:$0xf]
      %v1302 = vld [vmem:[%s1299 + $0x8] sm:$0xf]
      %v1303 = vld [vmem:[%s1299 + $0xc] sm:$0xf]
      %v1304 = vld [vmem:[%s1299 + $0x10] sm:$0xf]
      %v1305 = vld [vmem:[%s1299 + $0x14] sm:$0xf]
      %v1306 = vld [vmem:[%s1299 + $0x18] sm:$0xf]
      %v1307 = vld [vmem:[%s1299 + $0x1c] sm:$0xf]
      %v1308 = vld [vmem:[%s1299 + $0x20] sm:$0xf]
      %v1309 = vld [vmem:[%s1299 + $0x24] sm:$0xf]
      %v1310 = vld [vmem:[%s1299 + $0x28] sm:$0xf]
      %v1311 = vld [vmem:[%s1299 + $0x2c] sm:$0xf]
      %v1312 = vld [vmem:[%s1299 + $0x30] sm:$0xf]
      %v1313 = vld [vmem:[%s1299 + $0x34] sm:$0xf]
      %v1314 = vld [vmem:[%s1299 + $0x38] sm:$0xf]
      %v1315 = vld [vmem:[%s1299 + $0x3c] sm:$0xf]
      %v1332 = vunpack.c.l.b16 %v1300
      %v1333 = vunpack.c.l.b16 %v1301
      %v1334 = vunpack.c.l.b16 %v1302
      %v1335 = vunpack.c.l.b16 %v1303
      %v1336 = vunpack.c.l.b16 %v1304
      %v1337 = vunpack.c.l.b16 %v1305
      %v1338 = vunpack.c.l.b16 %v1306
      %v1339 = vunpack.c.l.b16 %v1307
      %v1340 = vunpack.c.l.b16 %v1308
      %v1341 = vunpack.c.l.b16 %v1309
      %v1342 = vunpack.c.l.b16 %v1310
      %v1343 = vunpack.c.l.b16 %v1311
      %v1344 = vunpack.c.l.b16 %v1312
      %v1345 = vunpack.c.l.b16 %v1313
      %v1346 = vunpack.c.l.b16 %v1314
      %v1347 = vunpack.c.l.b16 %v1315
      %v1348 = vpack.c.b16 %v1333, %v1332
      %v1349 = vpack.c.b16 %v1335, %v1334
      %v1350 = vpack.c.b16 %v1337, %v1336
      %v1351 = vpack.c.b16 %v1339, %v1338
      %v1352 = vpack.c.b16 %v1341, %v1340
      %v1353 = vpack.c.b16 %v1343, %v1342
      %v1354 = vpack.c.b16 %v1345, %v1344
      %v1355 = vpack.c.b16 %v1347, %v1346
      %1364 = vmatprep.subr.bf16.mxu0 0
      %1365 = vmatpush1.bf16.msra.mxu0 %v1348
      %1366 = vmatprep.subr.bf16.mxu0 0
      %1367 = vmatpush1.bf16.msra.mxu0 %v1349
      %1368 = vmatprep.subr.bf16.mxu0 0
      %1369 = vmatpush1.bf16.msra.mxu0 %v1350
      %1370 = vmatprep.subr.bf16.mxu0 0
      %1371 = vmatpush1.bf16.msra.mxu0 %v1351
      %1372 = vmatprep.subr.bf16.mxu0 0
      %1373 = vmatpush1.bf16.msra.mxu0 %v1352
      %1374 = vmatprep.subr.bf16.mxu0 0
      %1375 = vmatpush1.bf16.msra.mxu0 %v1353
      %1376 = vmatprep.subr.bf16.mxu0 0
      %1377 = vmatpush1.bf16.msra.mxu0 %v1354
      %1378 = vmatprep.subr.bf16.mxu0 0
      %1379 = vmatpush1.bf16.msra.mxu0 %v1355
      %1380 = vmatprep.subr.bf16.mxu0 0
      %1381 = vmatpush1.bf16.msra.mxu0 0
      %1382 = vmatprep.subr.bf16.mxu0 0
      %1383 = vmatpush1.bf16.msra.mxu0 0
      %1384 = vmatprep.subr.bf16.mxu0 0
      %1385 = vmatpush1.bf16.msra.mxu0 0
      %1386 = vmatprep.subr.bf16.mxu0 0
      %1387 = vmatpush1.bf16.msra.mxu0 0
      %1388 = vmatprep.subr.bf16.mxu0 0
      %1389 = vmatpush1.bf16.msra.mxu0 0
      %1390 = vmatprep.subr.bf16.mxu0 0
      %1391 = vmatpush1.bf16.msra.mxu0 0
      %1392 = vmatprep.subr.bf16.mxu0 0
      %1393 = vmatpush1.bf16.msra.mxu0 0
      %1394 = vmatprep.subr.bf16.mxu0 0
      %1395 = vmatpush1.bf16.msra.mxu0 0
      %1396 = vmatprep.mubr.bf16.mxu0 0
      %1397 = vmatmul.mubr.bf16.gmra.mrb[0].mxu0 %v1297
      %v1398 = vpop.f32.mrb[0].mxu0
      %v1399 = vadd.f32 0.0, %v1398
      %v1400 = vpop.f32.mrb[0].mxu0
      %v1401 = vpop.f32.mrb[0].mxu0
      %v1402 = vadd.f32 0.0, %v1401
      %v1403 = vpop.f32.mrb[0].mxu0
      %1404 = vmatprep.mubr.bf16.mxu0 0
      %1405 = vmatmul.mubr.bf16.gmra.mrb[0].mxu0 %v1298
      %v1406 = vpop.f32.mrb[0].mxu0
      %v1407 = vadd.f32 0.0, %v1406
      %v1408 = vpop.f32.mrb[0].mxu0
      %v1409 = vpop.f32.mrb[0].mxu0
      %v1410 = vadd.f32 0.0, %v1409
      %v1411 = vpop.f32.mrb[0].mxu0
      %1412 = vdwg.mxu0
      %v1413 = vadd.f32 %v1289, %v1399
      %v1414 = vadd.f32 %v1290, %v1402
      %v1415 = vadd.f32 %v1291, %v1407
      %v1416 = vadd.f32 %v1292, %v1410
      %v1417 = vxor.u32 %v1413, 2147483648
      %v1418 = vxor.u32 %v1414, 2147483648
      %v1419 = vxor.u32 %v1415, 2147483648
      %v1420 = vxor.u32 %v1416, 2147483648
      %v1421 = vmul.f32 %v1417, 1.442695
      %v1422 = vpow.pop %v1421
      %v1423 = vmul.f32 %v1418, 1.442695
      %v1424 = vpow.pop %v1423
      %v1425 = vmul.f32 %v1419, 1.442695
      %v1426 = vpow.pop %v1425
      %v1427 = vmul.f32 %v1420, 1.442695
      %v1428 = vpow.pop %v1427
      %v1429 = vadd.f32 %v1422, 1.0
      %v1430 = vadd.f32 %v1424, 1.0
      %v1431 = vadd.f32 %v1426, 1.0
      %v1432 = vadd.f32 %v1428, 1.0
      %v1433 = vrcp.pop %v1429
      %v1434 = vmul.f32 1.0, %v1433
      %v1435 = vrcp.pop %v1430
      %v1436 = vmul.f32 1.0, %v1435
      %v1437 = vrcp.pop %v1431
      %v1438 = vmul.f32 1.0, %v1437
      %v1439 = vrcp.pop %v1432
      %v1440 = vmul.f32 1.0, %v1439
      %v1441 = vld [vmem:[%s4] sm:$0xff]
      %v1443 = vsel %vm480, %v509, 0
      %1445 = vmatprep.subr.mxu0 0.0
      %1446 = vmatpush1.msra.mxu0 %v1441
      %1447 = vmatprep.subr.mxu0 0.0
      %1448 = vmatpush1.msra.mxu0 0.0
      %1449 = vmatprep.subr.mxu0 0.0
      %1450 = vmatpush1.msra.mxu0 0.0
      %1451 = vmatprep.subr.mxu0 0.0
      %1452 = vmatpush1.msra.mxu0 0.0
      %1453 = vmatprep.subr.mxu0 0.0
      %1454 = vmatpush1.msra.mxu0 0.0
      %1455 = vmatprep.subr.mxu0 0.0
      %1456 = vmatpush1.msra.mxu0 0.0
      %1457 = vmatprep.subr.mxu0 0.0
      %1458 = vmatpush1.msra.mxu0 0.0
      %1459 = vmatprep.subr.mxu0 0.0
      %1460 = vmatpush1.msra.mxu0 0.0
      %1461 = vmatprep.subr.mxu0 0.0
      %1462 = vmatpush1.msra.mxu0 0.0
      %1463 = vmatprep.subr.mxu0 0.0
      %1464 = vmatpush1.msra.mxu0 0.0
      %1465 = vmatprep.subr.mxu0 0.0
      %1466 = vmatpush1.msra.mxu0 0.0
      %1467 = vmatprep.subr.mxu0 0.0
      %1468 = vmatpush1.msra.mxu0 0.0
      %1469 = vmatprep.subr.mxu0 0.0
      %1470 = vmatpush1.msra.mxu0 0.0
      %1471 = vmatprep.subr.mxu0 0.0
      %1472 = vmatpush1.msra.mxu0 0.0
      %1473 = vmatprep.subr.mxu0 0.0
      %1474 = vmatpush1.msra.mxu0 0.0
      %1475 = vmatprep.subr.mxu0 0.0
      %1476 = vmatpush1.msra.mxu0 0.0
      %1477 = vmatprep.subr.mxu0 0.0
      %1478 = vmatpush1.msra.mxu0 0.0
      %1479 = vmatprep.subr.mxu0 0.0
      %1480 = vmatpush1.msra.mxu0 0.0
      %1481 = vmatprep.subr.mxu0 0.0
      %1482 = vmatpush1.msra.mxu0 0.0
      %1483 = vmatprep.subr.mxu0 0.0
      %1484 = vmatpush1.msra.mxu0 0.0
      %1485 = vmatprep.subr.mxu0 0.0
      %1486 = vmatpush1.msra.mxu0 0.0
      %1487 = vmatprep.subr.mxu0 0.0
      %1488 = vmatpush1.msra.mxu0 0.0
      %1489 = vmatprep.subr.mxu0 0.0
      %1490 = vmatpush1.msra.mxu0 0.0
      %1491 = vmatprep.subr.mxu0 0.0
      %1492 = vmatpush1.msra.mxu0 0.0
      %1493 = vmatprep.subr.mxu0 0.0
      %1494 = vmatpush1.msra.mxu0 0.0
      %1495 = vmatprep.subr.mxu0 0.0
      %1496 = vmatpush1.msra.mxu0 0.0
      %1497 = vmatprep.subr.mxu0 0.0
      %1498 = vmatpush1.msra.mxu0 0.0
      %1499 = vmatprep.subr.mxu0 0.0
      %1500 = vmatpush1.msra.mxu0 0.0
      %1501 = vmatprep.subr.mxu0 0.0
      %1502 = vmatpush1.msra.mxu0 0.0
      %1503 = vmatprep.subr.mxu0 0.0
      %1504 = vmatpush1.msra.mxu0 0.0
      %1505 = vmatprep.subr.mxu0 0.0
      %1506 = vmatpush1.msra.mxu0 0.0
      %1507 = vmatprep.subr.mxu0 0.0
      %1508 = vmatpush1.msra.mxu0 0.0
      %1509 = vmatprep.mubr.f32.mxu0 0.0
      %1510 = vmatmul.mubr.f32.gmra.mrb[0].mxu0 %v1443
      %v1511 = vpop.f32.mrb[0].mxu0
      %v1512 = vadd.f32 0.0, %v1511
      %v1513 = vpop.f32.mrb[0].mxu0
      %1514 = vdwg.mxu0
      %v1517 = vunpack.c.l.s4 1966171168
      %v1518 = vunpack.c.0.s8 %v1517
      %v1519 = vlaneseq
      %v1520 = vshrl.u32 %v1519, 7
      %v1521 = vsub.s32 %v1518, %v1520
      %v1522 = vrot.slane %v1512, %v1521
      %v1523 = vcombine.high %v1522, %v1522
      %v1525 = vunpack.c.l.s4 1966171168
      %v1526 = vunpack.c.0.s8 %v1525
      %v1527 = vlaneseq
      %v1528 = vshrl.u32 %v1527, 7
      %v1529 = vsub.s32 %v1526, %v1528
      %v1530 = vrot.slane %v1522, %v1529
      %v1532 = vunpack.c.l.s4 1966171168
      %v1533 = vunpack.c.0.s8 %v1532
      %v1534 = vlaneseq
      %v1535 = vshrl.u32 %v1534, 7
      %v1536 = vsub.s32 %v1533, %v1535
      %v1537 = vrot.slane %v1523, %v1536
      %v1538 = vlaneseq
      %v1539 = vshrl.u32 %v1538, 7
      %v1540 = vsub.s32 0, %v1539
      %v1541 = vrot.slane %v1530, %v1540
      %v1542 = vlaneseq
      %v1543 = vshrl.u32 %v1542, 7
      %v1544 = vsub.s32 0, %v1543
      %v1545 = vrot.slane %v1537, %v1544
      %v1548 = vmul.f32 %v331, %v1541
      %v1549 = vmul.f32 %v332, %v1541
      %v1550 = vmul.f32 %v333, %v1545
      %v1551 = vmul.f32 %v334, %v1545
      %v1552 = vlaneseq
      %vm1553 = vcmp.ge.s32.totalorder %v1552, 0
      %vm1554 = vcmp.lt.s32.totalorder %v1552, 256
      %vm1555 = vmand %vm1553, %vm1554
      %1556 = vst.msk [vmem:[#allocation2] ss:$8 sm:$0x3] %vm1555, 0.0
      %1557 = vst.msk [vmem:[#allocation2] ss:$8 sm:$0x0] %vm1555, 0.0
      %s1558 = scalar_lea.vmem [#allocation2], 48
      %1559 = vst.msk [vmem:[%s1558] ss:$8 sm:$0x3] %vm1555, 0.0
      %1560 = vst.msk [vmem:[%s1558] ss:$8 sm:$0x0] %vm1555, 0.0
      %s1561 = scalar_lea.vmem [#allocation2], 33
      %1562 = vst.msk [vmem:[%s1561] ss:$8 sm:$0x3] %vm1555, 0.0
      %1563 = vst.msk [vmem:[%s1561] ss:$8 sm:$0x0] %vm1555, 0.0
      %s1564 = scalar_lea.vmem [#allocation2], 81
      %1565 = vst.msk [vmem:[%s1564] ss:$8 sm:$0x3] %vm1555, 0.0
      %1566 = vst.msk [vmem:[%s1564] ss:$8 sm:$0x0] %vm1555, 0.0
      %vm1571 = vcmask 1040384
      %v1572 = vrot.slane %v327, 7
      %v1573 = vrot.slane %v328, 7
      %v1574 = vsel %vm1571, %v1572, %v1573
      %v1575 = vrot.slane %v329, 7
      %v1576 = vrot.slane %v330, 7
      %v1577 = vsel %vm1571, %v1575, %v1576
      %1584 = vst [vmem:[#allocation2] sm:$0xfe] %v1572
      %1585 = vst [vmem:[#allocation2 + $0x10] sm:$0xff] %v1574
      %1586 = vst [vmem:[#allocation2 + $0x20] sm:$0x1] %v1573
      %1587 = vst [vmem:[#allocation2 + $0x30] sm:$0xfe] %v1575
      %1588 = vst [vmem:[#allocation2 + $0x40] sm:$0xff] %v1577
      %1589 = vst [vmem:[#allocation2 + $0x50] sm:$0x1] %v1576
      %v1594 = vrot.slane %v1548, 7
      %v1595 = vrot.slane %v1549, 7
      %v1596 = vsel %vm1571, %v1594, %v1595
      %v1597 = vrot.slane %v1550, 7
      %v1598 = vrot.slane %v1551, 7
      %v1599 = vsel %vm1571, %v1597, %v1598
      %1606 = vst [vmem:[#allocation2 + $0x8] sm:$0xfe] %v1594
      %1607 = vst [vmem:[#allocation2 + $0x18] sm:$0xff] %v1596
      %1608 = vst [vmem:[#allocation2 + $0x28] sm:$0x1] %v1595
      %1609 = vst [vmem:[#allocation2 + $0x38] sm:$0xfe] %v1597
      %1610 = vst [vmem:[#allocation2 + $0x48] sm:$0xff] %v1599
      %1611 = vst [vmem:[#allocation2 + $0x58] sm:$0x1] %v1598
      %v1612 = vld [vmem:[%s7] sm:$0x1]
      %v1614 = vlaneseq
      %v1615 = vshrl.u32 %v1614, 7
      %v1616 = vsub.s32 0, %v1615
      %v1617 = vrot.slane %v1612, %v1616
      %v1619 = vld [vmem:[#allocation2] sm:$0xff]
      %v1620 = vld [vmem:[#allocation2 + $0x8] sm:$0xff]
      %v1621 = vld [vmem:[#allocation2 + $0x10] sm:$0xff]
      %v1622 = vld [vmem:[#allocation2 + $0x18] sm:$0xff]
      %v1623 = vld [vmem:[#allocation2 + $0x30] sm:$0xff]
      %v1624 = vld [vmem:[#allocation2 + $0x38] sm:$0xff]
      %v1625 = vld [vmem:[#allocation2 + $0x40] sm:$0xff]
      %v1626 = vld [vmem:[#allocation2 + $0x48] sm:$0xff]
      %v1627 = vpack.c.bf16 %v1621, %v1619
      %v1628 = vpack.c.bf16 %v1622, %v1620
      %v1629 = vpack.c.bf16 %v1625, %v1623
      %v1630 = vpack.c.bf16 %v1626, %v1624
      %v1631 = vld [vmem:[%s6] sm:$0xf]
      %v1632 = vld [vmem:[%s6 + $0x4] sm:$0xf]
      %v1633 = vld [vmem:[%s6 + $0x8] sm:$0xf]
      %v1634 = vld [vmem:[%s6 + $0xc] sm:$0xf]
      %v1635 = vld [vmem:[%s6 + $0x10] sm:$0xf]
      %v1636 = vld [vmem:[%s6 + $0x14] sm:$0xf]
      %v1637 = vld [vmem:[%s6 + $0x18] sm:$0xf]
      %v1638 = vld [vmem:[%s6 + $0x1c] sm:$0xf]
      %v1639 = vld [vmem:[%s6 + $0x20] sm:$0xf]
      %v1640 = vld [vmem:[%s6 + $0x24] sm:$0xf]
      %v1641 = vld [vmem:[%s6 + $0x28] sm:$0xf]
      %v1642 = vld [vmem:[%s6 + $0x2c] sm:$0xf]
      %v1643 = vld [vmem:[%s6 + $0x30] sm:$0xf]
      %v1644 = vld [vmem:[%s6 + $0x34] sm:$0xf]
      %v1645 = vld [vmem:[%s6 + $0x38] sm:$0xf]
      %v1646 = vld [vmem:[%s6 + $0x3c] sm:$0xf]
      %v1647 = vld [vmem:[%s6 + $0x40] sm:$0xf]
      %v1648 = vld [vmem:[%s6 + $0x44] sm:$0xf]
      %v1649 = vld [vmem:[%s6 + $0x48] sm:$0xf]
      %v1650 = vld [vmem:[%s6 + $0x4c] sm:$0xf]
      %v1651 = vld [vmem:[%s6 + $0x50] sm:$0xf]
      %v1652 = vld [vmem:[%s6 + $0x54] sm:$0xf]
      %v1653 = vld [vmem:[%s6 + $0x58] sm:$0xf]
      %v1654 = vld [vmem:[%s6 + $0x5c] sm:$0xf]
      %v1655 = vld [vmem:[%s6 + $0x60] sm:$0xf]
      %v1656 = vld [vmem:[%s6 + $0x64] sm:$0xf]
      %v1657 = vld [vmem:[%s6 + $0x68] sm:$0xf]
      %v1658 = vld [vmem:[%s6 + $0x6c] sm:$0xf]
      %v1659 = vld [vmem:[%s6 + $0x70] sm:$0xf]
      %v1660 = vld [vmem:[%s6 + $0x74] sm:$0xf]
      %v1661 = vld [vmem:[%s6 + $0x78] sm:$0xf]
      %v1662 = vld [vmem:[%s6 + $0x7c] sm:$0xf]
      %v1695 = vunpack.c.l.b16 %v1631
      %v1696 = vunpack.c.l.b16 %v1632
      %v1697 = vunpack.c.l.b16 %v1633
      %v1698 = vunpack.c.l.b16 %v1634
      %v1699 = vunpack.c.l.b16 %v1635
      %v1700 = vunpack.c.l.b16 %v1636
      %v1701 = vunpack.c.l.b16 %v1637
      %v1702 = vunpack.c.l.b16 %v1638
      %v1703 = vunpack.c.l.b16 %v1639
      %v1704 = vunpack.c.l.b16 %v1640
      %v1705 = vunpack.c.l.b16 %v1641
      %v1706 = vunpack.c.l.b16 %v1642
      %v1707 = vunpack.c.l.b16 %v1643
      %v1708 = vunpack.c.l.b16 %v1644
      %v1709 = vunpack.c.l.b16 %v1645
      %v1710 = vunpack.c.l.b16 %v1646
      %v1711 = vunpack.c.l.b16 %v1647
      %v1712 = vunpack.c.l.b16 %v1648
      %v1713 = vunpack.c.l.b16 %v1649
      %v1714 = vunpack.c.l.b16 %v1650
      %v1715 = vunpack.c.l.b16 %v1651
      %v1716 = vunpack.c.l.b16 %v1652
      %v1717 = vunpack.c.l.b16 %v1653
      %v1718 = vunpack.c.l.b16 %v1654
      %v1719 = vunpack.c.l.b16 %v1655
      %v1720 = vunpack.c.l.b16 %v1656
      %v1721 = vunpack.c.l.b16 %v1657
      %v1722 = vunpack.c.l.b16 %v1658
      %v1723 = vunpack.c.l.b16 %v1659
      %v1724 = vunpack.c.l.b16 %v1660
      %v1725 = vunpack.c.l.b16 %v1661
      %v1726 = vunpack.c.l.b16 %v1662
      %v1727 = vpack.c.b16 %v1696, %v1695
      %v1728 = vpack.c.b16 %v1698, %v1697
      %v1729 = vpack.c.b16 %v1700, %v1699
      %v1730 = vpack.c.b16 %v1702, %v1701
      %v1731 = vpack.c.b16 %v1704, %v1703
      %v1732 = vpack.c.b16 %v1706, %v1705
      %v1733 = vpack.c.b16 %v1708, %v1707
      %v1734 = vpack.c.b16 %v1710, %v1709
      %v1735 = vpack.c.b16 %v1712, %v1711
      %v1736 = vpack.c.b16 %v1714, %v1713
      %v1737 = vpack.c.b16 %v1716, %v1715
      %v1738 = vpack.c.b16 %v1718, %v1717
      %v1739 = vpack.c.b16 %v1720, %v1719
      %v1740 = vpack.c.b16 %v1722, %v1721
      %v1741 = vpack.c.b16 %v1724, %v1723
      %v1742 = vpack.c.b16 %v1726, %v1725
      %1759 = vmatprep.subr.bf16.mxu0 0
      %1760 = vmatpush1.bf16.msra.mxu0 %v1727
      %1761 = vmatprep.subr.bf16.mxu0 0
      %1762 = vmatpush1.bf16.msra.mxu0 %v1728
      %1763 = vmatprep.subr.bf16.mxu0 0
      %1764 = vmatpush1.bf16.msra.mxu0 %v1729
      %1765 = vmatprep.subr.bf16.mxu0 0
      %1766 = vmatpush1.bf16.msra.mxu0 %v1730
      %1767 = vmatprep.subr.bf16.mxu0 0
      %1768 = vmatpush1.bf16.msra.mxu0 %v1731
      %1769 = vmatprep.subr.bf16.mxu0 0
      %1770 = vmatpush1.bf16.msra.mxu0 %v1732
      %1771 = vmatprep.subr.bf16.mxu0 0
      %1772 = vmatpush1.bf16.msra.mxu0 %v1733
      %1773 = vmatprep.subr.bf16.mxu0 0
      %1774 = vmatpush1.bf16.msra.mxu0 %v1734
      %1775 = vmatprep.subr.bf16.mxu0 0
      %1776 = vmatpush1.bf16.msra.mxu0 %v1735
      %1777 = vmatprep.subr.bf16.mxu0 0
      %1778 = vmatpush1.bf16.msra.mxu0 %v1736
      %1779 = vmatprep.subr.bf16.mxu0 0
      %1780 = vmatpush1.bf16.msra.mxu0 %v1737
      %1781 = vmatprep.subr.bf16.mxu0 0
      %1782 = vmatpush1.bf16.msra.mxu0 %v1738
      %1783 = vmatprep.subr.bf16.mxu0 0
      %1784 = vmatpush1.bf16.msra.mxu0 %v1739
      %1785 = vmatprep.subr.bf16.mxu0 0
      %1786 = vmatpush1.bf16.msra.mxu0 %v1740
      %1787 = vmatprep.subr.bf16.mxu0 0
      %1788 = vmatpush1.bf16.msra.mxu0 %v1741
      %1789 = vmatprep.subr.bf16.mxu0 0
      %1790 = vmatpush1.bf16.msra.mxu0 %v1742
      %1791 = vmatprep.mubr.bf16.mxu0 %v1628
      %1792 = vmatmul.mubr.bf16.gmra.mrb[0].mxu0 %v1627
      %v1793 = vpop.f32.mrb[0].mxu0
      %v1794 = vadd.f32 0.0, %v1793
      %v1795 = vpop.f32.mrb[0].mxu0
      %v1796 = vpop.f32.mrb[0].mxu0
      %v1797 = vadd.f32 0.0, %v1796
      %v1798 = vpop.f32.mrb[0].mxu0
      %1799 = vmatprep.mubr.bf16.mxu0 %v1630
      %1800 = vmatmul.mubr.bf16.gmra.mrb[0].mxu0 %v1629
      %v1801 = vpop.f32.mrb[0].mxu0
      %v1802 = vadd.f32 0.0, %v1801
      %v1803 = vpop.f32.mrb[0].mxu0
      %v1804 = vpop.f32.mrb[0].mxu0
      %v1805 = vadd.f32 0.0, %v1804
      %v1806 = vpop.f32.mrb[0].mxu0
      %1807 = vdwg.mxu0
      %v1808 = vadd.f32 %v1617, %v1794
      %v1809 = vadd.f32 %v1617, %v1797
      %v1810 = vadd.f32 %v1617, %v1802
      %v1811 = vadd.f32 %v1617, %v1805
      %v1812 = vld [vmem:[#allocation2] sm:$0xfe]
      %v1813 = vld [vmem:[#allocation2 + $0x8] sm:$0xfe]
      %v1814 = vld [vmem:[#allocation2 + $0x10] sm:$0xff]
      %v1815 = vld [vmem:[#allocation2 + $0x18] sm:$0xff]
      %v1816 = vld [vmem:[#allocation2 + $0x20] sm:$0x1]
      %v1817 = vld [vmem:[#allocation2 + $0x28] sm:$0x1]
      %v1818 = vld [vmem:[#allocation2 + $0x30] sm:$0xfe]
      %v1819 = vld [vmem:[#allocation2 + $0x38] sm:$0xfe]
      %v1820 = vld [vmem:[#allocation2 + $0x40] sm:$0xff]
      %v1821 = vld [vmem:[#allocation2 + $0x48] sm:$0xff]
      %v1822 = vld [vmem:[#allocation2 + $0x50] sm:$0x1]
      %v1823 = vld [vmem:[#allocation2 + $0x58] sm:$0x1]
      %vm1836 = vcmask 1046528
      %v1837 = vrot.slane %v1812, 1
      %v1838 = vrot.slane %v1814, 1
      %v1839 = vsel %vm1836, %v1837, %v1838
      %v1840 = vrot.slane %v1813, 1
      %v1841 = vrot.slane %v1815, 1
      %v1842 = vsel %vm1836, %v1840, %v1841
      %v1843 = vrot.slane %v1816, 1
      %v1844 = vsel %vm1836, %v1838, %v1843
      %v1845 = vrot.slane %v1817, 1
      %v1846 = vsel %vm1836, %v1841, %v1845
      %v1847 = vrot.slane %v1818, 1
      %v1848 = vrot.slane %v1820, 1
      %v1849 = vsel %vm1836, %v1847, %v1848
      %v1850 = vrot.slane %v1819, 1
      %v1851 = vrot.slane %v1821, 1
      %v1852 = vsel %vm1836, %v1850, %v1851
      %v1853 = vrot.slane %v1822, 1
      %v1854 = vsel %vm1836, %v1848, %v1853
      %v1855 = vrot.slane %v1823, 1
      %v1856 = vsel %vm1836, %v1851, %v1855
      %v1865 = vpack.c.bf16 %v1844, %v1839
      %v1866 = vpack.c.bf16 %v1846, %v1842
      %v1867 = vpack.c.bf16 %v1854, %v1849
      %v1868 = vpack.c.bf16 %v1856, %v1852
      %s1869 = scalar_lea.vmem %s6, 128
      %v1870 = vld [vmem:[%s1869] sm:$0xf]
      %v1871 = vld [vmem:[%s1869 + $0x4] sm:$0xf]
      %v1872 = vld [vmem:[%s1869 + $0x8] sm:$0xf]
      %v1873 = vld [vmem:[%s1869 + $0xc] sm:$0xf]
      %v1874 = vld [vmem:[%s1869 + $0x10] sm:$0xf]
      %v1875 = vld [vmem:[%s1869 + $0x14] sm:$0xf]
      %v1876 = vld [vmem:[%s1869 + $0x18] sm:$0xf]
      %v1877 = vld [vmem:[%s1869 + $0x1c] sm:$0xf]
      %v1878 = vld [vmem:[%s1869 + $0x20] sm:$0xf]
      %v1879 = vld [vmem:[%s1869 + $0x24] sm:$0xf]
      %v1880 = vld [vmem:[%s1869 + $0x28] sm:$0xf]
      %v1881 = vld [vmem:[%s1869 + $0x2c] sm:$0xf]
      %v1882 = vld [vmem:[%s1869 + $0x30] sm:$0xf]
      %v1883 = vld [vmem:[%s1869 + $0x34] sm:$0xf]
      %v1884 = vld [vmem:[%s1869 + $0x38] sm:$0xf]
      %v1885 = vld [vmem:[%s1869 + $0x3c] sm:$0xf]
      %v1886 = vld [vmem:[%s1869 + $0x40] sm:$0xf]
      %v1887 = vld [vmem:[%s1869 + $0x44] sm:$0xf]
      %v1888 = vld [vmem:[%s1869 + $0x48] sm:$0xf]
      %v1889 = vld [vmem:[%s1869 + $0x4c] sm:$0xf]
      %v1890 = vld [vmem:[%s1869 + $0x50] sm:$0xf]
      %v1891 = vld [vmem:[%s1869 + $0x54] sm:$0xf]
      %v1892 = vld [vmem:[%s1869 + $0x58] sm:$0xf]
      %v1893 = vld [vmem:[%s1869 + $0x5c] sm:$0xf]
      %v1894 = vld [vmem:[%s1869 + $0x60] sm:$0xf]
      %v1895 = vld [vmem:[%s1869 + $0x64] sm:$0xf]
      %v1896 = vld [vmem:[%s1869 + $0x68] sm:$0xf]
      %v1897 = vld [vmem:[%s1869 + $0x6c] sm:$0xf]
      %v1898 = vld [vmem:[%s1869 + $0x70] sm:$0xf]
      %v1899 = vld [vmem:[%s1869 + $0x74] sm:$0xf]
      %v1900 = vld [vmem:[%s1869 + $0x78] sm:$0xf]
      %v1901 = vld [vmem:[%s1869 + $0x7c] sm:$0xf]
      %v1934 = vunpack.c.l.b16 %v1870
      %v1935 = vunpack.c.l.b16 %v1871
      %v1936 = vunpack.c.l.b16 %v1872
      %v1937 = vunpack.c.l.b16 %v1873
      %v1938 = vunpack.c.l.b16 %v1874
      %v1939 = vunpack.c.l.b16 %v1875
      %v1940 = vunpack.c.l.b16 %v1876
      %v1941 = vunpack.c.l.b16 %v1877
      %v1942 = vunpack.c.l.b16 %v1878
      %v1943 = vunpack.c.l.b16 %v1879
      %v1944 = vunpack.c.l.b16 %v1880
      %v1945 = vunpack.c.l.b16 %v1881
      %v1946 = vunpack.c.l.b16 %v1882
      %v1947 = vunpack.c.l.b16 %v1883
      %v1948 = vunpack.c.l.b16 %v1884
      %v1949 = vunpack.c.l.b16 %v1885
      %v1950 = vunpack.c.l.b16 %v1886
      %v1951 = vunpack.c.l.b16 %v1887
      %v1952 = vunpack.c.l.b16 %v1888
      %v1953 = vunpack.c.l.b16 %v1889
      %v1954 = vunpack.c.l.b16 %v1890
      %v1955 = vunpack.c.l.b16 %v1891
      %v1956 = vunpack.c.l.b16 %v1892
      %v1957 = vunpack.c.l.b16 %v1893
      %v1958 = vunpack.c.l.b16 %v1894
      %v1959 = vunpack.c.l.b16 %v1895
      %v1960 = vunpack.c.l.b16 %v1896
      %v1961 = vunpack.c.l.b16 %v1897
      %v1962 = vunpack.c.l.b16 %v1898
      %v1963 = vunpack.c.l.b16 %v1899
      %v1964 = vunpack.c.l.b16 %v1900
      %v1965 = vunpack.c.l.b16 %v1901
      %v1966 = vpack.c.b16 %v1935, %v1934
      %v1967 = vpack.c.b16 %v1937, %v1936
      %v1968 = vpack.c.b16 %v1939, %v1938
      %v1969 = vpack.c.b16 %v1941, %v1940
      %v1970 = vpack.c.b16 %v1943, %v1942
      %v1971 = vpack.c.b16 %v1945, %v1944
      %v1972 = vpack.c.b16 %v1947, %v1946
      %v1973 = vpack.c.b16 %v1949, %v1948
      %v1974 = vpack.c.b16 %v1951, %v1950
      %v1975 = vpack.c.b16 %v1953, %v1952
      %v1976 = vpack.c.b16 %v1955, %v1954
      %v1977 = vpack.c.b16 %v1957, %v1956
      %v1978 = vpack.c.b16 %v1959, %v1958
      %v1979 = vpack.c.b16 %v1961, %v1960
      %v1980 = vpack.c.b16 %v1963, %v1962
      %v1981 = vpack.c.b16 %v1965, %v1964
      %1998 = vmatprep.subr.bf16.mxu0 0
      %1999 = vmatpush1.bf16.msra.mxu0 %v1966
      %2000 = vmatprep.subr.bf16.mxu0 0
      %2001 = vmatpush1.bf16.msra.mxu0 %v1967
      %2002 = vmatprep.subr.bf16.mxu0 0
      %2003 = vmatpush1.bf16.msra.mxu0 %v1968
      %2004 = vmatprep.subr.bf16.mxu0 0
      %2005 = vmatpush1.bf16.msra.mxu0 %v1969
      %2006 = vmatprep.subr.bf16.mxu0 0
      %2007 = vmatpush1.bf16.msra.mxu0 %v1970
      %2008 = vmatprep.subr.bf16.mxu0 0
      %2009 = vmatpush1.bf16.msra.mxu0 %v1971
      %2010 = vmatprep.subr.bf16.mxu0 0
      %2011 = vmatpush1.bf16.msra.mxu0 %v1972
      %2012 = vmatprep.subr.bf16.mxu0 0
      %2013 = vmatpush1.bf16.msra.mxu0 %v1973
      %2014 = vmatprep.subr.bf16.mxu0 0
      %2015 = vmatpush1.bf16.msra.mxu0 %v1974
      %2016 = vmatprep.subr.bf16.mxu0 0
      %2017 = vmatpush1.bf16.msra.mxu0 %v1975
      %2018 = vmatprep.subr.bf16.mxu0 0
      %2019 = vmatpush1.bf16.msra.mxu0 %v1976
      %2020 = vmatprep.subr.bf16.mxu0 0
      %2021 = vmatpush1.bf16.msra.mxu0 %v1977
      %2022 = vmatprep.subr.bf16.mxu0 0
      %2023 = vmatpush1.bf16.msra.mxu0 %v1978
      %2024 = vmatprep.subr.bf16.mxu0 0
      %2025 = vmatpush1.bf16.msra.mxu0 %v1979
      %2026 = vmatprep.subr.bf16.mxu0 0
      %2027 = vmatpush1.bf16.msra.mxu0 %v1980
      %2028 = vmatprep.subr.bf16.mxu0 0
      %2029 = vmatpush1.bf16.msra.mxu0 %v1981
      %2030 = vmatprep.mubr.bf16.mxu0 %v1866
      %2031 = vmatmul.mubr.bf16.gmra.mrb[0].mxu0 %v1865
      %v2032 = vpop.f32.mrb[0].mxu0
      %v2033 = vadd.f32 0.0, %v2032
      %v2034 = vpop.f32.mrb[0].mxu0
      %v2035 = vpop.f32.mrb[0].mxu0
      %v2036 = vadd.f32 0.0, %v2035
      %v2037 = vpop.f32.mrb[0].mxu0
      %2038 = vmatprep.mubr.bf16.mxu0 %v1868
      %2039 = vmatmul.mubr.bf16.gmra.mrb[0].mxu0 %v1867
      %v2040 = vpop.f32.mrb[0].mxu0
      %v2041 = vadd.f32 0.0, %v2040
      %v2042 = vpop.f32.mrb[0].mxu0
      %v2043 = vpop.f32.mrb[0].mxu0
      %v2044 = vadd.f32 0.0, %v2043
      %v2045 = vpop.f32.mrb[0].mxu0
      %2046 = vdwg.mxu0
      %v2047 = vadd.f32 %v1808, %v2033
      %v2048 = vadd.f32 %v1809, %v2036
      %v2049 = vadd.f32 %v1810, %v2041
      %v2050 = vadd.f32 %v1811, %v2044
      %v2051 = vld [vmem:[#allocation2] sm:$0xfc]
      %v2052 = vld [vmem:[#allocation2 + $0x8] sm:$0xfc]
      %v2053 = vld [vmem:[#allocation2 + $0x20] sm:$0x3]
      %v2054 = vld [vmem:[#allocation2 + $0x28] sm:$0x3]
      %v2055 = vld [vmem:[#allocation2 + $0x30] sm:$0xfc]
      %v2056 = vld [vmem:[#allocation2 + $0x38] sm:$0xfc]
      %v2057 = vld [vmem:[#allocation2 + $0x50] sm:$0x3]
      %v2058 = vld [vmem:[#allocation2 + $0x58] sm:$0x3]
      %vm2067 = vcmask 1045504
      %v2068 = vrot.slane %v2051, 2
      %v2069 = vrot.slane %v1814, 2
      %v2070 = vsel %vm2067, %v2068, %v2069
      %v2071 = vrot.slane %v2052, 2
      %v2072 = vrot.slane %v1815, 2
      %v2073 = vsel %vm2067, %v2071, %v2072
      %v2074 = vrot.slane %v2053, 2
      %v2075 = vsel %vm2067, %v2069, %v2074
      %v2076 = vrot.slane %v2054, 2
      %v2077 = vsel %vm2067, %v2072, %v2076
      %v2078 = vrot.slane %v2055, 2
      %v2079 = vrot.slane %v1820, 2
      %v2080 = vsel %vm2067, %v2078, %v2079
      %v2081 = vrot.slane %v2056, 2
      %v2082 = vrot.slane %v1821, 2
      %v2083 = vsel %vm2067, %v2081, %v2082
      %v2084 = vrot.slane %v2057, 2
      %v2085 = vsel %vm2067, %v2079, %v2084
      %v2086 = vrot.slane %v2058, 2
      %v2087 = vsel %vm2067, %v2082, %v2086
      %v2096 = vpack.c.bf16 %v2075, %v2070
      %v2097 = vpack.c.bf16 %v2077, %v2073
      %v2098 = vpack.c.bf16 %v2085, %v2080
      %v2099 = vpack.c.bf16 %v2087, %v2083
      %s2100 = scalar_lea.vmem %s6, 256
      %v2101 = vld [vmem:[%s2100] sm:$0xf]
      %v2102 = vld [vmem:[%s2100 + $0x4] sm:$0xf]
      %v2103 = vld [vmem:[%s2100 + $0x8] sm:$0xf]
      %v2104 = vld [vmem:[%s2100 + $0xc] sm:$0xf]
      %v2105 = vld [vmem:[%s2100 + $0x10] sm:$0xf]
      %v2106 = vld [vmem:[%s2100 + $0x14] sm:$0xf]
      %v2107 = vld [vmem:[%s2100 + $0x18] sm:$0xf]
      %v2108 = vld [vmem:[%s2100 + $0x1c] sm:$0xf]
      %v2109 = vld [vmem:[%s2100 + $0x20] sm:$0xf]
      %v2110 = vld [vmem:[%s2100 + $0x24] sm:$0xf]
      %v2111 = vld [vmem:[%s2100 + $0x28] sm:$0xf]
      %v2112 = vld [vmem:[%s2100 + $0x2c] sm:$0xf]
      %v2113 = vld [vmem:[%s2100 + $0x30] sm:$0xf]
      %v2114 = vld [vmem:[%s2100 + $0x34] sm:$0xf]
      %v2115 = vld [vmem:[%s2100 + $0x38] sm:$0xf]
      %v2116 = vld [vmem:[%s2100 + $0x3c] sm:$0xf]
      %v2117 = vld [vmem:[%s2100 + $0x40] sm:$0xf]
      %v2118 = vld [vmem:[%s2100 + $0x44] sm:$0xf]
      %v2119 = vld [vmem:[%s2100 + $0x48] sm:$0xf]
      %v2120 = vld [vmem:[%s2100 + $0x4c] sm:$0xf]
      %v2121 = vld [vmem:[%s2100 + $0x50] sm:$0xf]
      %v2122 = vld [vmem:[%s2100 + $0x54] sm:$0xf]
      %v2123 = vld [vmem:[%s2100 + $0x58] sm:$0xf]
      %v2124 = vld [vmem:[%s2100 + $0x5c] sm:$0xf]
      %v2125 = vld [vmem:[%s2100 + $0x60] sm:$0xf]
      %v2126 = vld [vmem:[%s2100 + $0x64] sm:$0xf]
      %v2127 = vld [vmem:[%s2100 + $0x68] sm:$0xf]
      %v2128 = vld [vmem:[%s2100 + $0x6c] sm:$0xf]
      %v2129 = vld [vmem:[%s2100 + $0x70] sm:$0xf]
      %v2130 = vld [vmem:[%s2100 + $0x74] sm:$0xf]
      %v2131 = vld [vmem:[%s2100 + $0x78] sm:$0xf]
      %v2132 = vld [vmem:[%s2100 + $0x7c] sm:$0xf]
      %v2165 = vunpack.c.l.b16 %v2101
      %v2166 = vunpack.c.l.b16 %v2102
      %v2167 = vunpack.c.l.b16 %v2103
      %v2168 = vunpack.c.l.b16 %v2104
      %v2169 = vunpack.c.l.b16 %v2105
      %v2170 = vunpack.c.l.b16 %v2106
      %v2171 = vunpack.c.l.b16 %v2107
      %v2172 = vunpack.c.l.b16 %v2108
      %v2173 = vunpack.c.l.b16 %v2109
      %v2174 = vunpack.c.l.b16 %v2110
      %v2175 = vunpack.c.l.b16 %v2111
      %v2176 = vunpack.c.l.b16 %v2112
      %v2177 = vunpack.c.l.b16 %v2113
      %v2178 = vunpack.c.l.b16 %v2114
      %v2179 = vunpack.c.l.b16 %v2115
      %v2180 = vunpack.c.l.b16 %v2116
      %v2181 = vunpack.c.l.b16 %v2117
      %v2182 = vunpack.c.l.b16 %v2118
      %v2183 = vunpack.c.l.b16 %v2119
      %v2184 = vunpack.c.l.b16 %v2120
      %v2185 = vunpack.c.l.b16 %v2121
      %v2186 = vunpack.c.l.b16 %v2122
      %v2187 = vunpack.c.l.b16 %v2123
      %v2188 = vunpack.c.l.b16 %v2124
      %v2189 = vunpack.c.l.b16 %v2125
      %v2190 = vunpack.c.l.b16 %v2126
      %v2191 = vunpack.c.l.b16 %v2127
      %v2192 = vunpack.c.l.b16 %v2128
      %v2193 = vunpack.c.l.b16 %v2129
      %v2194 = vunpack.c.l.b16 %v2130
      %v2195 = vunpack.c.l.b16 %v2131
      %v2196 = vunpack.c.l.b16 %v2132
      %v2197 = vpack.c.b16 %v2166, %v2165
      %v2198 = vpack.c.b16 %v2168, %v2167
      %v2199 = vpack.c.b16 %v2170, %v2169
      %v2200 = vpack.c.b16 %v2172, %v2171
      %v2201 = vpack.c.b16 %v2174, %v2173
      %v2202 = vpack.c.b16 %v2176, %v2175
      %v2203 = vpack.c.b16 %v2178, %v2177
      %v2204 = vpack.c.b16 %v2180, %v2179
      %v2205 = vpack.c.b16 %v2182, %v2181
      %v2206 = vpack.c.b16 %v2184, %v2183
      %v2207 = vpack.c.b16 %v2186, %v2185
      %v2208 = vpack.c.b16 %v2188, %v2187
      %v2209 = vpack.c.b16 %v2190, %v2189
      %v2210 = vpack.c.b16 %v2192, %v2191
      %v2211 = vpack.c.b16 %v2194, %v2193
      %v2212 = vpack.c.b16 %v2196, %v2195
      %2229 = vmatprep.subr.bf16.mxu0 0
      %2230 = vmatpush1.bf16.msra.mxu0 %v2197
      %2231 = vmatprep.subr.bf16.mxu0 0
      %2232 = vmatpush1.bf16.msra.mxu0 %v2198
      %2233 = vmatprep.subr.bf16.mxu0 0
      %2234 = vmatpush1.bf16.msra.mxu0 %v2199
      %2235 = vmatprep.subr.bf16.mxu0 0
      %2236 = vmatpush1.bf16.msra.mxu0 %v2200
      %2237 = vmatprep.subr.bf16.mxu0 0
      %2238 = vmatpush1.bf16.msra.mxu0 %v2201
      %2239 = vmatprep.subr.bf16.mxu0 0
      %2240 = vmatpush1.bf16.msra.mxu0 %v2202
      %2241 = vmatprep.subr.bf16.mxu0 0
      %2242 = vmatpush1.bf16.msra.mxu0 %v2203
      %2243 = vmatprep.subr.bf16.mxu0 0
      %2244 = vmatpush1.bf16.msra.mxu0 %v2204
      %2245 = vmatprep.subr.bf16.mxu0 0
      %2246 = vmatpush1.bf16.msra.mxu0 %v2205
      %2247 = vmatprep.subr.bf16.mxu0 0
      %2248 = vmatpush1.bf16.msra.mxu0 %v2206
      %2249 = vmatprep.subr.bf16.mxu0 0
      %2250 = vmatpush1.bf16.msra.mxu0 %v2207
      %2251 = vmatprep.subr.bf16.mxu0 0
      %2252 = vmatpush1.bf16.msra.mxu0 %v2208
      %2253 = vmatprep.subr.bf16.mxu0 0
      %2254 = vmatpush1.bf16.msra.mxu0 %v2209
      %2255 = vmatprep.subr.bf16.mxu0 0
      %2256 = vmatpush1.bf16.msra.mxu0 %v2210
      %2257 = vmatprep.subr.bf16.mxu0 0
      %2258 = vmatpush1.bf16.msra.mxu0 %v2211
      %2259 = vmatprep.subr.bf16.mxu0 0
      %2260 = vmatpush1.bf16.msra.mxu0 %v2212
      %2261 = vmatprep.mubr.bf16.mxu0 %v2097
      %2262 = vmatmul.mubr.bf16.gmra.mrb[0].mxu0 %v2096
      %v2263 = vpop.f32.mrb[0].mxu0
      %v2264 = vadd.f32 0.0, %v2263
      %v2265 = vpop.f32.mrb[0].mxu0
      %v2266 = vpop.f32.mrb[0].mxu0
      %v2267 = vadd.f32 0.0, %v2266
      %v2268 = vpop.f32.mrb[0].mxu0
      %2269 = vmatprep.mubr.bf16.mxu0 %v2099
      %2270 = vmatmul.mubr.bf16.gmra.mrb[0].mxu0 %v2098
      %v2271 = vpop.f32.mrb[0].mxu0
      %v2272 = vadd.f32 0.0, %v2271
      %v2273 = vpop.f32.mrb[0].mxu0
      %v2274 = vpop.f32.mrb[0].mxu0
      %v2275 = vadd.f32 0.0, %v2274
      %v2276 = vpop.f32.mrb[0].mxu0
      %2277 = vdwg.mxu0
      %v2278 = vadd.f32 %v2047, %v2264
      %v2279 = vadd.f32 %v2048, %v2267
      %v2280 = vadd.f32 %v2049, %v2272
      %v2281 = vadd.f32 %v2050, %v2275
      %v2282 = vtanh.pop %v2278
      %v2283 = vtanh.pop %v2279
      %v2284 = vtanh.pop %v2280
      %v2285 = vtanh.pop %v2281
      %v2286 = vsub.f32 %v331, %v2282
      %v2287 = vsub.f32 %v332, %v2283
      %v2288 = vsub.f32 %v333, %v2284
      %v2289 = vsub.f32 %v334, %v2285
      %v2290 = vmul.f32 %v1434, %v2286
      %v2291 = vmul.f32 %v1436, %v2287
      %v2292 = vmul.f32 %v1438, %v2288
      %v2293 = vmul.f32 %v1440, %v2289
      %v2294 = vadd.f32 %v2282, %v2290
      %v2295 = vadd.f32 %v2283, %v2291
      %v2296 = vadd.f32 %v2284, %v2292
      %v2297 = vadd.f32 %v2285, %v2293
      %2298 = vst [vmem:[%s325] sm:$0xff] %v2294
      %2299 = vst [vmem:[%s325 + $0x8] sm:$0xff] %v2295
      %2300 = vst [vmem:[%s325 + $0x10] sm:$0xff] %v2296
      %2301 = vst [vmem:[%s325 + $0x18] sm:$0xff] %v2297
      %p2302 = scmp.lt.s32.totalorder %s19, 1
      %s2303 = scalar_select %p2302, %s19, 1
      %s2304 = smul.addr %s2303, 4
      %s2305 = smul.addr %s2304, 8
      %s2306 = scalar_lea.vmem %s8, %s2305
      // Predicated region
      $region53: #{conv2d_gru_cell.1} parent=51 // pred_check
        %p2307 = pneg %p215
      $region54: #{conv2d_gru_cell.1} parent=51 // pred_check_branch
        %2309 = sbr.rel (%p2307) target = $region56
      $region55: #{conv2d_gru_cell.1} parent=51 // pred_region
        _
      $region56: #{conv2d_gru_cell.1} parent=51 // pred_fallthru
        _
    $region52: #{conv2d_gru_cell.1} parent=5 // pred_fallthru
      _
    %p2310 = scmp.le.s32.totalorder 2, %s14
    // Predicated region
    $region57: #{conv2d_gru_cell.1} parent=5 // pred_check
      %p2311 = pneg %p2310
    $region58: #{conv2d_gru_cell.1} parent=5 // pred_check_branch
      %2313 = sbr.rel (%p2311) target = $region60
    $region59: #{conv2d_gru_cell.1} parent=5 // pred_region
      %s2314 = ssub.s32 %s14, 2
      // Predicated region
      $region61: #{conv2d_gru_cell.1} parent=59 // pred_check
        %p2315 = pneg %p221
      $region62: #{conv2d_gru_cell.1} parent=59 // pred_check_branch
        %2317 = sbr.rel (%p2315) target = $region64
      $region63: #{conv2d_gru_cell.1} parent=59 // pred_region
        %p2318 = scmp.lt.s32.totalorder %s20, 1
        %s2319 = scalar_select %p2318, %s20, 1
        %s2320 = smul.addr %s2319, 4
        %s2321 = smul.addr %s2320, 8
        %s2322 = scalar_lea.vmem %s8, %s2321
      $region64: #{conv2d_gru_cell.1} parent=59 // pred_fallthru
        _
    $region60: #{conv2d_gru_cell.1} parent=5 // pred_fallthru
      _
  $region6: #{conv2d_gru_cell.1} parent=0 // loop_footer
    %s18 = sadd.s32 1, %s14
  $region7: #{conv2d_gru_cell.1} parent=0 // loop_footer_branch
    %13 = sbr.rel target = $region3
  $region8: #{conv2d_gru_cell.1} parent=0 // loop_exit
    _

// kernel: conv2d_gru_cell.1
$region0: #{conv2d_gru_cell.1}
  #allocation0 [shape = 'u32[]', space=smem, size = 0x4, offset = 0x4, fixed_abs, tag = 'smem constant byte address 0x4 - core index']
  #allocation1 [shape = 'u32[144,128]{1,0:T(1,128)}', space=vmem, size = 0x12000, scoped, tag = 'internal scratch']
  #allocation2 [shape = 'f32[2,18,256]{2,1,0:T(8,128)}', space=vmem, size = 0xc000, scoped, tag = 'scratch operand']
  #allocation3 [shape = 'f32[2,22,128]{2,1,0:T(8,128)}', space=vmem, size = 0x6000, scoped, tag = 'scratch operand']
  %s0 = inlined_call_operand.vmem [shape: f32[2,2,16,128], index: 0, kind: input, shape index: {}]
  %s1 = inlined_call_operand.vmem [shape: f32[2,2,16,128], index: 1, kind: input, shape index: {}]
  %s2 = inlined_call_operand.vmem [shape: f32[1,16], index: 2, kind: input, shape index: {}]
  %s3 = inlined_call_operand.vmem [shape: f32[1,8], index: 3, kind: input, shape index: {}]
  %s4 = inlined_call_operand.vmem [shape: f32[8,128], index: 4, kind: input, shape index: {}]
  %s5 = inlined_call_operand.vmem [shape: bf16[7,128,128], index: 5, kind: input, shape index: {}]
  %s6 = inlined_call_operand.vmem [shape: bf16[3,256,128], index: 6, kind: input, shape index: {}]
  %s7 = inlined_call_operand.vmem [shape: f32[1,128], index: 7, kind: input, shape index: {}]
  %s8 = inlined_call_operand.vmem [shape: f32[2,2,16,128], index: 8, kind: output, shape index: {}]
  %s9 = sld [smem:[#allocation0]]
  $region65: #{conv2d_gru_cell.1} parent=0
    _
  %s11 = ssub.s32 1, %s9
  %s12 = scalar_select 0, %s11, %s9
  loop: start=0, step=1, limit=4
  $region2: #{conv2d_gru_cell.1} parent=0 // loop_pre_header
    _
  $region3: #{conv2d_gru_cell.1} parent=0 // loop_header
    %s14 = sphi 0, %s18
    %p15 = scmp.ge.s32.totalorder %s14, 4
    %s24 = sphi 0, %s26
    %s27 = sphi 0, %s24
    %s28 = sphi 0, %s27
    %s44 = sphi 0, %s28
    %s50 = sphi 0, %s52
    %s53 = sphi 0, %s50
    %s54 = sphi 0, %s53
    %s70 = sphi 0, %s54
    %s74 = sphi 0, %s74
    %s76 = sphi 0, %s74
    %s77 = sphi 0, %s76
    %s91 = sphi 0, %s77
    %s95 = sphi 0, %s95
    %s97 = sphi 0, %s95
    %s98 = sphi 0, %s97
    %s112 = sphi 0, %s98
    %s116 = sphi 0, %s116
    %s118 = sphi 0, %s116
    %s119 = sphi 0, %s118
    %s133 = sphi 0, %s119
    %s137 = sphi 0, %s137
    %s139 = sphi 0, %s137
    %s140 = sphi 0, %s139
    %s154 = sphi 0, %s140
    %s158 = sphi 0, %s158
    %s160 = sphi 0, %s158
    %s161 = sphi 0, %s160
    %s175 = sphi 0, %s161
    %s179 = sphi 0, %s179
    %s181 = sphi 0, %s179
    %s182 = sphi 0, %s181
    %s196 = sphi 0, %s182
    %s202 = sphi 0, %s204
    %s205 = sphi 0, %s202
    %s206 = sphi 0, %s205
    %s222 = sphi 0, %s206
  $region4: #{conv2d_gru_cell.1} parent=0 // loop_header_branch
    %17 = sbr.rel (%p15) target = $region8
  $region5: #{conv2d_gru_cell.1} parent=0 // loop_body
    %s19 = ssub.s32 %s14, 1
    %s20 = ssub.s32 %s14, 2
    %s21 = sadd.s32 %s14, 1
    %s22 = ssub.s32 %s14, %s21
    %p23 = scmp.eq.s32.totalorder %s22, 0
    %s25 = sadd.s32 %s24, 1
    %s26 = scalar_select %p23, %s24, %s25
    %p29 = pneg %p23
    %p30 = scmp.eq.s32.totalorder %s14, 1
    %p31 = por %p29, %p30
    %p32 = scmp.ne.s32.totalorder %s24, %s27
    %p33 = scmp.eq.s32.totalorder %s14, 0
    %p34 = por %p32, %p33
    %p35 = scmp.ne.s32.totalorder %s24, %s27
    %p36 = scmp.eq.s32.totalorder %s19, 1
    %p37 = por %p35, %p36
    %p38 = scmp.ne.s32.totalorder %s27, %s28
    %p39 = scmp.eq.s32.totalorder %s19, 0
    %p40 = por %p38, %p39
    %p41 = scmp.ne.s32.totalorder %s27, %s28
    %p42 = scmp.eq.s32.totalorder %s20, 1
    %p43 = por %p41, %p42
    %p45 = scmp.ne.s32.totalorder %s28, %s44
    %p46 = scmp.eq.s32.totalorder %s20, 0
    %p47 = por %p45, %p46
    %s48 = ssub.s32 %s14, %s21
    %p49 = scmp.eq.s32.totalorder %s48, 0
    %s51 = sadd.s32 %s50, 1
    %s52 = scalar_select %p49, %s50, %s51
    %p55 = pneg %p49
    %p56 = scmp.eq.s32.totalorder %s14, 1
    %p57 = por %p55, %p56
    %p58 = scmp.ne.s32.totalorder %s50, %s53
    %p59 = scmp.eq.s32.totalorder %s14, 0
    %p60 = por %p58, %p59
    %p61 = scmp.ne.s32.totalorder %s50, %s53
    %p62 = scmp.eq.s32.totalorder %s19, 1
    %p63 = por %p61, %p62
    %p64 = scmp.ne.s32.totalorder %s53, %s54
    %p65 = scmp.eq.s32.totalorder %s19, 0
    %p66 = por %p64, %p65
    %p67 = scmp.ne.s32.totalorder %s53, %s54
    %p68 = scmp.eq.s32.totalorder %s20, 1
    %p69 = por %p67, %p68
    %p71 = scmp.ne.s32.totalorder %s54, %s70
    %p72 = scmp.eq.s32.totalorder %s20, 0
    %p73 = por %p71, %p72
    %s75 = sadd.s32 %s74, 1
    %p78 = scmp.eq.s32.totalorder %s14, 1
    %p79 = scmp.ne.s32.totalorder %s74, %s76
    %p80 = scmp.eq.s32.totalorder %s14, 0
    %p81 = por %p79, %p80
    %p82 = scmp.ne.s32.totalorder %s74, %s76
    %p83 = scmp.eq.s32.totalorder %s19, 1
    %p84 = por %p82, %p83
    %p85 = scmp.ne.s32.totalorder %s76, %s77
    %p86 = scmp.eq.s32.totalorder %s19, 0
    %p87 = por %p85, %p86
    %p88 = scmp.ne.s32.totalorder %s76, %s77
    %p89 = scmp.eq.s32.totalorder %s20, 1
    %p90 = por %p88, %p89
    %p92 = scmp.ne.s32.totalorder %s77, %s91
    %p93 = scmp.eq.s32.totalorder %s20, 0
    %p94 = por %p92, %p93
    %s96 = sadd.s32 %s95, 1
    %p99 = scmp.eq.s32.totalorder %s14, 1
    %p100 = scmp.ne.s32.totalorder %s95, %s97
    %p101 = scmp.eq.s32.totalorder %s14, 0
    %p102 = por %p100, %p101
    %p103 = scmp.ne.s32.totalorder %s95, %s97
    %p104 = scmp.eq.s32.totalorder %s19, 1
    %p105 = por %p103, %p104
    %p106 = scmp.ne.s32.totalorder %s97, %s98
    %p107 = scmp.eq.s32.totalorder %s19, 0
    %p108 = por %p106, %p107
    %p109 = scmp.ne.s32.totalorder %s97, %s98
    %p110 = scmp.eq.s32.totalorder %s20, 1
    %p111 = por %p109, %p110
    %p113 = scmp.ne.s32.totalorder %s98, %s112
    %p114 = scmp.eq.s32.totalorder %s20, 0
    %p115 = por %p113, %p114
    %s117 = sadd.s32 %s116, 1
    %p120 = scmp.eq.s32.totalorder %s14, 1
    %p121 = scmp.ne.s32.totalorder %s116, %s118
    %p122 = scmp.eq.s32.totalorder %s14, 0
    %p123 = por %p121, %p122
    %p124 = scmp.ne.s32.totalorder %s116, %s118
    %p125 = scmp.eq.s32.totalorder %s19, 1
    %p126 = por %p124, %p125
    %p127 = scmp.ne.s32.totalorder %s118, %s119
    %p128 = scmp.eq.s32.totalorder %s19, 0
    %p129 = por %p127, %p128
    %p130 = scmp.ne.s32.totalorder %s118, %s119
    %p131 = scmp.eq.s32.totalorder %s20, 1
    %p132 = por %p130, %p131
    %p134 = scmp.ne.s32.totalorder %s119, %s133
    %p135 = scmp.eq.s32.totalorder %s20, 0
    %p136 = por %p134, %p135
    %s138 = sadd.s32 %s137, 1
    %p141 = scmp.eq.s32.totalorder %s14, 1
    %p142 = scmp.ne.s32.totalorder %s137, %s139
    %p143 = scmp.eq.s32.totalorder %s14, 0
    %p144 = por %p142, %p143
    %p145 = scmp.ne.s32.totalorder %s137, %s139
    %p146 = scmp.eq.s32.totalorder %s19, 1
    %p147 = por %p145, %p146
    %p148 = scmp.ne.s32.totalorder %s139, %s140
    %p149 = scmp.eq.s32.totalorder %s19, 0
    %p150 = por %p148, %p149
    %p151 = scmp.ne.s32.totalorder %s139, %s140
    %p152 = scmp.eq.s32.totalorder %s20, 1
    %p153 = por %p151, %p152
    %p155 = scmp.ne.s32.totalorder %s140, %s154
    %p156 = scmp.eq.s32.totalorder %s20, 0
    %p157 = por %p155, %p156
    %s159 = sadd.s32 %s158, 1
    %p162 = scmp.eq.s32.totalorder %s14, 1
    %p163 = scmp.ne.s32.totalorder %s158, %s160
    %p164 = scmp.eq.s32.totalorder %s14, 0
    %p165 = por %p163, %p164
    %p166 = scmp.ne.s32.totalorder %s158, %s160
    %p167 = scmp.eq.s32.totalorder %s19, 1
    %p168 = por %p166, %p167
    %p169 = scmp.ne.s32.totalorder %s160, %s161
    %p170 = scmp.eq.s32.totalorder %s19, 0
    %p171 = por %p169, %p170
    %p172 = scmp.ne.s32.totalorder %s160, %s161
    %p173 = scmp.eq.s32.totalorder %s20, 1
    %p174 = por %p172, %p173
    %p176 = scmp.ne.s32.totalorder %s161, %s175
    %p177 = scmp.eq.s32.totalorder %s20, 0
    %p178 = por %p176, %p177
    %s180 = sadd.s32 %s179, 1
    %p183 = scmp.eq.s32.totalorder %s14, 1
    %p184 = scmp.ne.s32.totalorder %s179, %s181
    %p185 = scmp.eq.s32.totalorder %s14, 0
    %p186 = por %p184, %p185
    %p187 = scmp.ne.s32.totalorder %s179, %s181
    %p188 = scmp.eq.s32.totalorder %s19, 1
    %p189 = por %p187, %p188
    %p190 = scmp.ne.s32.totalorder %s181, %s182
    %p191 = scmp.eq.s32.totalorder %s19, 0
    %p192 = por %p190, %p191
    %p193 = scmp.ne.s32.totalorder %s181, %s182
    %p194 = scmp.eq.s32.totalorder %s20, 1
    %p195 = por %p193, %p194
    %p197 = scmp.ne.s32.totalorder %s182, %s196
    %p198 = scmp.eq.s32.totalorder %s20, 0
    %p199 = por %p197, %p198
    %s200 = ssub.s32 %s14, %s21
    %p201 = scmp.eq.s32.totalorder %s200, 0
    %s203 = sadd.s32 %s202, 1
    %s204 = scalar_select %p201, %s202, %s203
    %p207 = pneg %p201
    %p208 = scmp.eq.s32.totalorder %s14, 1
    %p209 = por %p207, %p208
    %p210 = scmp.ne.s32.totalorder %s202, %s205
    %p211 = scmp.eq.s32.totalorder %s14, 0
    %p212 = por %p210, %p211
    %p213 = scmp.ne.s32.totalorder %s202, %s205
    %p214 = scmp.eq.s32.totalorder %s19, 1
    %p215 = por %p213, %p214
    %p216 = scmp.ne.s32.totalorder %s205, %s206
    %p217 = scmp.eq.s32.totalorder %s19, 0
    %p218 = por %p216, %p217
    %p219 = scmp.ne.s32.totalorder %s205, %s206
    %p220 = scmp.eq.s32.totalorder %s20, 1
    %p221 = por %p219, %p220
    %p223 = scmp.ne.s32.totalorder %s206, %s222
    %p224 = scmp.eq.s32.totalorder %s20, 0
    %p225 = por %p223, %p224
    %p226 = scmp.le.s32.totalorder 1, %s14
    %p227 = scmp.lt.s32.totalorder %s14, 3
    %p228 = pnand %p226, %p227
    %p229 = pneg %p228
    // Predicated region
    $region9: #{conv2d_gru_cell.1} parent=5 // pred_check
      _
    $region10: #{conv2d_gru_cell.1} parent=5 // pred_check_branch
      %231 = sbr.rel (%p228) target = $region12
    $region11: #{conv2d_gru_cell.1} parent=5 // pred_region
      %s232 = ssub.s32 %s14, 1
      // Predicated region
      $region13: #{conv2d_gru_cell.1} parent=11 // pred_check
        %p233 = pneg %p87
      $region14: #{conv2d_gru_cell.1} parent=11 // pred_check_branch
        %235 = sbr.rel (%p233) target = $region16
      $region15: #{conv2d_gru_cell.1} parent=11 // pred_region
        _
      $region16: #{conv2d_gru_cell.1} parent=11 // pred_fallthru
        _
      // Predicated region
      $region17: #{conv2d_gru_cell.1} parent=11 // pred_check
        %p236 = pneg %p108
      $region18: #{conv2d_gru_cell.1} parent=11 // pred_check_branch
        %238 = sbr.rel (%p236) target = $region20
      $region19: #{conv2d_gru_cell.1} parent=11 // pred_region
        _
      $region20: #{conv2d_gru_cell.1} parent=11 // pred_fallthru
        _
      // Predicated region
      $region21: #{conv2d_gru_cell.1} parent=11 // pred_check
        %p239 = pneg %p129
      $region22: #{conv2d_gru_cell.1} parent=11 // pred_check_branch
        %241 = sbr.rel (%p239) target = $region24
      $region23: #{conv2d_gru_cell.1} parent=11 // pred_region
        _
      $region24: #{conv2d_gru_cell.1} parent=11 // pred_fallthru
        _
      // Predicated region
      $region25: #{conv2d_gru_cell.1} parent=11 // pred_check
        %p242 = pneg %p150
      $region26: #{conv2d_gru_cell.1} parent=11 // pred_check_branch
        %244 = sbr.rel (%p242) target = $region28
      $region27: #{conv2d_gru_cell.1} parent=11 // pred_region
        _
      $region28: #{conv2d_gru_cell.1} parent=11 // pred_fallthru
        _
      // Predicated region
      $region29: #{conv2d_gru_cell.1} parent=11 // pred_check
        %p245 = pneg %p171
      $region30: #{conv2d_gru_cell.1} parent=11 // pred_check_branch
        %247 = sbr.rel (%p245) target = $region32
      $region31: #{conv2d_gru_cell.1} parent=11 // pred_region
        _
      $region32: #{conv2d_gru_cell.1} parent=11 // pred_fallthru
        _
      // Predicated region
      $region33: #{conv2d_gru_cell.1} parent=11 // pred_check
        %p248 = pneg %p192
      $region34: #{conv2d_gru_cell.1} parent=11 // pred_check_branch
        %250 = sbr.rel (%p248) target = $region36
      $region35: #{conv2d_gru_cell.1} parent=11 // pred_region
        _
      $region36: #{conv2d_gru_cell.1} parent=11 // pred_fallthru
        _
    $region12: #{conv2d_gru_cell.1} parent=5 // pred_fallthru
      _
    %p251 = scmp.lt.s32.totalorder %s14, 2
    // Predicated region
    $region37: #{conv2d_gru_cell.1} parent=5 // pred_check
      %p252 = pneg %p251
    $region38: #{conv2d_gru_cell.1} parent=5 // pred_check_branch
      %254 = sbr.rel (%p252) target = $region40
    $region39: #{conv2d_gru_cell.1} parent=5 // pred_region
      // Predicated region
      $region41: #{conv2d_gru_cell.1} parent=39 // pred_check
        %p255 = pneg %p34
      $region42: #{conv2d_gru_cell.1} parent=39 // pred_check_branch
        %257 = sbr.rel (%p255) target = $region44
      $region43: #{conv2d_gru_cell.1} parent=39 // pred_region
        %p258 = scmp.lt.s32.totalorder %s14, 1
        %s259 = scalar_select %p258, %s14, 1
        %s260 = smul.addr %s259, 4
        %s261 = smul.addr %s260, 8
        %s262 = scalar_lea.vmem %s0, %s261
      $region44: #{conv2d_gru_cell.1} parent=39 // pred_fallthru
        _
      // Predicated region
      $region45: #{conv2d_gru_cell.1} parent=39 // pred_check
        %p263 = pneg %p60
      $region46: #{conv2d_gru_cell.1} parent=39 // pred_check_branch
        %265 = sbr.rel (%p263) target = $region48
      $region47: #{conv2d_gru_cell.1} parent=39 // pred_region
        %p266 = scmp.lt.s32.totalorder %s14, 1
        %s267 = scalar_select %p266, %s14, 1
        %s268 = smul.addr %s267, 4
        %s269 = smul.addr %s268, 8
        %s270 = scalar_lea.vmem %s1, %s269
      $region48: #{conv2d_gru_cell.1} parent=39 // pred_fallthru
        _
    $region40: #{conv2d_gru_cell.1} parent=5 // pred_fallthru
      _
    %p271 = scmp.le.s32.totalorder 1, %s14
    %p272 = scmp.lt.s32.totalorder %s14, 3
    %p273 = pnand %p271, %p272
    %p274 = pneg %p273
    // Predicated region
    $region49: #{conv2d_gru_cell.1} parent=5 // pred_check
      _
    $region50: #{conv2d_gru_cell.1} parent=5 // pred_check_branch
      %276 = sbr.rel (%p273) target = $region52
    $region51: #{conv2d_gru_cell.1} parent=5 // pred_region
      %s277 = ssub.s32 %s14, 1
      %p278 = scmp.lt.s32.totalorder %s19, 1
      %s279 = scalar_select %p278, %s19, 1
      %s280 = smul.addr %s279, 4
      %s281 = smul.addr %s280, 8
      %s282 = scalar_lea.vmem %s0, %s281
      %p283 = pneg %p40
      %p284 = pneg %p37
      %p285 = scmp.lt.s32.totalorder %s19, 1
      %s286 = scalar_select %p285, %s19, 1
      %s287 = smul.addr %s286, 4
      %s288 = smul.addr %s287, 8
      %s289 = scalar_lea.vmem %s1, %s288
      %p290 = pneg %p66
      %p291 = pneg %p63
      %p292 = pneg %p87
      %p293 = pneg %p84
      %p294 = pneg %p108
      %p295 = pneg %p105
      %p296 = pneg %p129
      %p297 = pneg %p126
      %p298 = pneg %p150
      %p299 = pneg %p147
      %p300 = pneg %p171
      %p301 = pneg %p168
      %p302 = pneg %p192
      %p303 = pneg %p189
      %p304 = pneg %p218
      %p305 = pneg %p215
      %p306 = scmp.lt.s32.totalorder %s19, 1
      %s307 = scalar_select %p306, %s19, 1
      %s308 = smul.addr %s307, 4
      %s309 = smul.addr %s308, 8
      %s310 = scalar_lea.vmem %s8, %s309
      %p311 = scmp.lt.s32.totalorder %s19, 1
      %s312 = scalar_select %p311, %s19, 1
      %s313 = smul.addr %s312, 4
      %s314 = smul.addr %s313, 8
      %s315 = scalar_lea.vmem %s0, %s314
      %p316 = scmp.lt.s32.totalorder %s19, 1
      %s317 = scalar_select %p316, %s19, 1
      %s318 = smul.addr %s317, 4
      %s319 = smul.addr %s318, 8
      %s320 = scalar_lea.vmem %s1, %s319
      %p321 = scmp.lt.s32.totalorder %s19, 1
      %s322 = scalar_select %p321, %s19, 1
      %s323 = smul.addr %s322, 4
      %s324 = smul.addr %s323, 8
      %s325 = scalar_lea.vmem %s8, %s324
      %v327 = vld [vmem:[%s315] sm:$0xff]
      %v328 = vld [vmem:[%s315 + $0x8] sm:$0xff]
      %v329 = vld [vmem:[%s315 + $0x10] sm:$0xff]
      %v330 = vld [vmem:[%s315 + $0x18] sm:$0xff]
      %v331 = vld [vmem:[%s320] sm:$0xff]
      %v332 = vld [vmem:[%s320 + $0x8] sm:$0xff]
      %v333 = vld [vmem:[%s320 + $0x10] sm:$0xff]
      %v334 = vld [vmem:[%s320 + $0x18] sm:$0xff]
      %v335 = vmax.f32 %v327, %v328
      %v336 = vrot.slane %v335, 4
      %v337 = vmax.f32 %v335, %v336
      %v338 = vrot.slane %v337, 2
      %v339 = vmax.f32 %v337, %v338
      %v340 = vrot.slane %v339, 1
      %v341 = vmax.f32 %v339, %v340
      %v342 = vmax.f32 %v329, %v330
      %v343 = vrot.slane %v342, 4
      %v344 = vmax.f32 %v342, %v343
      %v345 = vrot.slane %v344, 2
      %v346 = vmax.f32 %v344, %v345
      %v347 = vrot.slane %v346, 1
      %v348 = vmax.f32 %v346, %v347
      %vm351 = vcmask 1041409
      %v352 = vsel %vm351, %v348, %v341
      %354 = vrot.lane.b32.xlu0 %v352, 8
      %v355 = vpop.permute.xlu0 %354
      %v357 = vrot.slane %v355, 1
      %v360 = vmax.f32 %v341, %v355
      %v361 = vmax.f32 %v348, %v357
      %v364 = vrot.slane %v361, 7
      %v365 = vsel %vm351, %v364, %v360
      %367 = vrot.lane.b32.xlu0 %v365, 16
      %v368 = vpop.permute.xlu0 %367
      %v370 = vrot.slane %v368, 1
      %v373 = vmax.f32 %v360, %v368
      %v374 = vmax.f32 %v361, %v370
      %v377 = vrot.slane %v374, 7
      %v378 = vsel %vm351, %v377, %v373
      %380 = vrot.lane.b32.xlu0 %v378, 32
      %v381 = vpop.permute.xlu0 %380
      %v383 = vrot.slane %v381, 1
      %v386 = vmax.f32 %v373, %v381
      %v387 = vmax.f32 %v374, %v383
      %v390 = vrot.slane %v387, 7
      %v391 = vsel %vm351, %v390, %v386
      %393 = vrot.lane.b32.xlu0 %v391, 64
      %v394 = vpop.permute.xlu0 %393
      %v396 = vrot.slane %v394, 1
      %v399 = vmax.f32 %v386, %v394
      %v400 = vmax.f32 %v387, %v396
      %v401 = vmax.f32 %v331, %v332
      %v402 = vrot.slane %v401, 4
      %v403 = vmax.f32 %v401, %v402
      %v404 = vrot.slane %v403, 2
      %v405 = vmax.f32 %v403, %v404
      %v406 = vrot.slane %v405, 1
      %v407 = vmax.f32 %v405, %v406
      %v408 = vmax.f32 %v333, %v334
      %v409 = vrot.slane %v408, 4
      %v410 = vmax.f32 %v408, %v409
      %v411 = vrot.slane %v410, 2
      %v412 = vmax.f32 %v410, %v411
      %v413 = vrot.slane %v412, 1
      %v414 = vmax.f32 %v412, %v413
      %v417 = vsel %vm351, %v414, %v407
      %419 = vrot.lane.b32.xlu0 %v417, 8
      %v420 = vpop.permute.xlu0 %419
      %v422 = vrot.slane %v420, 1
      %v425 = vmax.f32 %v407, %v420
      %v426 = vmax.f32 %v414, %v422
      %v429 = vrot.slane %v426, 7
      %v430 = vsel %vm351, %v429, %v425
      %432 = vrot.lane.b32.xlu0 %v430, 16
      %v433 = vpop.permute.xlu0 %432
      %v435 = vrot.slane %v433, 1
      %v438 = vmax.f32 %v425, %v433
      %v439 = vmax.f32 %v426, %v435
      %v442 = vrot.slane %v439, 7
      %v443 = vsel %vm351, %v442, %v438
      %445 = vrot.lane.b32.xlu0 %v443, 32
      %v446 = vpop.permute.xlu0 %445
      %v448 = vrot.slane %v446, 1
      %v451 = vmax.f32 %v438, %v446
      %v452 = vmax.f32 %v439, %v448
      %v455 = vrot.slane %v452, 7
      %v456 = vsel %vm351, %v455, %v451
      %458 = vrot.lane.b32.xlu0 %v456, 64
      %v459 = vpop.permute.xlu0 %458
      %v461 = vrot.slane %v459, 1
      %v464 = vmax.f32 %v451, %v459
      %v465 = vmax.f32 %v452, %v461
      %v468 = vrot.slane %v400, 7
      %v469 = vsel %vm351, %v468, %v399
      %470 = vrot.lane.b32.xlu0 %v469, 8
      %v471 = vpop.permute.xlu0 %470
      %v475 = vrot.slane %v465, 7
      %v476 = vsel %vm351, %v475, %v464
      %477 = vrot.lane.b32.xlu0 %v476, 16
      %v478 = vpop.permute.xlu0 %477
      %vm480 = vcmask 64512
      %v481 = vsel %vm480, %v471, %v478
      %v482 = vld [vmem:[%s2] sm:$0x1]
      %v484 = vlaneseq
      %v485 = vshrl.u32 %v484, 7
      %v486 = vsub.s32 0, %v485
      %v487 = vrot.slane %v482, %v486
      %v489 = vmul.f32 %v481, %v487
      %vm490 = vcmask 123904
      %v491 = vsel %vm490, %v489, 0.0
      %492 = vadd.xlane.f32.xlu0 %v491
      %v493 = vpop.xlane.xlu0 %492
      %v494 = vmax.f32 %v493, 0.0
      %v495 = vld [vmem:[%s3] sm:$0x1]
      %v497 = vlaneseq
      %v498 = vshrl.u32 %v497, 7
      %v499 = vsub.s32 0, %v498
      %v500 = vrot.slane %v495, %v499
      %v502 = vmul.f32 %v494, %v500
      %v503 = vadd.f32 %v502, 0.0
      %v504 = vxor.u32 %v503, 2147483648
      %v505 = vmul.f32 %v504, 1.442695
      %v506 = vpow.pop %v505
      %v507 = vadd.f32 %v506, 1.0
      %v508 = vrcp.pop %v507
      %v509 = vmul.f32 1.0, %v508
      %v510 = vmax.f32 %v327, %v331
      %v511 = vmax.f32 %v328, %v332
      %v512 = vmax.f32 %v329, %v333
      %v513 = vmax.f32 %v330, %v334
      %514 = vrot.lane.b32.xlu0 %v510, 1
      %v515 = vpop.permute.xlu0 %514
      %516 = vrot.lane.b32.xlu0 %v511, 1
      %v517 = vpop.permute.xlu0 %516
      %518 = vrot.lane.b32.xlu0 %v512, 1
      %v519 = vpop.permute.xlu0 %518
      %520 = vrot.lane.b32.xlu0 %v513, 1
      %v521 = vpop.permute.xlu0 %520
      %v522 = vmax.f32 %v510, %v515
      %v523 = vmax.f32 %v511, %v517
      %v524 = vmax.f32 %v512, %v519
      %v525 = vmax.f32 %v513, %v521
      %526 = vrot.lane.b32.xlu0 %v522, 2
      %v527 = vpop.permute.xlu0 %526
      %528 = vrot.lane.b32.xlu0 %v523, 2
      %v529 = vpop.permute.xlu0 %528
      %530 = vrot.lane.b32.xlu0 %v524, 2
      %v531 = vpop.permute.xlu0 %530
      %532 = vrot.lane.b32.xlu0 %v525, 2
      %v533 = vpop.permute.xlu0 %532
      %v534 = vmax.f32 %v522, %v527
      %v535 = vmax.f32 %v523, %v529
      %v536 = vmax.f32 %v524, %v531
      %v537 = vmax.f32 %v525, %v533
      %538 = vrot.lane.b32.xlu0 %v534, 4
      %v539 = vpop.permute.xlu0 %538
      %540 = vrot.lane.b32.xlu0 %v535, 4
      %v541 = vpop.permute.xlu0 %540
      %542 = vrot.lane.b32.xlu0 %v536, 4
      %v543 = vpop.permute.xlu0 %542
      %544 = vrot.lane.b32.xlu0 %v537, 4
      %v545 = vpop.permute.xlu0 %544
      %v546 = vmax.f32 %v534, %v539
      %v547 = vmax.f32 %v535, %v541
      %v548 = vmax.f32 %v536, %v543
      %v549 = vmax.f32 %v537, %v545
      %550 = vst [vmem:[#allocation3] sm:$0x7] 0.0
      %551 = vst [vmem:[#allocation3 + $0x18] sm:$0x7] 0.0
      %552 = vst [vmem:[#allocation3 + $0x13] sm:$0x7] 0.0
      %553 = vst [vmem:[#allocation3 + $0x2b] sm:$0x7] 0.0
      %554 = vst [vmem:[#allocation3 + $0x3] sm:$0xff] %v546
      %555 = vst [vmem:[#allocation3 + $0xb] sm:$0xff] %v547
      %556 = vst [vmem:[#allocation3 + $0x1b] sm:$0xff] %v548
      %557 = vst [vmem:[#allocation3 + $0x23] sm:$0xff] %v549
      %v558 = vld [vmem:[#allocation3] sm:$0xff]
      %v559 = vld [vmem:[#allocation3 + $0x8] sm:$0xff]
      %v560 = vld [vmem:[#allocation3 + $0x18] sm:$0xff]
      %v561 = vld [vmem:[#allocation3 + $0x20] sm:$0xff]
      %v562 = vpack.c.bf16 %v559, %v558
      %v563 = vpack.c.bf16 %v561, %v560
      %v564 = vld [vmem:[%s5] sm:$0xf]
      %v565 = vld [vmem:[%s5 + $0x4] sm:$0xf]
      %v566 = vld [vmem:[%s5 + $0x8] sm:$0xf]
      %v567 = vld [vmem:[%s5 + $0xc] sm:$0xf]
      %v568 = vld [vmem:[%s5 + $0x10] sm:$0xf]
      %v569 = vld [vmem:[%s5 + $0x14] sm:$0xf]
      %v570 = vld [vmem:[%s5 + $0x18] sm:$0xf]
      %v571 = vld [vmem:[%s5 + $0x1c] sm:$0xf]
      %v572 = vld [vmem:[%s5 + $0x20] sm:$0xf]
      %v573 = vld [vmem:[%s5 + $0x24] sm:$0xf]
      %v574 = vld [vmem:[%s5 + $0x28] sm:$0xf]
      %v575 = vld [vmem:[%s5 + $0x2c] sm:$0xf]
      %v576 = vld [vmem:[%s5 + $0x30] sm:$0xf]
      %v577 = vld [vmem:[%s5 + $0x34] sm:$0xf]
      %v578 = vld [vmem:[%s5 + $0x38] sm:$0xf]
      %v579 = vld [vmem:[%s5 + $0x3c] sm:$0xf]
      %v580 = vld [vmem:[#allocation3 + $0x1] sm:$0xff]
      %v581 = vld [vmem:[#allocation3 + $0x9] sm:$0xff]
      %v582 = vld [vmem:[#allocation3 + $0x19] sm:$0xff]
      %v583 = vld [vmem:[#allocation3 + $0x21] sm:$0xff]
      %v584 = vpack.c.bf16 %v581, %v580
      %v585 = vpack.c.bf16 %v583, %v582
      %s586 = scalar_lea.vmem %s5, 64
      %v587 = vld [vmem:[%s586] sm:$0xf]
      %v588 = vld [vmem:[%s586 + $0x4] sm:$0xf]
      %v589 = vld [vmem:[%s586 + $0x8] sm:$0xf]
      %v590 = vld [vmem:[%s586 + $0xc] sm:$0xf]
      %v591 = vld [vmem:[%s586 + $0x10] sm:$0xf]
      %v592 = vld [vmem:[%s586 + $0x14] sm:$0xf]
      %v593 = vld [vmem:[%s586 + $0x18] sm:$0xf]
      %v594 = vld [vmem:[%s586 + $0x1c] sm:$0xf]
      %v595 = vld [vmem:[%s586 + $0x20] sm:$0xf]
      %v596 = vld [vmem:[%s586 + $0x24] sm:$0xf]
      %v597 = vld [vmem:[%s586 + $0x28] sm:$0xf]
      %v598 = vld [vmem:[%s586 + $0x2c] sm:$0xf]
      %v599 = vld [vmem:[%s586 + $0x30] sm:$0xf]
      %v600 = vld [vmem:[%s586 + $0x34] sm:$0xf]
      %v601 = vld [vmem:[%s586 + $0x38] sm:$0xf]
      %v602 = vld [vmem:[%s586 + $0x3c] sm:$0xf]
      %v619 = vunpack.c.l.b16 %v587
      %v620 = vunpack.c.l.b16 %v588
      %v621 = vunpack.c.l.b16 %v589
      %v622 = vunpack.c.l.b16 %v590
      %v623 = vunpack.c.l.b16 %v591
      %v624 = vunpack.c.l.b16 %v592
      %v625 = vunpack.c.l.b16 %v593
      %v626 = vunpack.c.l.b16 %v594
      %v627 = vunpack.c.l.b16 %v595
      %v628 = vunpack.c.l.b16 %v596
      %v629 = vunpack.c.l.b16 %v597
      %v630 = vunpack.c.l.b16 %v598
      %v631 = vunpack.c.l.b16 %v599
      %v632 = vunpack.c.l.b16 %v600
      %v633 = vunpack.c.l.b16 %v601
      %v634 = vunpack.c.l.b16 %v602
      %v635 = vpack.c.b16 %v620, %v619
      %v636 = vpack.c.b16 %v622, %v621
      %v637 = vpack.c.b16 %v624, %v623
      %v638 = vpack.c.b16 %v626, %v625
      %v639 = vpack.c.b16 %v628, %v627
      %v640 = vpack.c.b16 %v630, %v629
      %v641 = vpack.c.b16 %v632, %v631
      %v642 = vpack.c.b16 %v634, %v633
      %651 = vmatprep.subr.bf16.mxu0 0
      %652 = vmatpush1.bf16.msra.mxu0 %v635
      %653 = vmatprep.subr.bf16.mxu0 0
      %654 = vmatpush1.bf16.msra.mxu0 %v636
      %655 = vmatprep.subr.bf16.mxu0 0
      %656 = vmatpush1.bf16.msra.mxu0 %v637
      %657 = vmatprep.subr.bf16.mxu0 0
      %658 = vmatpush1.bf16.msra.mxu0 %v638
      %659 = vmatprep.subr.bf16.mxu0 0
      %660 = vmatpush1.bf16.msra.mxu0 %v639
      %661 = vmatprep.subr.bf16.mxu0 0
      %662 = vmatpush1.bf16.msra.mxu0 %v640
      %663 = vmatprep.subr.bf16.mxu0 0
      %664 = vmatpush1.bf16.msra.mxu0 %v641
      %665 = vmatprep.subr.bf16.mxu0 0
      %666 = vmatpush1.bf16.msra.mxu0 %v642
      %667 = vmatprep.subr.bf16.mxu0 0
      %668 = vmatpush1.bf16.msra.mxu0 0
      %669 = vmatprep.subr.bf16.mxu0 0
      %670 = vmatpush1.bf16.msra.mxu0 0
      %671 = vmatprep.subr.bf16.mxu0 0
      %672 = vmatpush1.bf16.msra.mxu0 0
      %673 = vmatprep.subr.bf16.mxu0 0
      %674 = vmatpush1.bf16.msra.mxu0 0
      %675 = vmatprep.subr.bf16.mxu0 0
      %676 = vmatpush1.bf16.msra.mxu0 0
      %677 = vmatprep.subr.bf16.mxu0 0
      %678 = vmatpush1.bf16.msra.mxu0 0
      %679 = vmatprep.subr.bf16.mxu0 0
      %680 = vmatpush1.bf16.msra.mxu0 0
      %681 = vmatprep.subr.bf16.mxu0 0
      %682 = vmatpush1.bf16.msra.mxu0 0
      %683 = vmatprep.mubr.bf16.mxu0 0
      %684 = vmatmul.mubr.bf16.gmra.mrb[0].mxu0 %v584
      %v685 = vpop.f32.mrb[0].mxu0
      %v686 = vadd.f32 0.0, %v685
      %v687 = vpop.f32.mrb[0].mxu0
      %v688 = vpop.f32.mrb[0].mxu0
      %v689 = vadd.f32 0.0, %v688
      %v690 = vpop.f32.mrb[0].mxu0
      %691 = vmatprep.mubr.bf16.mxu0 0
      %692 = vmatmul.mubr.bf16.gmra.mrb[0].mxu0 %v585
      %v693 = vpop.f32.mrb[0].mxu0
      %v694 = vadd.f32 0.0, %v693
      %v695 = vpop.f32.mrb[0].mxu0
      %v696 = vpop.f32.mrb[0].mxu0
      %v697 = vadd.f32 0.0, %v696
      %v698 = vpop.f32.mrb[0].mxu0
      %699 = vdwg.mxu0
      %v716 = vunpack.c.l.b16 %v564
      %v717 = vunpack.c.l.b16 %v565
      %v718 = vunpack.c.l.b16 %v566
      %v719 = vunpack.c.l.b16 %v567
      %v720 = vunpack.c.l.b16 %v568
      %v721 = vunpack.c.l.b16 %v569
      %v722 = vunpack.c.l.b16 %v570
      %v723 = vunpack.c.l.b16 %v571
      %v724 = vunpack.c.l.b16 %v572
      %v725 = vunpack.c.l.b16 %v573
      %v726 = vunpack.c.l.b16 %v574
      %v727 = vunpack.c.l.b16 %v575
      %v728 = vunpack.c.l.b16 %v576
      %v729 = vunpack.c.l.b16 %v577
      %v730 = vunpack.c.l.b16 %v578
      %v731 = vunpack.c.l.b16 %v579
      %v732 = vpack.c.b16 %v717, %v716
      %v733 = vpack.c.b16 %v719, %v718
      %v734 = vpack.c.b16 %v721, %v720
      %v735 = vpack.c.b16 %v723, %v722
      %v736 = vpack.c.b16 %v725, %v724
      %v737 = vpack.c.b16 %v727, %v726
      %v738 = vpack.c.b16 %v729, %v728
      %v739 = vpack.c.b16 %v731, %v730
      %748 = vmatprep.subr.bf16.mxu0 0
      %749 = vmatpush1.bf16.msra.mxu0 %v732
      %750 = vmatprep.subr.bf16.mxu0 0
      %751 = vmatpush1.bf16.msra.mxu0 %v733
      %752 = vmatprep.subr.bf16.mxu0 0
      %753 = vmatpush1.bf16.msra.mxu0 %v734
      %754 = vmatprep.subr.bf16.mxu0 0
      %755 = vmatpush1.bf16.msra.mxu0 %v735
      %756 = vmatprep.subr.bf16.mxu0 0
      %757 = vmatpush1.bf16.msra.mxu0 %v736
      %758 = vmatprep.subr.bf16.mxu0 0
      %759 = vmatpush1.bf16.msra.mxu0 %v737
      %760 = vmatprep.subr.bf16.mxu0 0
      %761 = vmatpush1.bf16.msra.mxu0 %v738
      %762 = vmatprep.subr.bf16.mxu0 0
      %763 = vmatpush1.bf16.msra.mxu0 %v739
      %764 = vmatprep.subr.bf16.mxu0 0
      %765 = vmatpush1.bf16.msra.mxu0 0
      %766 = vmatprep.subr.bf16.mxu0 0
      %767 = vmatpush1.bf16.msra.mxu0 0
      %768 = vmatprep.subr.bf16.mxu0 0
      %769 = vmatpush1.bf16.msra.mxu0 0
      %770 = vmatprep.subr.bf16.mxu0 0
      %771 = vmatpush1.bf16.msra.mxu0 0
      %772 = vmatprep.subr.bf16.mxu0 0
      %773 = vmatpush1.bf16.msra.mxu0 0
      %774 = vmatprep.subr.bf16.mxu0 0
      %775 = vmatpush1.bf16.msra.mxu0 0
      %776 = vmatprep.subr.bf16.mxu0 0
      %777 = vmatpush1.bf16.msra.mxu0 0
      %778 = vmatprep.subr.bf16.mxu0 0
      %779 = vmatpush1.bf16.msra.mxu0 0
      %780 = vmatprep.mubr.bf16.mxu0 0
      %781 = vmatmul.mubr.bf16.gmra.mrb[0].mxu0 %v562
      %v782 = vpop.f32.mrb[0].mxu0
      %v783 = vadd.f32 %v686, %v782
      %v784 = vpop.f32.mrb[0].mxu0
      %v785 = vpop.f32.mrb[0].mxu0
      %v786 = vadd.f32 %v689, %v785
      %v787 = vpop.f32.mrb[0].mxu0
      %788 = vmatprep.mubr.bf16.mxu0 0
      %789 = vmatmul.mubr.bf16.gmra.mrb[0].mxu0 %v563
      %v790 = vpop.f32.mrb[0].mxu0
      %v791 = vadd.f32 %v694, %v790
      %v792 = vpop.f32.mrb[0].mxu0
      %v793 = vpop.f32.mrb[0].mxu0
      %v794 = vadd.f32 %v697, %v793
      %v795 = vpop.f32.mrb[0].mxu0
      %796 = vdwg.mxu0
      %v797 = vld [vmem:[#allocation3 + $0x2] sm:$0xff]
      %v798 = vld [vmem:[#allocation3 + $0xa] sm:$0xff]
      %v799 = vld [vmem:[#allocation3 + $0x1a] sm:$0xff]
      %v800 = vld [vmem:[#allocation3 + $0x22] sm:$0xff]
      %v801 = vpack.c.bf16 %v798, %v797
      %v802 = vpack.c.bf16 %v800, %v799
      %s803 = scalar_lea.vmem %s5, 128
      %v804 = vld [vmem:[%s803] sm:$0xf]
      %v805 = vld [vmem:[%s803 + $0x4] sm:$0xf]
      %v806 = vld [vmem:[%s803 + $0x8] sm:$0xf]
      %v807 = vld [vmem:[%s803 + $0xc] sm:$0xf]
      %v808 = vld [vmem:[%s803 + $0x10] sm:$0xf]
      %v809 = vld [vmem:[%s803 + $0x14] sm:$0xf]
      %v810 = vld [vmem:[%s803 + $0x18] sm:$0xf]
      %v811 = vld [vmem:[%s803 + $0x1c] sm:$0xf]
      %v812 = vld [vmem:[%s803 + $0x20] sm:$0xf]
      %v813 = vld [vmem:[%s803 + $0x24] sm:$0xf]
      %v814 = vld [vmem:[%s803 + $0x28] sm:$0xf]
      %v815 = vld [vmem:[%s803 + $0x2c] sm:$0xf]
      %v816 = vld [vmem:[%s803 + $0x30] sm:$0xf]
      %v817 = vld [vmem:[%s803 + $0x34] sm:$0xf]
      %v818 = vld [vmem:[%s803 + $0x38] sm:$0xf]
      %v819 = vld [vmem:[%s803 + $0x3c] sm:$0xf]
      %v836 = vunpack.c.l.b16 %v804
      %v837 = vunpack.c.l.b16 %v805
      %v838 = vunpack.c.l.b16 %v806
      %v839 = vunpack.c.l.b16 %v807
      %v840 = vunpack.c.l.b16 %v808
      %v841 = vunpack.c.l.b16 %v809
      %v842 = vunpack.c.l.b16 %v810
      %v843 = vunpack.c.l.b16 %v811
      %v844 = vunpack.c.l.b16 %v812
      %v845 = vunpack.c.l.b16 %v813
      %v846 = vunpack.c.l.b16 %v814
      %v847 = vunpack.c.l.b16 %v815
      %v848 = vunpack.c.l.b16 %v816
      %v849 = vunpack.c.l.b16 %v817
      %v850 = vunpack.c.l.b16 %v818
      %v851 = vunpack.c.l.b16 %v819
      %v852 = vpack.c.b16 %v837, %v836
      %v853 = vpack.c.b16 %v839, %v838
      %v854 = vpack.c.b16 %v841, %v840
      %v855 = vpack.c.b16 %v843, %v842
      %v856 = vpack.c.b16 %v845, %v844
      %v857 = vpack.c.b16 %v847, %v846
      %v858 = vpack.c.b16 %v849, %v848
      %v859 = vpack.c.b16 %v851, %v850
      %868 = vmatprep.subr.bf16.mxu0 0
      %869 = vmatpush1.bf16.msra.mxu0 %v852
      %870 = vmatprep.subr.bf16.mxu0 0
      %871 = vmatpush1.bf16.msra.mxu0 %v853
      %872 = vmatprep.subr.bf16.mxu0 0
      %873 = vmatpush1.bf16.msra.mxu0 %v854
      %874 = vmatprep.subr.bf16.mxu0 0
      %875 = vmatpush1.bf16.msra.mxu0 %v855
      %876 = vmatprep.subr.bf16.mxu0 0
      %877 = vmatpush1.bf16.msra.mxu0 %v856
      %878 = vmatprep.subr.bf16.mxu0 0
      %879 = vmatpush1.bf16.msra.mxu0 %v857
      %880 = vmatprep.subr.bf16.mxu0 0
      %881 = vmatpush1.bf16.msra.mxu0 %v858
      %882 = vmatprep.subr.bf16.mxu0 0
      %883 = vmatpush1.bf16.msra.mxu0 %v859
      %884 = vmatprep.subr.bf16.mxu0 0
      %885 = vmatpush1.bf16.msra.mxu0 0
      %886 = vmatprep.subr.bf16.mxu0 0
      %887 = vmatpush1.bf16.msra.mxu0 0
      %888 = vmatprep.subr.bf16.mxu0 0
      %889 = vmatpush1.bf16.msra.mxu0 0
      %890 = vmatprep.subr.bf16.mxu0 0
      %891 = vmatpush1.bf16.msra.mxu0 0
      %892 = vmatprep.subr.bf16.mxu0 0
      %893 = vmatpush1.bf16.msra.mxu0 0
      %894 = vmatprep.subr.bf16.mxu0 0
      %895 = vmatpush1.bf16.msra.mxu0 0
      %896 = vmatprep.subr.bf16.mxu0 0
      %897 = vmatpush1.bf16.msra.mxu0 0
      %898 = vmatprep.subr.bf16.mxu0 0
      %899 = vmatpush1.bf16.msra.mxu0 0
      %900 = vmatprep.mubr.bf16.mxu0 0
      %901 = vmatmul.mubr.bf16.gmra.mrb[0].mxu0 %v801
      %v902 = vpop.f32.mrb[0].mxu0
      %v903 = vadd.f32 0.0, %v902
      %v904 = vpop.f32.mrb[0].mxu0
      %v905 = vpop.f32.mrb[0].mxu0
      %v906 = vadd.f32 0.0, %v905
      %v907 = vpop.f32.mrb[0].mxu0
      %908 = vmatprep.mubr.bf16.mxu0 0
      %909 = vmatmul.mubr.bf16.gmra.mrb[0].mxu0 %v802
      %v910 = vpop.f32.mrb[0].mxu0
      %v911 = vadd.f32 0.0, %v910
      %v912 = vpop.f32.mrb[0].mxu0
      %v913 = vpop.f32.mrb[0].mxu0
      %v914 = vadd.f32 0.0, %v913
      %v915 = vpop.f32.mrb[0].mxu0
      %916 = vdwg.mxu0
      %v917 = vadd.f32 %v783, %v903
      %v918 = vadd.f32 %v786, %v906
      %v919 = vadd.f32 %v791, %v911
      %v920 = vadd.f32 %v794, %v914
      %v921 = vld [vmem:[#allocation3 + $0x3] sm:$0xff]
      %v922 = vld [vmem:[#allocation3 + $0xb] sm:$0xff]
      %v923 = vld [vmem:[#allocation3 + $0x1b] sm:$0xff]
      %v924 = vld [vmem:[#allocation3 + $0x23] sm:$0xff]
      %v925 = vpack.c.bf16 %v922, %v921
      %v926 = vpack.c.bf16 %v924, %v923
      %s927 = scalar_lea.vmem %s5, 192
      %v928 = vld [vmem:[%s927] sm:$0xf]
      %v929 = vld [vmem:[%s927 + $0x4] sm:$0xf]
      %v930 = vld [vmem:[%s927 + $0x8] sm:$0xf]
      %v931 = vld [vmem:[%s927 + $0xc] sm:$0xf]
      %v932 = vld [vmem:[%s927 + $0x10] sm:$0xf]
      %v933 = vld [vmem:[%s927 + $0x14] sm:$0xf]
      %v934 = vld [vmem:[%s927 + $0x18] sm:$0xf]
      %v935 = vld [vmem:[%s927 + $0x1c] sm:$0xf]
      %v936 = vld [vmem:[%s927 + $0x20] sm:$0xf]
      %v937 = vld [vmem:[%s927 + $0x24] sm:$0xf]
      %v938 = vld [vmem:[%s927 + $0x28] sm:$0xf]
      %v939 = vld [vmem:[%s927 + $0x2c] sm:$0xf]
      %v940 = vld [vmem:[%s927 + $0x30] sm:$0xf]
      %v941 = vld [vmem:[%s927 + $0x34] sm:$0xf]
      %v942 = vld [vmem:[%s927 + $0x38] sm:$0xf]
      %v943 = vld [vmem:[%s927 + $0x3c] sm:$0xf]
      %v960 = vunpack.c.l.b16 %v928
      %v961 = vunpack.c.l.b16 %v929
      %v962 = vunpack.c.l.b16 %v930
      %v963 = vunpack.c.l.b16 %v931
      %v964 = vunpack.c.l.b16 %v932
      %v965 = vunpack.c.l.b16 %v933
      %v966 = vunpack.c.l.b16 %v934
      %v967 = vunpack.c.l.b16 %v935
      %v968 = vunpack.c.l.b16 %v936
      %v969 = vunpack.c.l.b16 %v937
      %v970 = vunpack.c.l.b16 %v938
      %v971 = vunpack.c.l.b16 %v939
      %v972 = vunpack.c.l.b16 %v940
      %v973 = vunpack.c.l.b16 %v941
      %v974 = vunpack.c.l.b16 %v942
      %v975 = vunpack.c.l.b16 %v943
      %v976 = vpack.c.b16 %v961, %v960
      %v977 = vpack.c.b16 %v963, %v962
      %v978 = vpack.c.b16 %v965, %v964
      %v979 = vpack.c.b16 %v967, %v966
      %v980 = vpack.c.b16 %v969, %v968
      %v981 = vpack.c.b16 %v971, %v970
      %v982 = vpack.c.b16 %v973, %v972
      %v983 = vpack.c.b16 %v975, %v974
      %992 = vmatprep.subr.bf16.mxu0 0
      %993 = vmatpush1.bf16.msra.mxu0 %v976
      %994 = vmatprep.subr.bf16.mxu0 0
      %995 = vmatpush1.bf16.msra.mxu0 %v977
      %996 = vmatprep.subr.bf16.mxu0 0
      %997 = vmatpush1.bf16.msra.mxu0 %v978
      %998 = vmatprep.subr.bf16.mxu0 0
      %999 = vmatpush1.bf16.msra.mxu0 %v979
      %1000 = vmatprep.subr.bf16.mxu0 0
      %1001 = vmatpush1.bf16.msra.mxu0 %v980
      %1002 = vmatprep.subr.bf16.mxu0 0
      %1003 = vmatpush1.bf16.msra.mxu0 %v981
      %1004 = vmatprep.subr.bf16.mxu0 0
      %1005 = vmatpush1.bf16.msra.mxu0 %v982
      %1006 = vmatprep.subr.bf16.mxu0 0
      %1007 = vmatpush1.bf16.msra.mxu0 %v983
      %1008 = vmatprep.subr.bf16.mxu0 0
      %1009 = vmatpush1.bf16.msra.mxu0 0
      %1010 = vmatprep.subr.bf16.mxu0 0
      %1011 = vmatpush1.bf16.msra.mxu0 0
      %1012 = vmatprep.subr.bf16.mxu0 0
      %1013 = vmatpush1.bf16.msra.mxu0 0
      %1014 = vmatprep.subr.bf16.mxu0 0
      %1015 = vmatpush1.bf16.msra.mxu0 0
      %1016 = vmatprep.subr.bf16.mxu0 0
      %1017 = vmatpush1.bf16.msra.mxu0 0
      %1018 = vmatprep.subr.bf16.mxu0 0
      %1019 = vmatpush1.bf16.msra.mxu0 0
      %1020 = vmatprep.subr.bf16.mxu0 0
      %1021 = vmatpush1.bf16.msra.mxu0 0
      %1022 = vmatprep.subr.bf16.mxu0 0
      %1023 = vmatpush1.bf16.msra.mxu0 0
      %1024 = vmatprep.mubr.bf16.mxu0 0
      %1025 = vmatmul.mubr.bf16.gmra.mrb[0].mxu0 %v925
      %v1026 = vpop.f32.mrb[0].mxu0
      %v1027 = vadd.f32 0.0, %v1026
      %v1028 = vpop.f32.mrb[0].mxu0
      %v1029 = vpop.f32.mrb[0].mxu0
      %v1030 = vadd.f32 0.0, %v1029
      %v1031 = vpop.f32.mrb[0].mxu0
      %1032 = vmatprep.mubr.bf16.mxu0 0
      %1033 = vmatmul.mubr.bf16.gmra.mrb[0].mxu0 %v926
      %v1034 = vpop.f32.mrb[0].mxu0
      %v1035 = vadd.f32 0.0, %v1034
      %v1036 = vpop.f32.mrb[0].mxu0
      %v1037 = vpop.f32.mrb[0].mxu0
      %v1038 = vadd.f32 0.0, %v1037
      %v1039 = vpop.f32.mrb[0].mxu0
      %1040 = vdwg.mxu0
      %v1041 = vadd.f32 %v917, %v1027
      %v1042 = vadd.f32 %v918, %v1030
      %v1043 = vadd.f32 %v919, %v1035
      %v1044 = vadd.f32 %v920, %v1038
      %v1045 = vld [vmem:[#allocation3 + $0x4] sm:$0xff]
      %v1046 = vld [vmem:[#allocation3 + $0xc] sm:$0xff]
      %v1047 = vld [vmem:[#allocation3 + $0x1c] sm:$0xff]
      %v1048 = vld [vmem:[#allocation3 + $0x24] sm:$0xff]
      %v1049 = vpack.c.bf16 %v1046, %v1045
      %v1050 = vpack.c.bf16 %v1048, %v1047
      %s1051 = scalar_lea.vmem %s5, 256
      %v1052 = vld [vmem:[%s1051] sm:$0xf]
      %v1053 = vld [vmem:[%s1051 + $0x4] sm:$0xf]
      %v1054 = vld [vmem:[%s1051 + $0x8] sm:$0xf]
      %v1055 = vld [vmem:[%s1051 + $0xc] sm:$0xf]
      %v1056 = vld [vmem:[%s1051 + $0x10] sm:$0xf]
      %v1057 = vld [vmem:[%s1051 + $0x14] sm:$0xf]
      %v1058 = vld [vmem:[%s1051 + $0x18] sm:$0xf]
      %v1059 = vld [vmem:[%s1051 + $0x1c] sm:$0xf]
      %v1060 = vld [vmem:[%s1051 + $0x20] sm:$0xf]
      %v1061 = vld [vmem:[%s1051 + $0x24] sm:$0xf]
      %v1062 = vld [vmem:[%s1051 + $0x28] sm:$0xf]
      %v1063 = vld [vmem:[%s1051 + $0x2c] sm:$0xf]
      %v1064 = vld [vmem:[%s1051 + $0x30] sm:$0xf]
      %v1065 = vld [vmem:[%s1051 + $0x34] sm:$0xf]
      %v1066 = vld [vmem:[%s1051 + $0x38] sm:$0xf]
      %v1067 = vld [vmem:[%s1051 + $0x3c] sm:$0xf]
      %v1084 = vunpack.c.l.b16 %v1052
      %v1085 = vunpack.c.l.b16 %v1053
      %v1086 = vunpack.c.l.b16 %v1054
      %v1087 = vunpack.c.l.b16 %v1055
      %v1088 = vunpack.c.l.b16 %v1056
      %v1089 = vunpack.c.l.b16 %v1057
      %v1090 = vunpack.c.l.b16 %v1058
      %v1091 = vunpack.c.l.b16 %v1059
      %v1092 = vunpack.c.l.b16 %v1060
      %v1093 = vunpack.c.l.b16 %v1061
      %v1094 = vunpack.c.l.b16 %v1062
      %v1095 = vunpack.c.l.b16 %v1063
      %v1096 = vunpack.c.l.b16 %v1064
      %v1097 = vunpack.c.l.b16 %v1065
      %v1098 = vunpack.c.l.b16 %v1066
      %v1099 = vunpack.c.l.b16 %v1067
      %v1100 = vpack.c.b16 %v1085, %v1084
      %v1101 = vpack.c.b16 %v1087, %v1086
      %v1102 = vpack.c.b16 %v1089, %v1088
      %v1103 = vpack.c.b16 %v1091, %v1090
      %v1104 = vpack.c.b16 %v1093, %v1092
      %v1105 = vpack.c.b16 %v1095, %v1094
      %v1106 = vpack.c.b16 %v1097, %v1096
      %v1107 = vpack.c.b16 %v1099, %v1098
      %1116 = vmatprep.subr.bf16.mxu0 0
      %1117 = vmatpush1.bf16.msra.mxu0 %v1100
      %1118 = vmatprep.subr.bf16.mxu0 0
      %1119 = vmatpush1.bf16.msra.mxu0 %v1101
      %1120 = vmatprep.subr.bf16.mxu0 0
      %1121 = vmatpush1.bf16.msra.mxu0 %v1102
      %1122 = vmatprep.subr.bf16.mxu0 0
      %1123 = vmatpush1.bf16.msra.mxu0 %v1103
      %1124 = vmatprep.subr.bf16.mxu0 0
      %1125 = vmatpush1.bf16.msra.mxu0 %v1104
      %1126 = vmatprep.subr.bf16.mxu0 0
      %1127 = vmatpush1.bf16.msra.mxu0 %v1105
      %1128 = vmatprep.subr.bf16.mxu0 0
      %1129 = vmatpush1.bf16.msra.mxu0 %v1106
      %1130 = vmatprep.subr.bf16.mxu0 0
      %1131 = vmatpush1.bf16.msra.mxu0 %v1107
      %1132 = vmatprep.subr.bf16.mxu0 0
      %1133 = vmatpush1.bf16.msra.mxu0 0
      %1134 = vmatprep.subr.bf16.mxu0 0
      %1135 = vmatpush1.bf16.msra.mxu0 0
      %1136 = vmatprep.subr.bf16.mxu0 0
      %1137 = vmatpush1.bf16.msra.mxu0 0
      %1138 = vmatprep.subr.bf16.mxu0 0
      %1139 = vmatpush1.bf16.msra.mxu0 0
      %1140 = vmatprep.subr.bf16.mxu0 0
      %1141 = vmatpush1.bf16.msra.mxu0 0
      %1142 = vmatprep.subr.bf16.mxu0 0
      %1143 = vmatpush1.bf16.msra.mxu0 0
      %1144 = vmatprep.subr.bf16.mxu0 0
      %1145 = vmatpush1.bf16.msra.mxu0 0
      %1146 = vmatprep.subr.bf16.mxu0 0
      %1147 = vmatpush1.bf16.msra.mxu0 0
      %1148 = vmatprep.mubr.bf16.mxu0 0
      %1149 = vmatmul.mubr.bf16.gmra.mrb[0].mxu0 %v1049
      %v1150 = vpop.f32.mrb[0].mxu0
      %v1151 = vadd.f32 0.0, %v1150
      %v1152 = vpop.f32.mrb[0].mxu0
      %v1153 = vpop.f32.mrb[0].mxu0
      %v1154 = vadd.f32 0.0, %v1153
      %v1155 = vpop.f32.mrb[0].mxu0
      %1156 = vmatprep.mubr.bf16.mxu0 0
      %1157 = vmatmul.mubr.bf16.gmra.mrb[0].mxu0 %v1050
      %v1158 = vpop.f32.mrb[0].mxu0
      %v1159 = vadd.f32 0.0, %v1158
      %v1160 = vpop.f32.mrb[0].mxu0
      %v1161 = vpop.f32.mrb[0].mxu0
      %v1162 = vadd.f32 0.0, %v1161
      %v1163 = vpop.f32.mrb[0].mxu0
      %1164 = vdwg.mxu0
      %v1165 = vadd.f32 %v1041, %v1151
      %v1166 = vadd.f32 %v1042, %v1154
      %v1167 = vadd.f32 %v1043, %v1159
      %v1168 = vadd.f32 %v1044, %v1162
      %v1169 = vld [vmem:[#allocation3 + $0x5] sm:$0xff]
      %v1170 = vld [vmem:[#allocation3 + $0xd] sm:$0xff]
      %v1171 = vld [vmem:[#allocation3 + $0x1d] sm:$0xff]
      %v1172 = vld [vmem:[#allocation3 + $0x25] sm:$0xff]
      %v1173 = vpack.c.bf16 %v1170, %v1169
      %v1174 = vpack.c.bf16 %v1172, %v1171
      %s1175 = scalar_lea.vmem %s5, 320
      %v1176 = vld [vmem:[%s1175] sm:$0xf]
      %v1177 = vld [vmem:[%s1175 + $0x4] sm:$0xf]
      %v1178 = vld [vmem:[%s1175 + $0x8] sm:$0xf]
      %v1179 = vld [vmem:[%s1175 + $0xc] sm:$0xf]
      %v1180 = vld [vmem:[%s1175 + $0x10] sm:$0xf]
      %v1181 = vld [vmem:[%s1175 + $0x14] sm:$0xf]
      %v1182 = vld [vmem:[%s1175 + $0x18] sm:$0xf]
      %v1183 = vld [vmem:[%s1175 + $0x1c] sm:$0xf]
      %v1184 = vld [vmem:[%s1175 + $0x20] sm:$0xf]
      %v1185 = vld [vmem:[%s1175 + $0x24] sm:$0xf]
      %v1186 = vld [vmem:[%s1175 + $0x28] sm:$0xf]
      %v1187 = vld [vmem:[%s1175 + $0x2c] sm:$0xf]
      %v1188 = vld [vmem:[%s1175 + $0x30] sm:$0xf]
      %v1189 = vld [vmem:[%s1175 + $0x34] sm:$0xf]
      %v1190 = vld [vmem:[%s1175 + $0x38] sm:$0xf]
      %v1191 = vld [vmem:[%s1175 + $0x3c] sm:$0xf]
      %v1208 = vunpack.c.l.b16 %v1176
      %v1209 = vunpack.c.l.b16 %v1177
      %v1210 = vunpack.c.l.b16 %v1178
      %v1211 = vunpack.c.l.b16 %v1179
      %v1212 = vunpack.c.l.b16 %v1180
      %v1213 = vunpack.c.l.b16 %v1181
      %v1214 = vunpack.c.l.b16 %v1182
      %v1215 = vunpack.c.l.b16 %v1183
      %v1216 = vunpack.c.l.b16 %v1184
      %v1217 = vunpack.c.l.b16 %v1185
      %v1218 = vunpack.c.l.b16 %v1186
      %v1219 = vunpack.c.l.b16 %v1187
      %v1220 = vunpack.c.l.b16 %v1188
      %v1221 = vunpack.c.l.b16 %v1189
      %v1222 = vunpack.c.l.b16 %v1190
      %v1223 = vunpack.c.l.b16 %v1191
      %v1224 = vpack.c.b16 %v1209, %v1208
      %v1225 = vpack.c.b16 %v1211, %v1210
      %v1226 = vpack.c.b16 %v1213, %v1212
      %v1227 = vpack.c.b16 %v1215, %v1214
      %v1228 = vpack.c.b16 %v1217, %v1216
      %v1229 = vpack.c.b16 %v1219, %v1218
      %v1230 = vpack.c.b16 %v1221, %v1220
      %v1231 = vpack.c.b16 %v1223, %v1222
      %1240 = vmatprep.subr.bf16.mxu0 0
      %1241 = vmatpush1.bf16.msra.mxu0 %v1224
      %1242 = vmatprep.subr.bf16.mxu0 0
      %1243 = vmatpush1.bf16.msra.mxu0 %v1225
      %1244 = vmatprep.subr.bf16.mxu0 0
      %1245 = vmatpush1.bf16.msra.mxu0 %v1226
      %1246 = vmatprep.subr.bf16.mxu0 0
      %1247 = vmatpush1.bf16.msra.mxu0 %v1227
      %1248 = vmatprep.subr.bf16.mxu0 0
      %1249 = vmatpush1.bf16.msra.mxu0 %v1228
      %1250 = vmatprep.subr.bf16.mxu0 0
      %1251 = vmatpush1.bf16.msra.mxu0 %v1229
      %1252 = vmatprep.subr.bf16.mxu0 0
      %1253 = vmatpush1.bf16.msra.mxu0 %v1230
      %1254 = vmatprep.subr.bf16.mxu0 0
      %1255 = vmatpush1.bf16.msra.mxu0 %v1231
      %1256 = vmatprep.subr.bf16.mxu0 0
      %1257 = vmatpush1.bf16.msra.mxu0 0
      %1258 = vmatprep.subr.bf16.mxu0 0
      %1259 = vmatpush1.bf16.msra.mxu0 0
      %1260 = vmatprep.subr.bf16.mxu0 0
      %1261 = vmatpush1.bf16.msra.mxu0 0
      %1262 = vmatprep.subr.bf16.mxu0 0
      %1263 = vmatpush1.bf16.msra.mxu0 0
      %1264 = vmatprep.subr.bf16.mxu0 0
      %1265 = vmatpush1.bf16.msra.mxu0 0
      %1266 = vmatprep.subr.bf16.mxu0 0
      %1267 = vmatpush1.bf16.msra.mxu0 0
      %1268 = vmatprep.subr.bf16.mxu0 0
      %1269 = vmatpush1.bf16.msra.mxu0 0
      %1270 = vmatprep.subr.bf16.mxu0 0
      %1271 = vmatpush1.bf16.msra.mxu0 0
      %1272 = vmatprep.mubr.bf16.mxu0 0
      %1273 = vmatmul.mubr.bf16.gmra.mrb[0].mxu0 %v1173
      %v1274 = vpop.f32.mrb[0].mxu0
      %v1275 = vadd.f32 0.0, %v1274
      %v1276 = vpop.f32.mrb[0].mxu0
      %v1277 = vpop.f32.mrb[0].mxu0
      %v1278 = vadd.f32 0.0, %v1277
      %v1279 = vpop.f32.mrb[0].mxu0
      %1280 = vmatprep.mubr.bf16.mxu0 0
      %1281 = vmatmul.mubr.bf16.gmra.mrb[0].mxu0 %v1174
      %v1282 = vpop.f32.mrb[0].mxu0
      %v1283 = vadd.f32 0.0, %v1282
      %v1284 = vpop.f32.mrb[0].mxu0
      %v1285 = vpop.f32.mrb[0].mxu0
      %v1286 = vadd.f32 0.0, %v1285
      %v1287 = vpop.f32.mrb[0].mxu0
      %1288 = vdwg.mxu0
      %v1289 = vadd.f32 %v1165, %v1275
      %v1290 = vadd.f32 %v1166, %v1278
      %v1291 = vadd.f32 %v1167, %v1283
      %v1292 = vadd.f32 %v1168, %v1286
      %v1293 = vld [vmem:[#allocation3 + $0x6] sm:$0xff]
      %v1294 = vld [vmem:[#allocation3 + $0xe] sm:$0xff]
      %v1295 = vld [vmem:[#allocation3 + $0x1e] sm:$0xff]
      %v1296 = vld [vmem:[#allocation3 + $0x26] sm:$0xff]
      %v1297 = vpack.c.bf16 %v1294, %v1293
      %v1298 = vpack.c.bf16 %v1296, %v1295
      %s1299 = scalar_lea.vmem %s5, 384
      %v1300 = vld [vmem:[%s1299] sm:$0xf]
      %v1301 = vld [vmem:[%s1299 + $0x4] sm:$0xf]
      %v1302 = vld [vmem:[%s1299 + $0x8] sm:$0xf]
      %v1303 = vld [vmem:[%s1299 + $0xc] sm:$0xf]
      %v1304 = vld [vmem:[%s1299 + $0x10] sm:$0xf]
      %v1305 = vld [vmem:[%s1299 + $0x14] sm:$0xf]
      %v1306 = vld [vmem:[%s1299 + $0x18] sm:$0xf]
      %v1307 = vld [vmem:[%s1299 + $0x1c] sm:$0xf]
      %v1308 = vld [vmem:[%s1299 + $0x20] sm:$0xf]
      %v1309 = vld [vmem:[%s1299 + $0x24] sm:$0xf]
      %v1310 = vld [vmem:[%s1299 + $0x28] sm:$0xf]
      %v1311 = vld [vmem:[%s1299 + $0x2c] sm:$0xf]
      %v1312 = vld [vmem:[%s1299 + $0x30] sm:$0xf]
      %v1313 = vld [vmem:[%s1299 + $0x34] sm:$0xf]
      %v1314 = vld [vmem:[%s1299 + $0x38] sm:$0xf]
      %v1315 = vld [vmem:[%s1299 + $0x3c] sm:$0xf]
      %v1332 = vunpack.c.l.b16 %v1300
      %v1333 = vunpack.c.l.b16 %v1301
      %v1334 = vunpack.c.l.b16 %v1302
      %v1335 = vunpack.c.l.b16 %v1303
      %v1336 = vunpack.c.l.b16 %v1304
      %v1337 = vunpack.c.l.b16 %v1305
      %v1338 = vunpack.c.l.b16 %v1306
      %v1339 = vunpack.c.l.b16 %v1307
      %v1340 = vunpack.c.l.b16 %v1308
      %v1341 = vunpack.c.l.b16 %v1309
      %v1342 = vunpack.c.l.b16 %v1310
      %v1343 = vunpack.c.l.b16 %v1311
      %v1344 = vunpack.c.l.b16 %v1312
      %v1345 = vunpack.c.l.b16 %v1313
      %v1346 = vunpack.c.l.b16 %v1314
      %v1347 = vunpack.c.l.b16 %v1315
      %v1348 = vpack.c.b16 %v1333, %v1332
      %v1349 = vpack.c.b16 %v1335, %v1334
      %v1350 = vpack.c.b16 %v1337, %v1336
      %v1351 = vpack.c.b16 %v1339, %v1338
      %v1352 = vpack.c.b16 %v1341, %v1340
      %v1353 = vpack.c.b16 %v1343, %v1342
      %v1354 = vpack.c.b16 %v1345, %v1344
      %v1355 = vpack.c.b16 %v1347, %v1346
      %1364 = vmatprep.subr.bf16.mxu0 0
      %1365 = vmatpush1.bf16.msra.mxu0 %v1348
      %1366 = vmatprep.subr.bf16.mxu0 0
      %1367 = vmatpush1.bf16.msra.mxu0 %v1349
      %1368 = vmatprep.subr.bf16.mxu0 0
      %1369 = vmatpush1.bf16.msra.mxu0 %v1350
      %1370 = vmatprep.subr.bf16.mxu0 0
      %1371 = vmatpush1.bf16.msra.mxu0 %v1351
      %1372 = vmatprep.subr.bf16.mxu0 0
      %1373 = vmatpush1.bf16.msra.mxu0 %v1352
      %1374 = vmatprep.subr.bf16.mxu0 0
      %1375 = vmatpush1.bf16.msra.mxu0 %v1353
      %1376 = vmatprep.subr.bf16.mxu0 0
      %1377 = vmatpush1.bf16.msra.mxu0 %v1354
      %1378 = vmatprep.subr.bf16.mxu0 0
      %1379 = vmatpush1.bf16.msra.mxu0 %v1355
      %1380 = vmatprep.subr.bf16.mxu0 0
      %1381 = vmatpush1.bf16.msra.mxu0 0
      %1382 = vmatprep.subr.bf16.mxu0 0
      %1383 = vmatpush1.bf16.msra.mxu0 0
      %1384 = vmatprep.subr.bf16.mxu0 0
      %1385 = vmatpush1.bf16.msra.mxu0 0
      %1386 = vmatprep.subr.bf16.mxu0 0
      %1387 = vmatpush1.bf16.msra.mxu0 0
      %1388 = vmatprep.subr.bf16.mxu0 0
      %1389 = vmatpush1.bf16.msra.mxu0 0
      %1390 = vmatprep.subr.bf16.mxu0 0
      %1391 = vmatpush1.bf16.msra.mxu0 0
      %1392 = vmatprep.subr.bf16.mxu0 0
      %1393 = vmatpush1.bf16.msra.mxu0 0
      %1394 = vmatprep.subr.bf16.mxu0 0
      %1395 = vmatpush1.bf16.msra.mxu0 0
      %1396 = vmatprep.mubr.bf16.mxu0 0
      %1397 = vmatmul.mubr.bf16.gmra.mrb[0].mxu0 %v1297
      %v1398 = vpop.f32.mrb[0].mxu0
      %v1399 = vadd.f32 0.0, %v1398
      %v1400 = vpop.f32.mrb[0].mxu0
      %v1401 = vpop.f32.mrb[0].mxu0
      %v1402 = vadd.f32 0.0, %v1401
      %v1403 = vpop.f32.mrb[0].mxu0
      %1404 = vmatprep.mubr.bf16.mxu0 0
      %1405 = vmatmul.mubr.bf16.gmra.mrb[0].mxu0 %v1298
      %v1406 = vpop.f32.mrb[0].mxu0
      %v1407 = vadd.f32 0.0, %v1406
      %v1408 = vpop.f32.mrb[0].mxu0
      %v1409 = vpop.f32.mrb[0].mxu0
      %v1410 = vadd.f32 0.0, %v1409
      %v1411 = vpop.f32.mrb[0].mxu0
      %1412 = vdwg.mxu0
      %v1413 = vadd.f32 %v1289, %v1399
      %v1414 = vadd.f32 %v1290, %v1402
      %v1415 = vadd.f32 %v1291, %v1407
      %v1416 = vadd.f32 %v1292, %v1410
      %v1417 = vxor.u32 %v1413, 2147483648
      %v1418 = vxor.u32 %v1414, 2147483648
      %v1419 = vxor.u32 %v1415, 2147483648
      %v1420 = vxor.u32 %v1416, 2147483648
      %v1421 = vmul.f32 %v1417, 1.442695
      %v1422 = vpow.pop %v1421
      %v1423 = vmul.f32 %v1418, 1.442695
      %v1424 = vpow.pop %v1423
      %v1425 = vmul.f32 %v1419, 1.442695
      %v1426 = vpow.pop %v1425
      %v1427 = vmul.f32 %v1420, 1.442695
      %v1428 = vpow.pop %v1427
      %v1429 = vadd.f32 %v1422, 1.0
      %v1430 = vadd.f32 %v1424, 1.0
      %v1431 = vadd.f32 %v1426, 1.0
      %v1432 = vadd.f32 %v1428, 1.0
      %v1433 = vrcp.pop %v1429
      %v1434 = vmul.f32 1.0, %v1433
      %v1435 = vrcp.pop %v1430
      %v1436 = vmul.f32 1.0, %v1435
      %v1437 = vrcp.pop %v1431
      %v1438 = vmul.f32 1.0, %v1437
      %v1439 = vrcp.pop %v1432
      %v1440 = vmul.f32 1.0, %v1439
      %v1441 = vld [vmem:[%s4] sm:$0xff]
      %v1443 = vsel %vm480, %v509, 0
      %1445 = vmatprep.subr.mxu0 0.0
      %1446 = vmatpush1.msra.mxu0 %v1441
      %1447 = vmatprep.subr.mxu0 0.0
      %1448 = vmatpush1.msra.mxu0 0.0
      %1449 = vmatprep.subr.mxu0 0.0
      %1450 = vmatpush1.msra.mxu0 0.0
      %1451 = vmatprep.subr.mxu0 0.0
      %1452 = vmatpush1.msra.mxu0 0.0
      %1453 = vmatprep.subr.mxu0 0.0
      %1454 = vmatpush1.msra.mxu0 0.0
      %1455 = vmatprep.subr.mxu0 0.0
      %1456 = vmatpush1.msra.mxu0 0.0
      %1457 = vmatprep.subr.mxu0 0.0
      %1458 = vmatpush1.msra.mxu0 0.0
      %1459 = vmatprep.subr.mxu0 0.0
      %1460 = vmatpush1.msra.mxu0 0.0
      %1461 = vmatprep.subr.mxu0 0.0
      %1462 = vmatpush1.msra.mxu0 0.0
      %1463 = vmatprep.subr.mxu0 0.0
      %1464 = vmatpush1.msra.mxu0 0.0
      %1465 = vmatprep.subr.mxu0 0.0
      %1466 = vmatpush1.msra.mxu0 0.0
      %1467 = vmatprep.subr.mxu0 0.0
      %1468 = vmatpush1.msra.mxu0 0.0
      %1469 = vmatprep.subr.mxu0 0.0
      %1470 = vmatpush1.msra.mxu0 0.0
      %1471 = vmatprep.subr.mxu0 0.0
      %1472 = vmatpush1.msra.mxu0 0.0
      %1473 = vmatprep.subr.mxu0 0.0
      %1474 = vmatpush1.msra.mxu0 0.0
      %1475 = vmatprep.subr.mxu0 0.0
      %1476 = vmatpush1.msra.mxu0 0.0
      %1477 = vmatprep.subr.mxu0 0.0
      %1478 = vmatpush1.msra.mxu0 0.0
      %1479 = vmatprep.subr.mxu0 0.0
      %1480 = vmatpush1.msra.mxu0 0.0
      %1481 = vmatprep.subr.mxu0 0.0
      %1482 = vmatpush1.msra.mxu0 0.0
      %1483 = vmatprep.subr.mxu0 0.0
      %1484 = vmatpush1.msra.mxu0 0.0
      %1485 = vmatprep.subr.mxu0 0.0
      %1486 = vmatpush1.msra.mxu0 0.0
      %1487 = vmatprep.subr.mxu0 0.0
      %1488 = vmatpush1.msra.mxu0 0.0
      %1489 = vmatprep.subr.mxu0 0.0
      %1490 = vmatpush1.msra.mxu0 0.0
      %1491 = vmatprep.subr.mxu0 0.0
      %1492 = vmatpush1.msra.mxu0 0.0
      %1493 = vmatprep.subr.mxu0 0.0
      %1494 = vmatpush1.msra.mxu0 0.0
      %1495 = vmatprep.subr.mxu0 0.0
      %1496 = vmatpush1.msra.mxu0 0.0
      %1497 = vmatprep.subr.mxu0 0.0
      %1498 = vmatpush1.msra.mxu0 0.0
      %1499 = vmatprep.subr.mxu0 0.0
      %1500 = vmatpush1.msra.mxu0 0.0
      %1501 = vmatprep.subr.mxu0 0.0
      %1502 = vmatpush1.msra.mxu0 0.0
      %1503 = vmatprep.subr.mxu0 0.0
      %1504 = vmatpush1.msra.mxu0 0.0
      %1505 = vmatprep.subr.mxu0 0.0
      %1506 = vmatpush1.msra.mxu0 0.0
      %1507 = vmatprep.subr.mxu0 0.0
      %1508 = vmatpush1.msra.mxu0 0.0
      %1509 = vmatprep.mubr.f32.mxu0 0.0
      %1510 = vmatmul.mubr.f32.gmra.mrb[0].mxu0 %v1443
      %v1511 = vpop.f32.mrb[0].mxu0
      %v1512 = vadd.f32 0.0, %v1511
      %v1513 = vpop.f32.mrb[0].mxu0
      %1514 = vdwg.mxu0
      %v1517 = vunpack.c.l.s4 1966171168
      %v1518 = vunpack.c.0.s8 %v1517
      %v1519 = vlaneseq
      %v1520 = vshrl.u32 %v1519, 7
      %v1521 = vsub.s32 %v1518, %v1520
      %v1522 = vrot.slane %v1512, %v1521
      %v1523 = vcombine.high %v1522, %v1522
      %v1525 = vunpack.c.l.s4 1966171168
      %v1526 = vunpack.c.0.s8 %v1525
      %v1527 = vlaneseq
      %v1528 = vshrl.u32 %v1527, 7
      %v1529 = vsub.s32 %v1526, %v1528
      %v1530 = vrot.slane %v1522, %v1529
      %v1532 = vunpack.c.l.s4 1966171168
      %v1533 = vunpack.c.0.s8 %v1532
      %v1534 = vlaneseq
      %v1535 = vshrl.u32 %v1534, 7
      %v1536 = vsub.s32 %v1533, %v1535
      %v1537 = vrot.slane %v1523, %v1536
      %v1538 = vlaneseq
      %v1539 = vshrl.u32 %v1538, 7
      %v1540 = vsub.s32 0, %v1539
      %v1541 = vrot.slane %v1530, %v1540
      %v1542 = vlaneseq
      %v1543 = vshrl.u32 %v1542, 7
      %v1544 = vsub.s32 0, %v1543
      %v1545 = vrot.slane %v1537, %v1544
      %v1548 = vmul.f32 %v331, %v1541
      %v1549 = vmul.f32 %v332, %v1541
      %v1550 = vmul.f32 %v333, %v1545
      %v1551 = vmul.f32 %v334, %v1545
      %v1552 = vlaneseq
      %vm1553 = vcmp.ge.s32.totalorder %v1552, 0
      %vm1554 = vcmp.lt.s32.totalorder %v1552, 256
      %vm1555 = vmand %vm1553, %vm1554
      %1556 = vst.msk [vmem:[#allocation2] ss:$8 sm:$0x3] %vm1555, 0.0
      %1557 = vst.msk [vmem:[#allocation2] ss:$8 sm:$0x0] %vm1555, 0.0
      %s1558 = scalar_lea.vmem [#allocation2], 48
      %1559 = vst.msk [vmem:[%s1558] ss:$8 sm:$0x3] %vm1555, 0.0
      %1560 = vst.msk [vmem:[%s1558] ss:$8 sm:$0x0] %vm1555, 0.0
      %s1561 = scalar_lea.vmem [#allocation2], 33
      %1562 = vst.msk [vmem:[%s1561] ss:$8 sm:$0x3] %vm1555, 0.0
      %1563 = vst.msk [vmem:[%s1561] ss:$8 sm:$0x0] %vm1555, 0.0
      %s1564 = scalar_lea.vmem [#allocation2], 81
      %1565 = vst.msk [vmem:[%s1564] ss:$8 sm:$0x3] %vm1555, 0.0
      %1566 = vst.msk [vmem:[%s1564] ss:$8 sm:$0x0] %vm1555, 0.0
      %vm1571 = vcmask 1040384
      %v1572 = vrot.slane %v327, 7
      %v1573 = vrot.slane %v328, 7
      %v1574 = vsel %vm1571, %v1572, %v1573
      %v1575 = vrot.slane %v329, 7
      %v1576 = vrot.slane %v330, 7
      %v1577 = vsel %vm1571, %v1575, %v1576
      %1584 = vst [vmem:[#allocation2] sm:$0xfe] %v1572
      %1585 = vst [vmem:[#allocation2 + $0x10] sm:$0xff] %v1574
      %1586 = vst [vmem:[#allocation2 + $0x20] sm:$0x1] %v1573
      %1587 = vst [vmem:[#allocation2 + $0x30] sm:$0xfe] %v1575
      %1588 = vst [vmem:[#allocation2 + $0x40] sm:$0xff] %v1577
      %1589 = vst [vmem:[#allocation2 + $0x50] sm:$0x1] %v1576
      %v1594 = vrot.slane %v1548, 7
      %v1595 = vrot.slane %v1549, 7
      %v1596 = vsel %vm1571, %v1594, %v1595
      %v1597 = vrot.slane %v1550, 7
      %v1598 = vrot.slane %v1551, 7
      %v1599 = vsel %vm1571, %v1597, %v1598
      %1606 = vst [vmem:[#allocation2 + $0x8] sm:$0xfe] %v1594
      %1607 = vst [vmem:[#allocation2 + $0x18] sm:$0xff] %v1596
      %1608 = vst [vmem:[#allocation2 + $0x28] sm:$0x1] %v1595
      %1609 = vst [vmem:[#allocation2 + $0x38] sm:$0xfe] %v1597
      %1610 = vst [vmem:[#allocation2 + $0x48] sm:$0xff] %v1599
      %1611 = vst [vmem:[#allocation2 + $0x58] sm:$0x1] %v1598
      %v1612 = vld [vmem:[%s7] sm:$0x1]
      %v1614 = vlaneseq
      %v1615 = vshrl.u32 %v1614, 7
      %v1616 = vsub.s32 0, %v1615
      %v1617 = vrot.slane %v1612, %v1616
      %v1619 = vld [vmem:[#allocation2] sm:$0xff]
      %v1620 = vld [vmem:[#allocation2 + $0x8] sm:$0xff]
      %v1621 = vld [vmem:[#allocation2 + $0x10] sm:$0xff]
      %v1622 = vld [vmem:[#allocation2 + $0x18] sm:$0xff]
      %v1623 = vld [vmem:[#allocation2 + $0x30] sm:$0xff]
      %v1624 = vld [vmem:[#allocation2 + $0x38] sm:$0xff]
      %v1625 = vld [vmem:[#allocation2 + $0x40] sm:$0xff]
      %v1626 = vld [vmem:[#allocation2 + $0x48] sm:$0xff]
      %v1627 = vpack.c.bf16 %v1621, %v1619
      %v1628 = vpack.c.bf16 %v1622, %v1620
      %v1629 = vpack.c.bf16 %v1625, %v1623
      %v1630 = vpack.c.bf16 %v1626, %v1624
      %v1631 = vld [vmem:[%s6] sm:$0xf]
      %v1632 = vld [vmem:[%s6 + $0x4] sm:$0xf]
      %v1633 = vld [vmem:[%s6 + $0x8] sm:$0xf]
      %v1634 = vld [vmem:[%s6 + $0xc] sm:$0xf]
      %v1635 = vld [vmem:[%s6 + $0x10] sm:$0xf]
      %v1636 = vld [vmem:[%s6 + $0x14] sm:$0xf]
      %v1637 = vld [vmem:[%s6 + $0x18] sm:$0xf]
      %v1638 = vld [vmem:[%s6 + $0x1c] sm:$0xf]
      %v1639 = vld [vmem:[%s6 + $0x20] sm:$0xf]
      %v1640 = vld [vmem:[%s6 + $0x24] sm:$0xf]
      %v1641 = vld [vmem:[%s6 + $0x28] sm:$0xf]
      %v1642 = vld [vmem:[%s6 + $0x2c] sm:$0xf]
      %v1643 = vld [vmem:[%s6 + $0x30] sm:$0xf]
      %v1644 = vld [vmem:[%s6 + $0x34] sm:$0xf]
      %v1645 = vld [vmem:[%s6 + $0x38] sm:$0xf]
      %v1646 = vld [vmem:[%s6 + $0x3c] sm:$0xf]
      %v1647 = vld [vmem:[%s6 + $0x40] sm:$0xf]
      %v1648 = vld [vmem:[%s6 + $0x44] sm:$0xf]
      %v1649 = vld [vmem:[%s6 + $0x48] sm:$0xf]
      %v1650 = vld [vmem:[%s6 + $0x4c] sm:$0xf]
      %v1651 = vld [vmem:[%s6 + $0x50] sm:$0xf]
      %v1652 = vld [vmem:[%s6 + $0x54] sm:$0xf]
      %v1653 = vld [vmem:[%s6 + $0x58] sm:$0xf]
      %v1654 = vld [vmem:[%s6 + $0x5c] sm:$0xf]
      %v1655 = vld [vmem:[%s6 + $0x60] sm:$0xf]
      %v1656 = vld [vmem:[%s6 + $0x64] sm:$0xf]
      %v1657 = vld [vmem:[%s6 + $0x68] sm:$0xf]
      %v1658 = vld [vmem:[%s6 + $0x6c] sm:$0xf]
      %v1659 = vld [vmem:[%s6 + $0x70] sm:$0xf]
      %v1660 = vld [vmem:[%s6 + $0x74] sm:$0xf]
      %v1661 = vld [vmem:[%s6 + $0x78] sm:$0xf]
      %v1662 = vld [vmem:[%s6 + $0x7c] sm:$0xf]
      %v1695 = vunpack.c.l.b16 %v1631
      %v1696 = vunpack.c.l.b16 %v1632
      %v1697 = vunpack.c.l.b16 %v1633
      %v1698 = vunpack.c.l.b16 %v1634
      %v1699 = vunpack.c.l.b16 %v1635
      %v1700 = vunpack.c.l.b16 %v1636
      %v1701 = vunpack.c.l.b16 %v1637
      %v1702 = vunpack.c.l.b16 %v1638
      %v1703 = vunpack.c.l.b16 %v1639
      %v1704 = vunpack.c.l.b16 %v1640
      %v1705 = vunpack.c.l.b16 %v1641
      %v1706 = vunpack.c.l.b16 %v1642
      %v1707 = vunpack.c.l.b16 %v1643
      %v1708 = vunpack.c.l.b16 %v1644
      %v1709 = vunpack.c.l.b16 %v1645
      %v1710 = vunpack.c.l.b16 %v1646
      %v1711 = vunpack.c.l.b16 %v1647
      %v1712 = vunpack.c.l.b16 %v1648
      %v1713 = vunpack.c.l.b16 %v1649
      %v1714 = vunpack.c.l.b16 %v1650
      %v1715 = vunpack.c.l.b16 %v1651
      %v1716 = vunpack.c.l.b16 %v1652
      %v1717 = vunpack.c.l.b16 %v1653
      %v1718 = vunpack.c.l.b16 %v1654
      %v1719 = vunpack.c.l.b16 %v1655
      %v1720 = vunpack.c.l.b16 %v1656
      %v1721 = vunpack.c.l.b16 %v1657
      %v1722 = vunpack.c.l.b16 %v1658
      %v1723 = vunpack.c.l.b16 %v1659
      %v1724 = vunpack.c.l.b16 %v1660
      %v1725 = vunpack.c.l.b16 %v1661
      %v1726 = vunpack.c.l.b16 %v1662
      %v1727 = vpack.c.b16 %v1696, %v1695
      %v1728 = vpack.c.b16 %v1698, %v1697
      %v1729 = vpack.c.b16 %v1700, %v1699
      %v1730 = vpack.c.b16 %v1702, %v1701
      %v1731 = vpack.c.b16 %v1704, %v1703
      %v1732 = vpack.c.b16 %v1706, %v1705
      %v1733 = vpack.c.b16 %v1708, %v1707
      %v1734 = vpack.c.b16 %v1710, %v1709
      %v1735 = vpack.c.b16 %v1712, %v1711
      %v1736 = vpack.c.b16 %v1714, %v1713
      %v1737 = vpack.c.b16 %v1716, %v1715
      %v1738 = vpack.c.b16 %v1718, %v1717
      %v1739 = vpack.c.b16 %v1720, %v1719
      %v1740 = vpack.c.b16 %v1722, %v1721
      %v1741 = vpack.c.b16 %v1724, %v1723
      %v1742 = vpack.c.b16 %v1726, %v1725
      %1759 = vmatprep.subr.bf16.mxu0 0
      %1760 = vmatpush1.bf16.msra.mxu0 %v1727
      %1761 = vmatprep.subr.bf16.mxu0 0
      %1762 = vmatpush1.bf16.msra.mxu0 %v1728
      %1763 = vmatprep.subr.bf16.mxu0 0
      %1764 = vmatpush1.bf16.msra.mxu0 %v1729
      %1765 = vmatprep.subr.bf16.mxu0 0
      %1766 = vmatpush1.bf16.msra.mxu0 %v1730
      %1767 = vmatprep.subr.bf16.mxu0 0
      %1768 = vmatpush1.bf16.msra.mxu0 %v1731
      %1769 = vmatprep.subr.bf16.mxu0 0
      %1770 = vmatpush1.bf16.msra.mxu0 %v1732
      %1771 = vmatprep.subr.bf16.mxu0 0
      %1772 = vmatpush1.bf16.msra.mxu0 %v1733
      %1773 = vmatprep.subr.bf16.mxu0 0
      %1774 = vmatpush1.bf16.msra.mxu0 %v1734
      %1775 = vmatprep.subr.bf16.mxu0 0
      %1776 = vmatpush1.bf16.msra.mxu0 %v1735
      %1777 = vmatprep.subr.bf16.mxu0 0
      %1778 = vmatpush1.bf16.msra.mxu0 %v1736
      %1779 = vmatprep.subr.bf16.mxu0 0
      %1780 = vmatpush1.bf16.msra.mxu0 %v1737
      %1781 = vmatprep.subr.bf16.mxu0 0
      %1782 = vmatpush1.bf16.msra.mxu0 %v1738
      %1783 = vmatprep.subr.bf16.mxu0 0
      %1784 = vmatpush1.bf16.msra.mxu0 %v1739
      %1785 = vmatprep.subr.bf16.mxu0 0
      %1786 = vmatpush1.bf16.msra.mxu0 %v1740
      %1787 = vmatprep.subr.bf16.mxu0 0
      %1788 = vmatpush1.bf16.msra.mxu0 %v1741
      %1789 = vmatprep.subr.bf16.mxu0 0
      %1790 = vmatpush1.bf16.msra.mxu0 %v1742
      %1791 = vmatprep.mubr.bf16.mxu0 %v1628
      %1792 = vmatmul.mubr.bf16.gmra.mrb[0].mxu0 %v1627
      %v1793 = vpop.f32.mrb[0].mxu0
      %v1794 = vadd.f32 0.0, %v1793
      %v1795 = vpop.f32.mrb[0].mxu0
      %v1796 = vpop.f32.mrb[0].mxu0
      %v1797 = vadd.f32 0.0, %v1796
      %v1798 = vpop.f32.mrb[0].mxu0
      %1799 = vmatprep.mubr.bf16.mxu0 %v1630
      %1800 = vmatmul.mubr.bf16.gmra.mrb[0].mxu0 %v1629
      %v1801 = vpop.f32.mrb[0].mxu0
      %v1802 = vadd.f32 0.0, %v1801
      %v1803 = vpop.f32.mrb[0].mxu0
      %v1804 = vpop.f32.mrb[0].mxu0
      %v1805 = vadd.f32 0.0, %v1804
      %v1806 = vpop.f32.mrb[0].mxu0
      %1807 = vdwg.mxu0
      %v1808 = vadd.f32 %v1617, %v1794
      %v1809 = vadd.f32 %v1617, %v1797
      %v1810 = vadd.f32 %v1617, %v1802
      %v1811 = vadd.f32 %v1617, %v1805
      %v1812 = vld [vmem:[#allocation2] sm:$0xfe]
      %v1813 = vld [vmem:[#allocation2 + $0x8] sm:$0xfe]
      %v1814 = vld [vmem:[#allocation2 + $0x10] sm:$0xff]
      %v1815 = vld [vmem:[#allocation2 + $0x18] sm:$0xff]
      %v1816 = vld [vmem:[#allocation2 + $0x20] sm:$0x1]
      %v1817 = vld [vmem:[#allocation2 + $0x28] sm:$0x1]
      %v1818 = vld [vmem:[#allocation2 + $0x30] sm:$0xfe]
      %v1819 = vld [vmem:[#allocation2 + $0x38] sm:$0xfe]
      %v1820 = vld [vmem:[#allocation2 + $0x40] sm:$0xff]
      %v1821 = vld [vmem:[#allocation2 + $0x48] sm:$0xff]
      %v1822 = vld [vmem:[#allocation2 + $0x50] sm:$0x1]
      %v1823 = vld [vmem:[#allocation2 + $0x58] sm:$0x1]
      %vm1836 = vcmask 1046528
      %v1837 = vrot.slane %v1812, 1
      %v1838 = vrot.slane %v1814, 1
      %v1839 = vsel %vm1836, %v1837, %v1838
      %v1840 = vrot.slane %v1813, 1
      %v1841 = vrot.slane %v1815, 1
      %v1842 = vsel %vm1836, %v1840, %v1841
      %v1843 = vrot.slane %v1816, 1
      %v1844 = vsel %vm1836, %v1838, %v1843
      %v1845 = vrot.slane %v1817, 1
      %v1846 = vsel %vm1836, %v1841, %v1845
      %v1847 = vrot.slane %v1818, 1
      %v1848 = vrot.slane %v1820, 1
      %v1849 = vsel %vm1836, %v1847, %v1848
      %v1850 = vrot.slane %v1819, 1
      %v1851 = vrot.slane %v1821, 1
      %v1852 = vsel %vm1836, %v1850, %v1851
      %v1853 = vrot.slane %v1822, 1
      %v1854 = vsel %vm1836, %v1848, %v1853
      %v1855 = vrot.slane %v1823, 1
      %v1856 = vsel %vm1836, %v1851, %v1855
      %v1865 = vpack.c.bf16 %v1844, %v1839
      %v1866 = vpack.c.bf16 %v1846, %v1842
      %v1867 = vpack.c.bf16 %v1854, %v1849
      %v1868 = vpack.c.bf16 %v1856, %v1852
      %s1869 = scalar_lea.vmem %s6, 128
      %v1870 = vld [vmem:[%s1869] sm:$0xf]
      %v1871 = vld [vmem:[%s1869 + $0x4] sm:$0xf]
      %v1872 = vld [vmem:[%s1869 + $0x8] sm:$0xf]
      %v1873 = vld [vmem:[%s1869 + $0xc] sm:$0xf]
      %v1874 = vld [vmem:[%s1869 + $0x10] sm:$0xf]
      %v1875 = vld [vmem:[%s1869 + $0x14] sm:$0xf]
      %v1876 = vld [vmem:[%s1869 + $0x18] sm:$0xf]
      %v1877 = vld [vmem:[%s1869 + $0x1c] sm:$0xf]
      %v1878 = vld [vmem:[%s1869 + $0x20] sm:$0xf]
      %v1879 = vld [vmem:[%s1869 + $0x24] sm:$0xf]
      %v1880 = vld [vmem:[%s1869 + $0x28] sm:$0xf]
      %v1881 = vld [vmem:[%s1869 + $0x2c] sm:$0xf]
      %v1882 = vld [vmem:[%s1869 + $0x30] sm:$0xf]
      %v1883 = vld [vmem:[%s1869 + $0x34] sm:$0xf]
      %v1884 = vld [vmem:[%s1869 + $0x38] sm:$0xf]
      %v1885 = vld [vmem:[%s1869 + $0x3c] sm:$0xf]
      %v1886 = vld [vmem:[%s1869 + $0x40] sm:$0xf]
      %v1887 = vld [vmem:[%s1869 + $0x44] sm:$0xf]
      %v1888 = vld [vmem:[%s1869 + $0x48] sm:$0xf]
      %v1889 = vld [vmem:[%s1869 + $0x4c] sm:$0xf]
      %v1890 = vld [vmem:[%s1869 + $0x50] sm:$0xf]
      %v1891 = vld [vmem:[%s1869 + $0x54] sm:$0xf]
      %v1892 = vld [vmem:[%s1869 + $0x58] sm:$0xf]
      %v1893 = vld [vmem:[%s1869 + $0x5c] sm:$0xf]
      %v1894 = vld [vmem:[%s1869 + $0x60] sm:$0xf]
      %v1895 = vld [vmem:[%s1869 + $0x64] sm:$0xf]
      %v1896 = vld [vmem:[%s1869 + $0x68] sm:$0xf]
      %v1897 = vld [vmem:[%s1869 + $0x6c] sm:$0xf]
      %v1898 = vld [vmem:[%s1869 + $0x70] sm:$0xf]
      %v1899 = vld [vmem:[%s1869 + $0x74] sm:$0xf]
      %v1900 = vld [vmem:[%s1869 + $0x78] sm:$0xf]
      %v1901 = vld [vmem:[%s1869 + $0x7c] sm:$0xf]
      %v1934 = vunpack.c.l.b16 %v1870
      %v1935 = vunpack.c.l.b16 %v1871
      %v1936 = vunpack.c.l.b16 %v1872
      %v1937 = vunpack.c.l.b16 %v1873
      %v1938 = vunpack.c.l.b16 %v1874
      %v1939 = vunpack.c.l.b16 %v1875
      %v1940 = vunpack.c.l.b16 %v1876
      %v1941 = vunpack.c.l.b16 %v1877
      %v1942 = vunpack.c.l.b16 %v1878
      %v1943 = vunpack.c.l.b16 %v1879
      %v1944 = vunpack.c.l.b16 %v1880
      %v1945 = vunpack.c.l.b16 %v1881
      %v1946 = vunpack.c.l.b16 %v1882
      %v1947 = vunpack.c.l.b16 %v1883
      %v1948 = vunpack.c.l.b16 %v1884
      %v1949 = vunpack.c.l.b16 %v1885
      %v1950 = vunpack.c.l.b16 %v1886
      %v1951 = vunpack.c.l.b16 %v1887
      %v1952 = vunpack.c.l.b16 %v1888
      %v1953 = vunpack.c.l.b16 %v1889
      %v1954 = vunpack.c.l.b16 %v1890
      %v1955 = vunpack.c.l.b16 %v1891
      %v1956 = vunpack.c.l.b16 %v1892
      %v1957 = vunpack.c.l.b16 %v1893
      %v1958 = vunpack.c.l.b16 %v1894
      %v1959 = vunpack.c.l.b16 %v1895
      %v1960 = vunpack.c.l.b16 %v1896
      %v1961 = vunpack.c.l.b16 %v1897
      %v1962 = vunpack.c.l.b16 %v1898
      %v1963 = vunpack.c.l.b16 %v1899
      %v1964 = vunpack.c.l.b16 %v1900
      %v1965 = vunpack.c.l.b16 %v1901
      %v1966 = vpack.c.b16 %v1935, %v1934
      %v1967 = vpack.c.b16 %v1937, %v1936
      %v1968 = vpack.c.b16 %v1939, %v1938
      %v1969 = vpack.c.b16 %v1941, %v1940
      %v1970 = vpack.c.b16 %v1943, %v1942
      %v1971 = vpack.c.b16 %v1945, %v1944
      %v1972 = vpack.c.b16 %v1947, %v1946
      %v1973 = vpack.c.b16 %v1949, %v1948
      %v1974 = vpack.c.b16 %v1951, %v1950
      %v1975 = vpack.c.b16 %v1953, %v1952
      %v1976 = vpack.c.b16 %v1955, %v1954
      %v1977 = vpack.c.b16 %v1957, %v1956
      %v1978 = vpack.c.b16 %v1959, %v1958
      %v1979 = vpack.c.b16 %v1961, %v1960
      %v1980 = vpack.c.b16 %v1963, %v1962
      %v1981 = vpack.c.b16 %v1965, %v1964
      %1998 = vmatprep.subr.bf16.mxu0 0
      %1999 = vmatpush1.bf16.msra.mxu0 %v1966
      %2000 = vmatprep.subr.bf16.mxu0 0
      %2001 = vmatpush1.bf16.msra.mxu0 %v1967
      %2002 = vmatprep.subr.bf16.mxu0 0
      %2003 = vmatpush1.bf16.msra.mxu0 %v1968
      %2004 = vmatprep.subr.bf16.mxu0 0
      %2005 = vmatpush1.bf16.msra.mxu0 %v1969
      %2006 = vmatprep.subr.bf16.mxu0 0
      %2007 = vmatpush1.bf16.msra.mxu0 %v1970
      %2008 = vmatprep.subr.bf16.mxu0 0
      %2009 = vmatpush1.bf16.msra.mxu0 %v1971
      %2010 = vmatprep.subr.bf16.mxu0 0
      %2011 = vmatpush1.bf16.msra.mxu0 %v1972
      %2012 = vmatprep.subr.bf16.mxu0 0
      %2013 = vmatpush1.bf16.msra.mxu0 %v1973
      %2014 = vmatprep.subr.bf16.mxu0 0
      %2015 = vmatpush1.bf16.msra.mxu0 %v1974
      %2016 = vmatprep.subr.bf16.mxu0 0
      %2017 = vmatpush1.bf16.msra.mxu0 %v1975
      %2018 = vmatprep.subr.bf16.mxu0 0
      %2019 = vmatpush1.bf16.msra.mxu0 %v1976
      %2020 = vmatprep.subr.bf16.mxu0 0
      %2021 = vmatpush1.bf16.msra.mxu0 %v1977
      %2022 = vmatprep.subr.bf16.mxu0 0
      %2023 = vmatpush1.bf16.msra.mxu0 %v1978
      %2024 = vmatprep.subr.bf16.mxu0 0
      %2025 = vmatpush1.bf16.msra.mxu0 %v1979
      %2026 = vmatprep.subr.bf16.mxu0 0
      %2027 = vmatpush1.bf16.msra.mxu0 %v1980
      %2028 = vmatprep.subr.bf16.mxu0 0
      %2029 = vmatpush1.bf16.msra.mxu0 %v1981
      %2030 = vmatprep.mubr.bf16.mxu0 %v1866
      %2031 = vmatmul.mubr.bf16.gmra.mrb[0].mxu0 %v1865
      %v2032 = vpop.f32.mrb[0].mxu0
      %v2033 = vadd.f32 0.0, %v2032
      %v2034 = vpop.f32.mrb[0].mxu0
      %v2035 = vpop.f32.mrb[0].mxu0
      %v2036 = vadd.f32 0.0, %v2035
      %v2037 = vpop.f32.mrb[0].mxu0
      %2038 = vmatprep.mubr.bf16.mxu0 %v1868
      %2039 = vmatmul.mubr.bf16.gmra.mrb[0].mxu0 %v1867
      %v2040 = vpop.f32.mrb[0].mxu0
      %v2041 = vadd.f32 0.0, %v2040
      %v2042 = vpop.f32.mrb[0].mxu0
      %v2043 = vpop.f32.mrb[0].mxu0
      %v2044 = vadd.f32 0.0, %v2043
      %v2045 = vpop.f32.mrb[0].mxu0
      %2046 = vdwg.mxu0
      %v2047 = vadd.f32 %v1808, %v2033
      %v2048 = vadd.f32 %v1809, %v2036
      %v2049 = vadd.f32 %v1810, %v2041
      %v2050 = vadd.f32 %v1811, %v2044
      %v2051 = vld [vmem:[#allocation2] sm:$0xfc]
      %v2052 = vld [vmem:[#allocation2 + $0x8] sm:$0xfc]
      %v2053 = vld [vmem:[#allocation2 + $0x20] sm:$0x3]
      %v2054 = vld [vmem:[#allocation2 + $0x28] sm:$0x3]
      %v2055 = vld [vmem:[#allocation2 + $0x30] sm:$0xfc]
      %v2056 = vld [vmem:[#allocation2 + $0x38] sm:$0xfc]
      %v2057 = vld [vmem:[#allocation2 + $0x50] sm:$0x3]
      %v2058 = vld [vmem:[#allocation2 + $0x58] sm:$0x3]
      %vm2067 = vcmask 1045504
      %v2068 = vrot.slane %v2051, 2
      %v2069 = vrot.slane %v1814, 2
      %v2070 = vsel %vm2067, %v2068, %v2069
      %v2071 = vrot.slane %v2052, 2
      %v2072 = vrot.slane %v1815, 2
      %v2073 = vsel %vm2067, %v2071, %v2072
      %v2074 = vrot.slane %v2053, 2
      %v2075 = vsel %vm2067, %v2069, %v2074
      %v2076 = vrot.slane %v2054, 2
      %v2077 = vsel %vm2067, %v2072, %v2076
      %v2078 = vrot.slane %v2055, 2
      %v2079 = vrot.slane %v1820, 2
      %v2080 = vsel %vm2067, %v2078, %v2079
      %v2081 = vrot.slane %v2056, 2
      %v2082 = vrot.slane %v1821, 2
      %v2083 = vsel %vm2067, %v2081, %v2082
      %v2084 = vrot.slane %v2057, 2
      %v2085 = vsel %vm2067, %v2079, %v2084
      %v2086 = vrot.slane %v2058, 2
      %v2087 = vsel %vm2067, %v2082, %v2086
      %v2096 = vpack.c.bf16 %v2075, %v2070
      %v2097 = vpack.c.bf16 %v2077, %v2073
      %v2098 = vpack.c.bf16 %v2085, %v2080
      %v2099 = vpack.c.bf16 %v2087, %v2083
      %s2100 = scalar_lea.vmem %s6, 256
      %v2101 = vld [vmem:[%s2100] sm:$0xf]
      %v2102 = vld [vmem:[%s2100 + $0x4] sm:$0xf]
      %v2103 = vld [vmem:[%s2100 + $0x8] sm:$0xf]
      %v2104 = vld [vmem:[%s2100 + $0xc] sm:$0xf]
      %v2105 = vld [vmem:[%s2100 + $0x10] sm:$0xf]
      %v2106 = vld [vmem:[%s2100 + $0x14] sm:$0xf]
      %v2107 = vld [vmem:[%s2100 + $0x18] sm:$0xf]
      %v2108 = vld [vmem:[%s2100 + $0x1c] sm:$0xf]
      %v2109 = vld [vmem:[%s2100 + $0x20] sm:$0xf]
      %v2110 = vld [vmem:[%s2100 + $0x24] sm:$0xf]
      %v2111 = vld [vmem:[%s2100 + $0x28] sm:$0xf]
      %v2112 = vld [vmem:[%s2100 + $0x2c] sm:$0xf]
      %v2113 = vld [vmem:[%s2100 + $0x30] sm:$0xf]
      %v2114 = vld [vmem:[%s2100 + $0x34] sm:$0xf]
      %v2115 = vld [vmem:[%s2100 + $0x38] sm:$0xf]
      %v2116 = vld [vmem:[%s2100 + $0x3c] sm:$0xf]
      %v2117 = vld [vmem:[%s2100 + $0x40] sm:$0xf]
      %v2118 = vld [vmem:[%s2100 + $0x44] sm:$0xf]
      %v2119 = vld [vmem:[%s2100 + $0x48] sm:$0xf]
      %v2120 = vld [vmem:[%s2100 + $0x4c] sm:$0xf]
      %v2121 = vld [vmem:[%s2100 + $0x50] sm:$0xf]
      %v2122 = vld [vmem:[%s2100 + $0x54] sm:$0xf]
      %v2123 = vld [vmem:[%s2100 + $0x58] sm:$0xf]
      %v2124 = vld [vmem:[%s2100 + $0x5c] sm:$0xf]
      %v2125 = vld [vmem:[%s2100 + $0x60] sm:$0xf]
      %v2126 = vld [vmem:[%s2100 + $0x64] sm:$0xf]
      %v2127 = vld [vmem:[%s2100 + $0x68] sm:$0xf]
      %v2128 = vld [vmem:[%s2100 + $0x6c] sm:$0xf]
      %v2129 = vld [vmem:[%s2100 + $0x70] sm:$0xf]
      %v2130 = vld [vmem:[%s2100 + $0x74] sm:$0xf]
      %v2131 = vld [vmem:[%s2100 + $0x78] sm:$0xf]
      %v2132 = vld [vmem:[%s2100 + $0x7c] sm:$0xf]
      %v2165 = vunpack.c.l.b16 %v2101
      %v2166 = vunpack.c.l.b16 %v2102
      %v2167 = vunpack.c.l.b16 %v2103
      %v2168 = vunpack.c.l.b16 %v2104
      %v2169 = vunpack.c.l.b16 %v2105
      %v2170 = vunpack.c.l.b16 %v2106
      %v2171 = vunpack.c.l.b16 %v2107
      %v2172 = vunpack.c.l.b16 %v2108
      %v2173 = vunpack.c.l.b16 %v2109
      %v2174 = vunpack.c.l.b16 %v2110
      %v2175 = vunpack.c.l.b16 %v2111
      %v2176 = vunpack.c.l.b16 %v2112
      %v2177 = vunpack.c.l.b16 %v2113
      %v2178 = vunpack.c.l.b16 %v2114
      %v2179 = vunpack.c.l.b16 %v2115
      %v2180 = vunpack.c.l.b16 %v2116
      %v2181 = vunpack.c.l.b16 %v2117
      %v2182 = vunpack.c.l.b16 %v2118
      %v2183 = vunpack.c.l.b16 %v2119
      %v2184 = vunpack.c.l.b16 %v2120
      %v2185 = vunpack.c.l.b16 %v2121
      %v2186 = vunpack.c.l.b16 %v2122
      %v2187 = vunpack.c.l.b16 %v2123
      %v2188 = vunpack.c.l.b16 %v2124
      %v2189 = vunpack.c.l.b16 %v2125
      %v2190 = vunpack.c.l.b16 %v2126
      %v2191 = vunpack.c.l.b16 %v2127
      %v2192 = vunpack.c.l.b16 %v2128
      %v2193 = vunpack.c.l.b16 %v2129
      %v2194 = vunpack.c.l.b16 %v2130
      %v2195 = vunpack.c.l.b16 %v2131
      %v2196 = vunpack.c.l.b16 %v2132
      %v2197 = vpack.c.b16 %v2166, %v2165
      %v2198 = vpack.c.b16 %v2168, %v2167
      %v2199 = vpack.c.b16 %v2170, %v2169
      %v2200 = vpack.c.b16 %v2172, %v2171
      %v2201 = vpack.c.b16 %v2174, %v2173
      %v2202 = vpack.c.b16 %v2176, %v2175
      %v2203 = vpack.c.b16 %v2178, %v2177
      %v2204 = vpack.c.b16 %v2180, %v2179
      %v2205 = vpack.c.b16 %v2182, %v2181
      %v2206 = vpack.c.b16 %v2184, %v2183
      %v2207 = vpack.c.b16 %v2186, %v2185
      %v2208 = vpack.c.b16 %v2188, %v2187
      %v2209 = vpack.c.b16 %v2190, %v2189
      %v2210 = vpack.c.b16 %v2192, %v2191
      %v2211 = vpack.c.b16 %v2194, %v2193
      %v2212 = vpack.c.b16 %v2196, %v2195
      %2229 = vmatprep.subr.bf16.mxu0 0
      %2230 = vmatpush1.bf16.msra.mxu0 %v2197
      %2231 = vmatprep.subr.bf16.mxu0 0
      %2232 = vmatpush1.bf16.msra.mxu0 %v2198
      %2233 = vmatprep.subr.bf16.mxu0 0
      %2234 = vmatpush1.bf16.msra.mxu0 %v2199
      %2235 = vmatprep.subr.bf16.mxu0 0
      %2236 = vmatpush1.bf16.msra.mxu0 %v2200
      %2237 = vmatprep.subr.bf16.mxu0 0
      %2238 = vmatpush1.bf16.msra.mxu0 %v2201
      %2239 = vmatprep.subr.bf16.mxu0 0
      %2240 = vmatpush1.bf16.msra.mxu0 %v2202
      %2241 = vmatprep.subr.bf16.mxu0 0
      %2242 = vmatpush1.bf16.msra.mxu0 %v2203
      %2243 = vmatprep.subr.bf16.mxu0 0
      %2244 = vmatpush1.bf16.msra.mxu0 %v2204
      %2245 = vmatprep.subr.bf16.mxu0 0
      %2246 = vmatpush1.bf16.msra.mxu0 %v2205
      %2247 = vmatprep.subr.bf16.mxu0 0
      %2248 = vmatpush1.bf16.msra.mxu0 %v2206
      %2249 = vmatprep.subr.bf16.mxu0 0
      %2250 = vmatpush1.bf16.msra.mxu0 %v2207
      %2251 = vmatprep.subr.bf16.mxu0 0
      %2252 = vmatpush1.bf16.msra.mxu0 %v2208
      %2253 = vmatprep.subr.bf16.mxu0 0
      %2254 = vmatpush1.bf16.msra.mxu0 %v2209
      %2255 = vmatprep.subr.bf16.mxu0 0
      %2256 = vmatpush1.bf16.msra.mxu0 %v2210
      %2257 = vmatprep.subr.bf16.mxu0 0
      %2258 = vmatpush1.bf16.msra.mxu0 %v2211
      %2259 = vmatprep.subr.bf16.mxu0 0
      %2260 = vmatpush1.bf16.msra.mxu0 %v2212
      %2261 = vmatprep.mubr.bf16.mxu0 %v2097
      %2262 = vmatmul.mubr.bf16.gmra.mrb[0].mxu0 %v2096
      %v2263 = vpop.f32.mrb[0].mxu0
      %v2264 = vadd.f32 0.0, %v2263
      %v2265 = vpop.f32.mrb[0].mxu0
      %v2266 = vpop.f32.mrb[0].mxu0
      %v2267 = vadd.f32 0.0, %v2266
      %v2268 = vpop.f32.mrb[0].mxu0
      %2269 = vmatprep.mubr.bf16.mxu0 %v2099
      %2270 = vmatmul.mubr.bf16.gmra.mrb[0].mxu0 %v2098
      %v2271 = vpop.f32.mrb[0].mxu0
      %v2272 = vadd.f32 0.0, %v2271
      %v2273 = vpop.f32.mrb[0].mxu0
      %v2274 = vpop.f32.mrb[0].mxu0
      %v2275 = vadd.f32 0.0, %v2274
      %v2276 = vpop.f32.mrb[0].mxu0
      %2277 = vdwg.mxu0
      %v2278 = vadd.f32 %v2047, %v2264
      %v2279 = vadd.f32 %v2048, %v2267
      %v2280 = vadd.f32 %v2049, %v2272
      %v2281 = vadd.f32 %v2050, %v2275
      %v2282 = vtanh.pop %v2278
      %v2283 = vtanh.pop %v2279
      %v2284 = vtanh.pop %v2280
      %v2285 = vtanh.pop %v2281
      %v2286 = vsub.f32 %v331, %v2282
      %v2287 = vsub.f32 %v332, %v2283
      %v2288 = vsub.f32 %v333, %v2284
      %v2289 = vsub.f32 %v334, %v2285
      %v2290 = vmul.f32 %v1434, %v2286
      %v2291 = vmul.f32 %v1436, %v2287
      %v2292 = vmul.f32 %v1438, %v2288
      %v2293 = vmul.f32 %v1440, %v2289
      %v2294 = vadd.f32 %v2282, %v2290
      %v2295 = vadd.f32 %v2283, %v2291
      %v2296 = vadd.f32 %v2284, %v2292
      %v2297 = vadd.f32 %v2285, %v2293
      %2298 = vst [vmem:[%s325] sm:$0xff] %v2294
      %2299 = vst [vmem:[%s325 + $0x8] sm:$0xff] %v2295
      %2300 = vst [vmem:[%s325 + $0x10] sm:$0xff] %v2296
      %2301 = vst [vmem:[%s325 + $0x18] sm:$0xff] %v2297
      %p2302 = scmp.lt.s32.totalorder %s19, 1
      %s2303 = scalar_select %p2302, %s19, 1
      %s2304 = smul.addr %s2303, 4
      %s2305 = smul.addr %s2304, 8
      %s2306 = scalar_lea.vmem %s8, %s2305
      // Predicated region
      $region53: #{conv2d_gru_cell.1} parent=51 // pred_check
        %p2307 = pneg %p215
      $region54: #{conv2d_gru_cell.1} parent=51 // pred_check_branch
        %2309 = sbr.rel (%p2307) target = $region56
      $region55: #{conv2d_gru_cell.1} parent=51 // pred_region
        _
      $region56: #{conv2d_gru_cell.1} parent=51 // pred_fallthru
        _
    $region52: #{conv2d_gru_cell.1} parent=5 // pred_fallthru
      _
    %p2310 = scmp.le.s32.totalorder 2, %s14
    // Predicated region
    $region57: #{conv2d_gru_cell.1} parent=5 // pred_check
      %p2311 = pneg %p2310
    $region58: #{conv2d_gru_cell.1} parent=5 // pred_check_branch
      %2313 = sbr.rel (%p2311) target = $region60
    $region59: #{conv2d_gru_cell.1} parent=5 // pred_region
      %s2314 = ssub.s32 %s14, 2
      // Predicated region
      $region61: #{conv2d_gru_cell.1} parent=59 // pred_check
        %p2315 = pneg %p221
      $region62: #{conv2d_gru_cell.1} parent=59 // pred_check_branch
        %2317 = sbr.rel (%p2315) target = $region64
      $region63: #{conv2d_gru_cell.1} parent=59 // pred_region
        %p2318 = scmp.lt.s32.totalorder %s20, 1
        %s2319 = scalar_select %p2318, %s20, 1
        %s2320 = smul.addr %s2319, 4
        %s2321 = smul.addr %s2320, 8
        %s2322 = scalar_lea.vmem %s8, %s2321
      $region64: #{conv2d_gru_cell.1} parent=59 // pred_fallthru
        _
    $region60: #{conv2d_gru_cell.1} parent=5 // pred_fallthru
      _
  $region6: #{conv2d_gru_cell.1} parent=0 // loop_footer
    %s18 = sadd.s32 1, %s14
  $region7: #{conv2d_gru_cell.1} parent=0 // loop_footer_branch
    %13 = sbr.rel target = $region3
  $region8: #{conv2d_gru_cell.1} parent=0 // loop_exit
    _

</llo_original>
